<compile_context>
chip_gen: v7x
topology: tpu7x:2x2x1
jax: 0.10.0
libtpu: 0.0.40
codegen_flags: <defaults>
</compile_context>

<pallas_src>
import jax
import jax.numpy as jnp
from jax.experimental import pallas as pl
from jax.experimental.pallas import tpu as pltpu

EPS = 1e-5      # torch.nn.InstanceNorm2d default eps, affine=False
LANE = 128      # TPU lane width; channels are padded to a multiple of this


# ---------------------------------------------------------------------------
# In-kernel helper
# ---------------------------------------------------------------------------
def _conv3x3_rows(halo, w_ref, T, W, C):
    """3x3 conv over T output rows; width reflection built into the slab.

    halo : (T+2, W, C) bf16  rows [row-1 .. row+T] of the H-reflection-padded
                             input (elementwise pre-processing already applied)
    w_ref: (3, 3*C, C) bf16  packed as [kh, kw*C + cin, cout]
    returns (T*W, C) f32 accumulator (no bias: it cancels in InstanceNorm).
    """
    acc = jnp.zeros((T * W, C), jnp.float32)
    for kh in range(3):                                     # static unroll
        rows = halo[kh:kh + T]                              # (T, W, C)
        # ReflectionPad2d(1) along W, built by concatenation (no padded scratch):
        left = jnp.concatenate([rows[:, 1:2], rows[:, :W - 1]], axis=1)   # col j-1
        right = jnp.concatenate([rows[:, 1:], rows[:, W - 2:W - 1]], axis=1)  # col j+1
        slab = jnp.concatenate([left, rows, right], axis=-1)  # (T, W, 3C)
        acc = acc + jnp.dot(slab.reshape(T * W, 3 * C), w_ref[kh],
                            preferred_element_type=jnp.float32)
    return acc


# ---------------------------------------------------------------------------
# Pallas kernel: grid = (N, 4 phases, row tiles)
# ---------------------------------------------------------------------------
def residual_block_kernel(x_ref, w1_ref, w2_ref, o_ref,
                          xpad_ref, c1pad_ref, c2_ref, s1_ref, s2_ref):
    p = pl.program_id(1)
    r = pl.program_id(2)
    nr = pl.num_programs(2)
    T, W, C = x_ref.shape                    # C is the lane-padded channel count
    H = xpad_ref.shape[0] - 2
    g0 = r * T                               # first image row of this tile
    inv_hw = 1.0 / (H * W)

    def _finalize_stats(s_ref):
        mean = s_ref[0:1] * inv_hw
        var = jnp.maximum(s_ref[1:2] * inv_hw - mean * mean, 0.0)
        s_ref[0:1] = mean
        s_ref[1:2] = jax.lax.rsqrt(var + EPS)

    def _accumulate_stats(s_ref, acc):
        s_ref[0:1] = s_ref[0:1] + jnp.sum(acc, axis=0, keepdims=True)
        s_ref[1:2] = s_ref[1:2] + jnp.sum(acc * acc, axis=0, keepdims=True)

    # -------- phase 0: stage bf16 x into the row-reflection-padded scratch --
    @pl.when(p == 0)
    def _():
        xb = x_ref[...].astype(jnp.bfloat16)                 # (T, W, C)
        xpad_ref[pl.ds(g0 + 1, T)] = xb

        @pl.when(r == 0)
        def _():
            xpad_ref[0:1] = xb[1:2]                          # top reflect <- row 1
            s1_ref[...] = jnp.zeros_like(s1_ref)             # reset per image
            s2_ref[...] = jnp.zeros_like(s2_ref)

        @pl.when(r == nr - 1)
        def _():
            xpad_ref[H + 1:H + 2] = xb[T - 2:T - 1]          # bottom <- row H-2

    # -------- phase 1: conv1 per tile + IN-1 statistics ----------------------
    @pl.when(p == 1)
    def _():
        halo = xpad_ref[pl.ds(g0, T + 2)]                    # (T+2, W, C) bf16
        acc = _conv3x3_rows(halo, w1_ref, T, W, C)           # (T*W, C) f32
        _accumulate_stats(s1_ref, acc)
        yb = acc.astype(jnp.bfloat16).reshape(T, W, C)
        c1pad_ref[pl.ds(g0 + 1, T)] = yb                     # raw conv1 output

        @pl.when(r == 0)
        def _():
            c1pad_ref[0:1] = yb[1:2]

        @pl.when(r == nr - 1)
        def _():
            c1pad_ref[H + 1:H + 2] = yb[T - 2:T - 1]

    # -------- phase 2: IN-1 + ReLU (on the fly), conv2, IN-2 statistics ------
    @pl.when(p == 2)
    def _():
        @pl.when(r == 0)
        def _():
            _finalize_stats(s1_ref)                          # sum/sumsq -> mean/rstd

        mean1 = s1_ref[0:1]
        rstd1 = s1_ref[1:2]
        halo = c1pad_ref[pl.ds(g0, T + 2)].astype(jnp.float32)
        halo = jnp.maximum((halo - mean1) * rstd1, 0.0).astype(jnp.bfloat16)
        acc = _conv3x3_rows(halo, w2_ref, T, W, C)           # (T*W, C) f32
        _accumulate_stats(s2_ref, acc)
        c2_ref[pl.ds(g0, T)] = acc.astype(jnp.bfloat16).reshape(T, W, C)

    # -------- phase 3: IN-2, residual add (exact f32 x), store ---------------
    @pl.when(p == 3)
    def _():
        @pl.when(r == 0)
        def _():
            _finalize_stats(s2_ref)

        mean2 = s2_ref[0:1]
        rstd2 = s2_ref[1:2]
        y = c2_ref[pl.ds(g0, T)].astype(jnp.float32)         # (T, W, C)
        y = (y - mean2) * rstd2
        o_ref[...] = (x_ref[...] + y).astype(o_ref.dtype)


# ---------------------------------------------------------------------------
# Wrappers
# ---------------------------------------------------------------------------
def _pack_weight(w, c_pad):
    """(Cout, Cin, 3, 3) torch layout -> (3, 3*Cp, Cp) bf16, taps packed as
    [kh, kw*Cp + cin, cout]; Cout/Cin zero-padded to the lane-dense width."""
    c_out, c_in = w.shape[0], w.shape[1]
    if c_out != c_pad or c_in != c_pad:
        w = jnp.pad(w, ((0, c_pad - c_out), (0, c_pad - c_in), (0, 0), (0, 0)))
    wk = jnp.transpose(w, (2, 3, 1, 0))                      # (kh, kw, Cin, Cout)
    return wk.reshape(3, 3 * c_pad, c_pad).astype(jnp.bfloat16)


def _pick_row_tile(H, requested):
    if requested is not None:
        assert 2 <= requested <= H and H % requested == 0, "bad row_tile"
        return requested
    for t in range(min(H, 32), 1, -1):                       # largest divisor <= 32
        if H % t == 0:
            return t
    return H


def residual_block_nhwc(x, w1, w2, *, row_tile=None):
    """x: (N, H, W, C) f32; w*: (C, C, 3, 3) torch conv layout."""
    N, H, W, C = x.shape
    assert H >= 2 and W >= 2, "ReflectionPad2d(1) needs H, W >= 2"
    Cp = ((C + LANE - 1) // LANE) * LANE                     # lane-dense channels
    T = _pick_row_tile(H, row_tile)
    R = H // T

    if Cp != C:
        # Zero channels stay exactly zero through conv (zero weights, no bias),
        # InstanceNorm (0/rsqrt(eps)=0), ReLU and the residual add.
        x = jnp.pad(x, ((0, 0), (0, 0), (0, 0), (0, Cp - C)))
    w1k = _pack_weight(w1, Cp)
    w2k = _pack_weight(w2, Cp)

    def x_map(n, p, r):          # x needed in phases 0 (conv1 staging) and 3 (residual)
        return (n, jnp.where((p == 0) | (p == 3), r, 0), 0, 0)

    def o_map(n, p, r):          # output written in phase 3 only
        return (n, jnp.where(p == 3, r, 0), 0, 0)

    out = pl.pallas_call(
        residual_block_kernel,
        out_shape=jax.ShapeDtypeStruct((N, H, W, Cp), x.dtype),
        grid_spec=pltpu.PrefetchScalarGridSpec(
            num_scalar_prefetch=0,
            grid=(N, 4, R),
            in_specs=[
                pl.BlockSpec((None, T, W, Cp), x_map),
                pl.BlockSpec((3, 3 * Cp, Cp), lambda n, p, r: (0, 0, 0)),
                pl.BlockSpec((3, 3 * Cp, Cp), lambda n, p, r: (0, 0, 0)),
            ],
            out_specs=pl.BlockSpec((None, T, W, Cp), o_map),
            scratch_shapes=[
                pltpu.VMEM((H + 2, W, Cp), jnp.bfloat16),    # reflection-padded x
                pltpu.VMEM((H + 2, W, Cp), jnp.bfloat16),    # raw conv1 out (padded)
                pltpu.VMEM((H, W, Cp), jnp.bfloat16),        # raw conv2 out
                pltpu.VMEM((2, Cp), jnp.float32),            # IN-1 sum/sumsq -> mean/rstd
                pltpu.VMEM((2, Cp), jnp.float32),            # IN-2 sum/sumsq -> mean/rstd
            ],
        ),
        compiler_params=pltpu.CompilerParams(
            dimension_semantics=("parallel", "arbitrary", "arbitrary"),
            vmem_limit_bytes=48 * 1024 * 1024),
    )(x, w1k, w2k)

    return out[..., :C] if Cp != C else out


def residual_block(x_nchw, w1, b1, w2, b2, *, row_tile=None):
    """PyTorch-parity entry point: NCHW in / NCHW out.

    b1/b2 are accepted for nn.Conv2d API parity but are unused: a per-channel
    bias right before an affine-free InstanceNorm cancels exactly.
    """
    del b1, b2
    x = jnp.transpose(x_nchw, (0, 2, 3, 1))                  # layout glue only
    out = residual_block_nhwc(x, w1, w2, row_tile=row_tile)
    return jnp.transpose(out, (0, 3, 1, 2))


# ---------------------------------------------------------------------------
# Pure-JAX reference (NCHW, mirrors the PyTorch module) for a sanity check
# ---------------------------------------------------------------------------
def _reference(x, w1, b1, w2, b2):
    def conv(y, w, b):
        yp = jnp.pad(y, ((0, 0), (0, 0), (1, 1), (1, 1)), mode="reflect")
        out = jax.lax.conv_general_dilated(
            yp, w, window_strides=(1, 1), padding="VALID",
            dimension_numbers=("NCHW", "OIHW", "NCHW"))
        return out + b[None, :, None, None]

    def inorm(y):
        m = jnp.mean(y, axis=(2, 3), keepdims=True)
        v = jnp.mean((y - m) ** 2, axis=(2, 3), keepdims=True)
        return (y - m) / jnp.sqrt(v + EPS)

    h = jax.nn.relu(inorm(conv(x, w1, b1)))
    h = inorm(conv(h, w2, b2))
    return x + h


if __name__ == "__main__":
    N, C, H, W = 2, 4, 16, 16

    key = jax.random.PRNGKey(0)
    kx, kw1, kb1, kw2, kb2 = jax.random.split(key, 5)

    x = jax.random.normal(kx, (N, C, H, W), dtype=jnp.float32)
    # Deterministic synthetic parameters (nn.Conv2d(C, C, 3) shapes).
    w1 = jax.random.normal(kw1, (C, C, 3, 3), dtype=jnp.float32) * 0.1
    b1 = jax.random.normal(kb1, (C,), dtype=jnp.float32) * 0.1
    w2 = jax.random.normal(kw2, (C, C, 3, 3), dtype=jnp.float32) * 0.1
    b2 = jax.random.normal(kb2, (C,), dtype=jnp.float32) * 0.1

    # row_tile=8 -> 2 row tiles: exercises the cross-tile (two-pass) IN path.
    out = jax.block_until_ready(residual_block(x, w1, b1, w2, b2, row_tile=8))
    ref = jax.block_until_ready(_reference(x, w1, b1, w2, b2))

    assert out.shape == (N, C, H, W) and out.dtype == jnp.float32
    # bf16 MXU operands (f32 accumulation / f32 IN statistics): tolerance is
    # relaxed relative to an f32-only 1e-3 bound.
    max_err = float(jnp.max(jnp.abs(out - ref)))
    assert max_err < 1e-1, f"mismatch vs reference: {max_err}"

    print("KERNEL_OK")
</pallas_src>

<mosaic_0001>
module attributes {stable_mosaic.version = 11 : i64} {
  func.func @residual_block_kernel(%arg0: i32, %arg1: i32, %arg2: i32, %arg3: memref<1x8x16x128xf32, #tpu.memory_space<vmem>>, %arg4: memref<3x384x128xbf16, #tpu.memory_space<vmem>>, %arg5: memref<3x384x128xbf16, #tpu.memory_space<vmem>>, %arg6: memref<1x8x16x128xf32, #tpu.memory_space<vmem>>, %arg7: memref<18x16x128xbf16, #tpu.memory_space<vmem>>, %arg8: memref<18x16x128xbf16, #tpu.memory_space<vmem>>, %arg9: memref<16x16x128xbf16, #tpu.memory_space<vmem>>, %arg10: memref<2x128xf32, #tpu.memory_space<vmem>>, %arg11: memref<2x128xf32, #tpu.memory_space<vmem>>) attributes {dimension_semantics = [#tpu.dimension_semantics<parallel>, #tpu.dimension_semantics<arbitrary>, #tpu.dimension_semantics<arbitrary>], iteration_bounds = array<i64: 2, 4, 2>, scalar_prefetch = 0 : i64, scratch_operands = 5 : i64, tpu.core_type = #tpu.core_type<tc>, window_params = [{transform_indices = @transform_0, window_bounds = array<i64: 1, 8, 16, 128>}, {pipeline_mode = #tpu.pipeline_mode<synchronous>, transform_indices = @transform_1, window_bounds = array<i64: 3, 384, 128>}, {pipeline_mode = #tpu.pipeline_mode<synchronous>, transform_indices = @transform_2, window_bounds = array<i64: 3, 384, 128>}, {transform_indices = @transform_3, window_bounds = array<i64: 1, 8, 16, 128>}]} {
    %c8_i32 = arith.constant 8 : i32
    %0 = arith.muli %arg2, %c8_i32 : i32
    %c0_i32 = arith.constant 0 : i32
    %1 = arith.cmpi eq, %arg1, %c0_i32 : i32
    %2 = arith.extui %1 : i1 to i32
    %c0_i32_0 = arith.constant 0 : i32
    %3 = arith.cmpi ne, %2, %c0_i32_0 : i32
    scf.if %3 {
      %c0 = arith.constant 0 : index
      %c0_4 = arith.constant 0 : index
      %c0_5 = arith.constant 0 : index
      %c0_6 = arith.constant 0 : index
      %13 = vector.load %arg3[%c0, %c0_4, %c0_5, %c0_6] : memref<1x8x16x128xf32, #tpu.memory_space<vmem>>, vector<1x8x16x128xf32>
      %14 = vector.shape_cast %13 : vector<1x8x16x128xf32> to vector<8x16x128xf32>
      %15 = arith.truncf %14 : vector<8x16x128xf32> to vector<8x16x128xbf16>
      %c1_i32_7 = arith.constant 1 : i32
      %16 = arith.addi %0, %c1_i32_7 : i32
      %17 = arith.index_cast %16 : i32 to index
      %c0_8 = arith.constant 0 : index
      %c0_9 = arith.constant 0 : index
      %18 = vector.load %arg7[%17, %c0_8, %c0_9] : memref<18x16x128xbf16, #tpu.memory_space<vmem>>, vector<8x16x128xbf16>
      tpu.vector_store %arg7[%17, %c0_8, %c0_9], %15 {strides = array<i32>} : memref<18x16x128xbf16, #tpu.memory_space<vmem>>, vector<8x16x128xbf16>,
      %c0_i32_10 = arith.constant 0 : i32
      %19 = arith.cmpi eq, %arg2, %c0_i32_10 : i32
      %20 = arith.extui %19 : i1 to i32
      %c0_i32_11 = arith.constant 0 : i32
      %21 = arith.cmpi ne, %20, %c0_i32_11 : i32
      scf.if %21 {
        %25 = vector.extract_strided_slice %15 {offsets = [1, 0, 0], sizes = [1, 16, 128], strides = [1, 1, 1]} : vector<8x16x128xbf16> to vector<1x16x128xbf16>
        %c0_14 = arith.constant 0 : index
        %c0_15 = arith.constant 0 : index
        %c0_16 = arith.constant 0 : index
        %26 = vector.load %arg7[%c0_14, %c0_15, %c0_16] : memref<18x16x128xbf16, #tpu.memory_space<vmem>>, vector<1x16x128xbf16>
        tpu.vector_store %arg7[%c0_14, %c0_15, %c0_16], %25 {strides = array<i32>} : memref<18x16x128xbf16, #tpu.memory_space<vmem>>, vector<1x16x128xbf16>,
        %cst = arith.constant 0.000000e+00 : f32
        %27 = vector.broadcast %cst : f32 to vector<2x128xf32>
        %c0_17 = arith.constant 0 : index
        %c0_18 = arith.constant 0 : index
        %28 = vector.load %arg10[%c0_17, %c0_18] : memref<2x128xf32, #tpu.memory_space<vmem>>, vector<2x128xf32>
        tpu.vector_store %arg10[%c0_17, %c0_18], %27 {strides = array<i32>} : memref<2x128xf32, #tpu.memory_space<vmem>>, vector<2x128xf32>,
        %cst_19 = arith.constant 0.000000e+00 : f32
        %29 = vector.broadcast %cst_19 : f32 to vector<2x128xf32>
        %c0_20 = arith.constant 0 : index
        %c0_21 = arith.constant 0 : index
        %30 = vector.load %arg11[%c0_20, %c0_21] : memref<2x128xf32, #tpu.memory_space<vmem>>, vector<2x128xf32>
        tpu.vector_store %arg11[%c0_20, %c0_21], %29 {strides = array<i32>} : memref<2x128xf32, #tpu.memory_space<vmem>>, vector<2x128xf32>,
      } else {
      }
      %c1_i32_12 = arith.constant 1 : i32
      %22 = arith.cmpi eq, %arg2, %c1_i32_12 : i32
      %23 = arith.extui %22 : i1 to i32
      %c0_i32_13 = arith.constant 0 : i32
      %24 = arith.cmpi ne, %23, %c0_i32_13 : i32
      scf.if %24 {
        %25 = vector.extract_strided_slice %15 {offsets = [6, 0, 0], sizes = [1, 16, 128], strides = [1, 1, 1]} : vector<8x16x128xbf16> to vector<1x16x128xbf16>
        %c17 = arith.constant 17 : index
        %c0_14 = arith.constant 0 : index
        %c0_15 = arith.constant 0 : index
        %26 = vector.load %arg7[%c17, %c0_14, %c0_15] : memref<18x16x128xbf16, #tpu.memory_space<vmem>>, vector<1x16x128xbf16>
        tpu.vector_store %arg7[%c17, %c0_14, %c0_15], %25 {strides = array<i32>} : memref<18x16x128xbf16, #tpu.memory_space<vmem>>, vector<1x16x128xbf16>,
      } else {
      }
    } else {
    }
    %c1_i32 = arith.constant 1 : i32
    %4 = arith.cmpi eq, %arg1, %c1_i32 : i32
    %5 = arith.extui %4 : i1 to i32
    %c0_i32_1 = arith.constant 0 : i32
    %6 = arith.cmpi ne, %5, %c0_i32_1 : i32
    scf.if %6 {
      %13 = arith.index_cast %0 : i32 to index
      %c0 = arith.constant 0 : index
      %c0_4 = arith.constant 0 : index
      %14 = vector.load %arg7[%13, %c0, %c0_4] : memref<18x16x128xbf16, #tpu.memory_space<vmem>>, vector<10x16x128xbf16>
      %cst = arith.constant 0.000000e+00 : f32
      %15 = vector.broadcast %cst : f32 to vector<128x128xf32>
      %16 = vector.extract_strided_slice %14 {offsets = [0, 0, 0], sizes = [8, 16, 128], strides = [1, 1, 1]} : vector<10x16x128xbf16> to vector<8x16x128xbf16>
      %17 = vector.extract_strided_slice %16 {offsets = [0, 1, 0], sizes = [8, 1, 128], strides = [1, 1, 1]} : vector<8x16x128xbf16> to vector<8x1x128xbf16>
      %18 = vector.extract_strided_slice %16 {offsets = [0, 0, 0], sizes = [8, 15, 128], strides = [1, 1, 1]} : vector<8x16x128xbf16> to vector<8x15x128xbf16>
      %19 = tpu.concatenate %17, %18 in 1 : vector<8x1x128xbf16>, vector<8x15x128xbf16> -> vector<8x16x128xbf16>
      %20 = vector.extract_strided_slice %16 {offsets = [0, 1, 0], sizes = [8, 15, 128], strides = [1, 1, 1]} : vector<8x16x128xbf16> to vector<8x15x128xbf16>
      %21 = vector.extract_strided_slice %16 {offsets = [0, 14, 0], sizes = [8, 1, 128], strides = [1, 1, 1]} : vector<8x16x128xbf16> to vector<8x1x128xbf16>
      %22 = tpu.concatenate %20, %21 in 1 : vector<8x15x128xbf16>, vector<8x1x128xbf16> -> vector<8x16x128xbf16>
      %23 = tpu.concatenate %19, %16, %22 in 2 : vector<8x16x128xbf16>, vector<8x16x128xbf16>, vector<8x16x128xbf16> -> vector<8x16x384xbf16>
      %24 = vector.shape_cast %23 : vector<8x16x384xbf16> to vector<128x384xbf16>
      %c0_5 = arith.constant 0 : index
      %c0_6 = arith.constant 0 : index
      %c0_7 = arith.constant 0 : index
      %25 = vector.load %arg4[%c0_5, %c0_6, %c0_7] : memref<3x384x128xbf16, #tpu.memory_space<vmem>>, vector<1x384x128xbf16>
      %26 = vector.shape_cast %25 : vector<1x384x128xbf16> to vector<384x128xbf16>
      %cst_8 = arith.constant dense<0.000000e+00> : vector<128x128xf32>
      %27 = tpu.matmul %24, %26, %cst_8 {dimension_numbers = #tpu.dot_dimension_numbers<[1], [0], [0], [1], [0, 0, 1, 1], [], []>} : vector<128x384xbf16>, vector<384x128xbf16>, vector<128x128xf32> -> vector<128x128xf32>
      %28 = arith.addf %15, %27 : vector<128x128xf32>
      %29 = vector.extract_strided_slice %14 {offsets = [1, 0, 0], sizes = [8, 16, 128], strides = [1, 1, 1]} : vector<10x16x128xbf16> to vector<8x16x128xbf16>
      %30 = vector.extract_strided_slice %29 {offsets = [0, 1, 0], sizes = [8, 1, 128], strides = [1, 1, 1]} : vector<8x16x128xbf16> to vector<8x1x128xbf16>
      %31 = vector.extract_strided_slice %29 {offsets = [0, 0, 0], sizes = [8, 15, 128], strides = [1, 1, 1]} : vector<8x16x128xbf16> to vector<8x15x128xbf16>
      %32 = tpu.concatenate %30, %31 in 1 : vector<8x1x128xbf16>, vector<8x15x128xbf16> -> vector<8x16x128xbf16>
      %33 = vector.extract_strided_slice %29 {offsets = [0, 1, 0], sizes = [8, 15, 128], strides = [1, 1, 1]} : vector<8x16x128xbf16> to vector<8x15x128xbf16>
      %34 = vector.extract_strided_slice %29 {offsets = [0, 14, 0], sizes = [8, 1, 128], strides = [1, 1, 1]} : vector<8x16x128xbf16> to vector<8x1x128xbf16>
      %35 = tpu.concatenate %33, %34 in 1 : vector<8x15x128xbf16>, vector<8x1x128xbf16> -> vector<8x16x128xbf16>
      %36 = tpu.concatenate %32, %29, %35 in 2 : vector<8x16x128xbf16>, vector<8x16x128xbf16>, vector<8x16x128xbf16> -> vector<8x16x384xbf16>
      %37 = vector.shape_cast %36 : vector<8x16x384xbf16> to vector<128x384xbf16>
      %c1 = arith.constant 1 : index
      %c0_9 = arith.constant 0 : index
      %c0_10 = arith.constant 0 : index
      %38 = vector.load %arg4[%c1, %c0_9, %c0_10] : memref<3x384x128xbf16, #tpu.memory_space<vmem>>, vector<1x384x128xbf16>
      %39 = vector.shape_cast %38 : vector<1x384x128xbf16> to vector<384x128xbf16>
      %cst_11 = arith.constant dense<0.000000e+00> : vector<128x128xf32>
      %40 = tpu.matmul %37, %39, %cst_11 {dimension_numbers = #tpu.dot_dimension_numbers<[1], [0], [0], [1], [0, 0, 1, 1], [], []>} : vector<128x384xbf16>, vector<384x128xbf16>, vector<128x128xf32> -> vector<128x128xf32>
      %41 = arith.addf %28, %40 : vector<128x128xf32>
      %42 = vector.extract_strided_slice %14 {offsets = [2, 0, 0], sizes = [8, 16, 128], strides = [1, 1, 1]} : vector<10x16x128xbf16> to vector<8x16x128xbf16>
      %43 = vector.extract_strided_slice %42 {offsets = [0, 1, 0], sizes = [8, 1, 128], strides = [1, 1, 1]} : vector<8x16x128xbf16> to vector<8x1x128xbf16>
      %44 = vector.extract_strided_slice %42 {offsets = [0, 0, 0], sizes = [8, 15, 128], strides = [1, 1, 1]} : vector<8x16x128xbf16> to vector<8x15x128xbf16>
      %45 = tpu.concatenate %43, %44 in 1 : vector<8x1x128xbf16>, vector<8x15x128xbf16> -> vector<8x16x128xbf16>
      %46 = vector.extract_strided_slice %42 {offsets = [0, 1, 0], sizes = [8, 15, 128], strides = [1, 1, 1]} : vector<8x16x128xbf16> to vector<8x15x128xbf16>
      %47 = vector.extract_strided_slice %42 {offsets = [0, 14, 0], sizes = [8, 1, 128], strides = [1, 1, 1]} : vector<8x16x128xbf16> to vector<8x1x128xbf16>
      %48 = tpu.concatenate %46, %47 in 1 : vector<8x15x128xbf16>, vector<8x1x128xbf16> -> vector<8x16x128xbf16>
      %49 = tpu.concatenate %45, %42, %48 in 2 : vector<8x16x128xbf16>, vector<8x16x128xbf16>, vector<8x16x128xbf16> -> vector<8x16x384xbf16>
      %50 = vector.shape_cast %49 : vector<8x16x384xbf16> to vector<128x384xbf16>
      %c2 = arith.constant 2 : index
      %c0_12 = arith.constant 0 : index
      %c0_13 = arith.constant 0 : index
      %51 = vector.load %arg4[%c2, %c0_12, %c0_13] : memref<3x384x128xbf16, #tpu.memory_space<vmem>>, vector<1x384x128xbf16>
      %52 = vector.shape_cast %51 : vector<1x384x128xbf16> to vector<384x128xbf16>
      %cst_14 = arith.constant dense<0.000000e+00> : vector<128x128xf32>
      %53 = tpu.matmul %50, %52, %cst_14 {dimension_numbers = #tpu.dot_dimension_numbers<[1], [0], [0], [1], [0, 0, 1, 1], [], []>} : vector<128x384xbf16>, vector<384x128xbf16>, vector<128x128xf32> -> vector<128x128xf32>
      %54 = arith.addf %41, %53 : vector<128x128xf32>
      %c0_15 = arith.constant 0 : index
      %c0_16 = arith.constant 0 : index
      %55 = vector.load %arg10[%c0_15, %c0_16] : memref<2x128xf32, #tpu.memory_space<vmem>>, vector<1x128xf32>
      %cst_17 = arith.constant dense<0.000000e+00> : vector<128xf32>
      %56 = vector.multi_reduction <add>, %54, %cst_17 [0] : vector<128x128xf32> to vector<128xf32>
      %57 = vector.shape_cast %56 : vector<128xf32> to vector<1x128xf32>
      %58 = arith.addf %55, %57 : vector<1x128xf32>
      %c0_18 = arith.constant 0 : index
      %c0_19 = arith.constant 0 : index
      %59 = vector.load %arg10[%c0_18, %c0_19] : memref<2x128xf32, #tpu.memory_space<vmem>>, vector<1x128xf32>
      tpu.vector_store %arg10[%c0_18, %c0_19], %58 {strides = array<i32>} : memref<2x128xf32, #tpu.memory_space<vmem>>, vector<1x128xf32>,
      %c1_20 = arith.constant 1 : index
      %c0_21 = arith.constant 0 : index
      %60 = vector.load %arg10[%c1_20, %c0_21] : memref<2x128xf32, #tpu.memory_space<vmem>>, vector<1x128xf32>
      %61 = arith.mulf %54, %54 : vector<128x128xf32>
      %cst_22 = arith.constant dense<0.000000e+00> : vector<128xf32>
      %62 = vector.multi_reduction <add>, %61, %cst_22 [0] : vector<128x128xf32> to vector<128xf32>
      %63 = vector.shape_cast %62 : vector<128xf32> to vector<1x128xf32>
      %64 = arith.addf %60, %63 : vector<1x128xf32>
      %c1_23 = arith.constant 1 : index
      %c0_24 = arith.constant 0 : index
      %65 = vector.load %arg10[%c1_23, %c0_24] : memref<2x128xf32, #tpu.memory_space<vmem>>, vector<1x128xf32>
      tpu.vector_store %arg10[%c1_23, %c0_24], %64 {strides = array<i32>} : memref<2x128xf32, #tpu.memory_space<vmem>>, vector<1x128xf32>,
      %66 = arith.truncf %54 : vector<128x128xf32> to vector<128x128xbf16>
      %67 = vector.shape_cast %66 : vector<128x128xbf16> to vector<8x16x128xbf16>
      %c1_i32_25 = arith.constant 1 : i32
      %68 = arith.addi %0, %c1_i32_25 : i32
      %69 = arith.index_cast %68 : i32 to index
      %c0_26 = arith.constant 0 : index
      %c0_27 = arith.constant 0 : index
      %70 = vector.load %arg8[%69, %c0_26, %c0_27] : memref<18x16x128xbf16, #tpu.memory_space<vmem>>, vector<8x16x128xbf16>
      tpu.vector_store %arg8[%69, %c0_26, %c0_27], %67 {strides = array<i32>} : memref<18x16x128xbf16, #tpu.memory_space<vmem>>, vector<8x16x128xbf16>,
      %c0_i32_28 = arith.constant 0 : i32
      %71 = arith.cmpi eq, %arg2, %c0_i32_28 : i32
      %72 = arith.extui %71 : i1 to i32
      %c0_i32_29 = arith.constant 0 : i32
      %73 = arith.cmpi ne, %72, %c0_i32_29 : i32
      scf.if %73 {
        %77 = vector.extract_strided_slice %67 {offsets = [1, 0, 0], sizes = [1, 16, 128], strides = [1, 1, 1]} : vector<8x16x128xbf16> to vector<1x16x128xbf16>
        %c0_32 = arith.constant 0 : index
        %c0_33 = arith.constant 0 : index
        %c0_34 = arith.constant 0 : index
        %78 = vector.load %arg8[%c0_32, %c0_33, %c0_34] : memref<18x16x128xbf16, #tpu.memory_space<vmem>>, vector<1x16x128xbf16>
        tpu.vector_store %arg8[%c0_32, %c0_33, %c0_34], %77 {strides = array<i32>} : memref<18x16x128xbf16, #tpu.memory_space<vmem>>, vector<1x16x128xbf16>,
      } else {
      }
      %c1_i32_30 = arith.constant 1 : i32
      %74 = arith.cmpi eq, %arg2, %c1_i32_30 : i32
      %75 = arith.extui %74 : i1 to i32
      %c0_i32_31 = arith.constant 0 : i32
      %76 = arith.cmpi ne, %75, %c0_i32_31 : i32
      scf.if %76 {
        %77 = vector.extract_strided_slice %67 {offsets = [6, 0, 0], sizes = [1, 16, 128], strides = [1, 1, 1]} : vector<8x16x128xbf16> to vector<1x16x128xbf16>
        %c17 = arith.constant 17 : index
        %c0_32 = arith.constant 0 : index
        %c0_33 = arith.constant 0 : index
        %78 = vector.load %arg8[%c17, %c0_32, %c0_33] : memref<18x16x128xbf16, #tpu.memory_space<vmem>>, vector<1x16x128xbf16>
        tpu.vector_store %arg8[%c17, %c0_32, %c0_33], %77 {strides = array<i32>} : memref<18x16x128xbf16, #tpu.memory_space<vmem>>, vector<1x16x128xbf16>,
      } else {
      }
    } else {
    }
    %c2_i32 = arith.constant 2 : i32
    %7 = arith.cmpi eq, %arg1, %c2_i32 : i32
    %8 = arith.extui %7 : i1 to i32
    %c0_i32_2 = arith.constant 0 : i32
    %9 = arith.cmpi ne, %8, %c0_i32_2 : i32
    scf.if %9 {
      %c0_i32_4 = arith.constant 0 : i32
      %13 = arith.cmpi eq, %arg2, %c0_i32_4 : i32
      %14 = arith.extui %13 : i1 to i32
      %c0_i32_5 = arith.constant 0 : i32
      %15 = arith.cmpi ne, %14, %c0_i32_5 : i32
      scf.if %15 {
        %c0_34 = arith.constant 0 : index
        %c0_35 = arith.constant 0 : index
        %85 = vector.load %arg10[%c0_34, %c0_35] : memref<2x128xf32, #tpu.memory_space<vmem>>, vector<1x128xf32>
        %cst_36 = arith.constant 3.906250e-03 : f32
        %86 = vector.broadcast %cst_36 : f32 to vector<1x128xf32>
        %87 = arith.mulf %85, %86 : vector<1x128xf32>
        %c1_37 = arith.constant 1 : index
        %c0_38 = arith.constant 0 : index
        %88 = vector.load %arg10[%c1_37, %c0_38] : memref<2x128xf32, #tpu.memory_space<vmem>>, vector<1x128xf32>
        %cst_39 = arith.constant 3.906250e-03 : f32
        %89 = vector.broadcast %cst_39 : f32 to vector<1x128xf32>
        %90 = arith.mulf %88, %89 : vector<1x128xf32>
        %91 = arith.mulf %87, %87 : vector<1x128xf32>
        %92 = arith.subf %90, %91 : vector<1x128xf32>
        %cst_40 = arith.constant 0.000000e+00 : f32
        %93 = vector.broadcast %cst_40 : f32 to vector<1x128xf32>
        %94 = arith.maximumf %92, %93 : vector<1x128xf32>
        %c0_41 = arith.constant 0 : index
        %c0_42 = arith.constant 0 : index
        %95 = vector.load %arg10[%c0_41, %c0_42] : memref<2x128xf32, #tpu.memory_space<vmem>>, vector<1x128xf32>
        tpu.vector_store %arg10[%c0_41, %c0_42], %87 {strides = array<i32>} : memref<2x128xf32, #tpu.memory_space<vmem>>, vector<1x128xf32>,
        %cst_43 = arith.constant 9.99999974E-6 : f32
        %96 = vector.broadcast %cst_43 : f32 to vector<1x128xf32>
        %97 = arith.addf %94, %96 : vector<1x128xf32>
        %98 = math.rsqrt %97 : vector<1x128xf32>
        %c1_44 = arith.constant 1 : index
        %c0_45 = arith.constant 0 : index
        %99 = vector.load %arg10[%c1_44, %c0_45] : memref<2x128xf32, #tpu.memory_space<vmem>>, vector<1x128xf32>
        tpu.vector_store %arg10[%c1_44, %c0_45], %98 {strides = array<i32>} : memref<2x128xf32, #tpu.memory_space<vmem>>, vector<1x128xf32>,
      } else {
      }
      %c0 = arith.constant 0 : index
      %c0_6 = arith.constant 0 : index
      %16 = vector.load %arg10[%c0, %c0_6] : memref<2x128xf32, #tpu.memory_space<vmem>>, vector<1x128xf32>
      %c1 = arith.constant 1 : index
      %c0_7 = arith.constant 0 : index
      %17 = vector.load %arg10[%c1, %c0_7] : memref<2x128xf32, #tpu.memory_space<vmem>>, vector<1x128xf32>
      %18 = arith.index_cast %0 : i32 to index
      %c0_8 = arith.constant 0 : index
      %c0_9 = arith.constant 0 : index
      %19 = vector.load %arg8[%18, %c0_8, %c0_9] : memref<18x16x128xbf16, #tpu.memory_space<vmem>>, vector<10x16x128xbf16>
      %20 = arith.extf %19 : vector<10x16x128xbf16> to vector<10x16x128xf32>
      %21 = vector.shape_cast %16 : vector<1x128xf32> to vector<1x1x128xf32>
      %22 = vector.broadcast %21 : vector<1x1x128xf32> to vector<10x16x128xf32>
      %23 = arith.subf %20, %22 : vector<10x16x128xf32>
      %24 = vector.shape_cast %17 : vector<1x128xf32> to vector<1x1x128xf32>
      %25 = vector.broadcast %24 : vector<1x1x128xf32> to vector<10x16x128xf32>
      %26 = arith.mulf %23, %25 : vector<10x16x128xf32>
      %cst = arith.constant 0.000000e+00 : f32
      %27 = vector.broadcast %cst : f32 to vector<10x16x128xf32>
      %28 = arith.maximumf %26, %27 : vector<10x16x128xf32>
      %29 = arith.truncf %28 : vector<10x16x128xf32> to vector<10x16x128xbf16>
      %cst_10 = arith.constant 0.000000e+00 : f32
      %30 = vector.broadcast %cst_10 : f32 to vector<128x128xf32>
      %31 = vector.extract_strided_slice %29 {offsets = [0, 0, 0], sizes = [8, 16, 128], strides = [1, 1, 1]} : vector<10x16x128xbf16> to vector<8x16x128xbf16>
      %32 = vector.extract_strided_slice %31 {offsets = [0, 1, 0], sizes = [8, 1, 128], strides = [1, 1, 1]} : vector<8x16x128xbf16> to vector<8x1x128xbf16>
      %33 = vector.extract_strided_slice %31 {offsets = [0, 0, 0], sizes = [8, 15, 128], strides = [1, 1, 1]} : vector<8x16x128xbf16> to vector<8x15x128xbf16>
      %34 = tpu.concatenate %32, %33 in 1 : vector<8x1x128xbf16>, vector<8x15x128xbf16> -> vector<8x16x128xbf16>
      %35 = vector.extract_strided_slice %31 {offsets = [0, 1, 0], sizes = [8, 15, 128], strides = [1, 1, 1]} : vector<8x16x128xbf16> to vector<8x15x128xbf16>
      %36 = vector.extract_strided_slice %31 {offsets = [0, 14, 0], sizes = [8, 1, 128], strides = [1, 1, 1]} : vector<8x16x128xbf16> to vector<8x1x128xbf16>
      %37 = tpu.concatenate %35, %36 in 1 : vector<8x15x128xbf16>, vector<8x1x128xbf16> -> vector<8x16x128xbf16>
      %38 = tpu.concatenate %34, %31, %37 in 2 : vector<8x16x128xbf16>, vector<8x16x128xbf16>, vector<8x16x128xbf16> -> vector<8x16x384xbf16>
      %39 = vector.shape_cast %38 : vector<8x16x384xbf16> to vector<128x384xbf16>
      %c0_11 = arith.constant 0 : index
      %c0_12 = arith.constant 0 : index
      %c0_13 = arith.constant 0 : index
      %40 = vector.load %arg5[%c0_11, %c0_12, %c0_13] : memref<3x384x128xbf16, #tpu.memory_space<vmem>>, vector<1x384x128xbf16>
      %41 = vector.shape_cast %40 : vector<1x384x128xbf16> to vector<384x128xbf16>
      %cst_14 = arith.constant dense<0.000000e+00> : vector<128x128xf32>
      %42 = tpu.matmul %39, %41, %cst_14 {dimension_numbers = #tpu.dot_dimension_numbers<[1], [0], [0], [1], [0, 0, 1, 1], [], []>} : vector<128x384xbf16>, vector<384x128xbf16>, vector<128x128xf32> -> vector<128x128xf32>
      %43 = arith.addf %30, %42 : vector<128x128xf32>
      %44 = vector.extract_strided_slice %29 {offsets = [1, 0, 0], sizes = [8, 16, 128], strides = [1, 1, 1]} : vector<10x16x128xbf16> to vector<8x16x128xbf16>
      %45 = vector.extract_strided_slice %44 {offsets = [0, 1, 0], sizes = [8, 1, 128], strides = [1, 1, 1]} : vector<8x16x128xbf16> to vector<8x1x128xbf16>
      %46 = vector.extract_strided_slice %44 {offsets = [0, 0, 0], sizes = [8, 15, 128], strides = [1, 1, 1]} : vector<8x16x128xbf16> to vector<8x15x128xbf16>
      %47 = tpu.concatenate %45, %46 in 1 : vector<8x1x128xbf16>, vector<8x15x128xbf16> -> vector<8x16x128xbf16>
      %48 = vector.extract_strided_slice %44 {offsets = [0, 1, 0], sizes = [8, 15, 128], strides = [1, 1, 1]} : vector<8x16x128xbf16> to vector<8x15x128xbf16>
      %49 = vector.extract_strided_slice %44 {offsets = [0, 14, 0], sizes = [8, 1, 128], strides = [1, 1, 1]} : vector<8x16x128xbf16> to vector<8x1x128xbf16>
      %50 = tpu.concatenate %48, %49 in 1 : vector<8x15x128xbf16>, vector<8x1x128xbf16> -> vector<8x16x128xbf16>
      %51 = tpu.concatenate %47, %44, %50 in 2 : vector<8x16x128xbf16>, vector<8x16x128xbf16>, vector<8x16x128xbf16> -> vector<8x16x384xbf16>
      %52 = vector.shape_cast %51 : vector<8x16x384xbf16> to vector<128x384xbf16>
      %c1_15 = arith.constant 1 : index
      %c0_16 = arith.constant 0 : index
      %c0_17 = arith.constant 0 : index
      %53 = vector.load %arg5[%c1_15, %c0_16, %c0_17] : memref<3x384x128xbf16, #tpu.memory_space<vmem>>, vector<1x384x128xbf16>
      %54 = vector.shape_cast %53 : vector<1x384x128xbf16> to vector<384x128xbf16>
      %cst_18 = arith.constant dense<0.000000e+00> : vector<128x128xf32>
      %55 = tpu.matmul %52, %54, %cst_18 {dimension_numbers = #tpu.dot_dimension_numbers<[1], [0], [0], [1], [0, 0, 1, 1], [], []>} : vector<128x384xbf16>, vector<384x128xbf16>, vector<128x128xf32> -> vector<128x128xf32>
      %56 = arith.addf %43, %55 : vector<128x128xf32>
      %57 = vector.extract_strided_slice %29 {offsets = [2, 0, 0], sizes = [8, 16, 128], strides = [1, 1, 1]} : vector<10x16x128xbf16> to vector<8x16x128xbf16>
      %58 = vector.extract_strided_slice %57 {offsets = [0, 1, 0], sizes = [8, 1, 128], strides = [1, 1, 1]} : vector<8x16x128xbf16> to vector<8x1x128xbf16>
      %59 = vector.extract_strided_slice %57 {offsets = [0, 0, 0], sizes = [8, 15, 128], strides = [1, 1, 1]} : vector<8x16x128xbf16> to vector<8x15x128xbf16>
      %60 = tpu.concatenate %58, %59 in 1 : vector<8x1x128xbf16>, vector<8x15x128xbf16> -> vector<8x16x128xbf16>
      %61 = vector.extract_strided_slice %57 {offsets = [0, 1, 0], sizes = [8, 15, 128], strides = [1, 1, 1]} : vector<8x16x128xbf16> to vector<8x15x128xbf16>
      %62 = vector.extract_strided_slice %57 {offsets = [0, 14, 0], sizes = [8, 1, 128], strides = [1, 1, 1]} : vector<8x16x128xbf16> to vector<8x1x128xbf16>
      %63 = tpu.concatenate %61, %62 in 1 : vector<8x15x128xbf16>, vector<8x1x128xbf16> -> vector<8x16x128xbf16>
      %64 = tpu.concatenate %60, %57, %63 in 2 : vector<8x16x128xbf16>, vector<8x16x128xbf16>, vector<8x16x128xbf16> -> vector<8x16x384xbf16>
      %65 = vector.shape_cast %64 : vector<8x16x384xbf16> to vector<128x384xbf16>
      %c2 = arith.constant 2 : index
      %c0_19 = arith.constant 0 : index
      %c0_20 = arith.constant 0 : index
      %66 = vector.load %arg5[%c2, %c0_19, %c0_20] : memref<3x384x128xbf16, #tpu.memory_space<vmem>>, vector<1x384x128xbf16>
      %67 = vector.shape_cast %66 : vector<1x384x128xbf16> to vector<384x128xbf16>
      %cst_21 = arith.constant dense<0.000000e+00> : vector<128x128xf32>
      %68 = tpu.matmul %65, %67, %cst_21 {dimension_numbers = #tpu.dot_dimension_numbers<[1], [0], [0], [1], [0, 0, 1, 1], [], []>} : vector<128x384xbf16>, vector<384x128xbf16>, vector<128x128xf32> -> vector<128x128xf32>
      %69 = arith.addf %56, %68 : vector<128x128xf32>
      %c0_22 = arith.constant 0 : index
      %c0_23 = arith.constant 0 : index
      %70 = vector.load %arg11[%c0_22, %c0_23] : memref<2x128xf32, #tpu.memory_space<vmem>>, vector<1x128xf32>
      %cst_24 = arith.constant dense<0.000000e+00> : vector<128xf32>
      %71 = vector.multi_reduction <add>, %69, %cst_24 [0] : vector<128x128xf32> to vector<128xf32>
      %72 = vector.shape_cast %71 : vector<128xf32> to vector<1x128xf32>
      %73 = arith.addf %70, %72 : vector<1x128xf32>
      %c0_25 = arith.constant 0 : index
      %c0_26 = arith.constant 0 : index
      %74 = vector.load %arg11[%c0_25, %c0_26] : memref<2x128xf32, #tpu.memory_space<vmem>>, vector<1x128xf32>
      tpu.vector_store %arg11[%c0_25, %c0_26], %73 {strides = array<i32>} : memref<2x128xf32, #tpu.memory_space<vmem>>, vector<1x128xf32>,
      %c1_27 = arith.constant 1 : index
      %c0_28 = arith.constant 0 : index
      %75 = vector.load %arg11[%c1_27, %c0_28] : memref<2x128xf32, #tpu.memory_space<vmem>>, vector<1x128xf32>
      %76 = arith.mulf %69, %69 : vector<128x128xf32>
      %cst_29 = arith.constant dense<0.000000e+00> : vector<128xf32>
      %77 = vector.multi_reduction <add>, %76, %cst_29 [0] : vector<128x128xf32> to vector<128xf32>
      %78 = vector.shape_cast %77 : vector<128xf32> to vector<1x128xf32>
      %79 = arith.addf %75, %78 : vector<1x128xf32>
      %c1_30 = arith.constant 1 : index
      %c0_31 = arith.constant 0 : index
      %80 = vector.load %arg11[%c1_30, %c0_31] : memref<2x128xf32, #tpu.memory_space<vmem>>, vector<1x128xf32>
      tpu.vector_store %arg11[%c1_30, %c0_31], %79 {strides = array<i32>} : memref<2x128xf32, #tpu.memory_space<vmem>>, vector<1x128xf32>,
      %81 = arith.truncf %69 : vector<128x128xf32> to vector<128x128xbf16>
      %82 = vector.shape_cast %81 : vector<128x128xbf16> to vector<8x16x128xbf16>
      %83 = arith.index_cast %0 : i32 to index
      %c0_32 = arith.constant 0 : index
      %c0_33 = arith.constant 0 : index
      %84 = vector.load %arg9[%83, %c0_32, %c0_33] : memref<16x16x128xbf16, #tpu.memory_space<vmem>>, vector<8x16x128xbf16>
      tpu.vector_store %arg9[%83, %c0_32, %c0_33], %82 {strides = array<i32>} : memref<16x16x128xbf16, #tpu.memory_space<vmem>>, vector<8x16x128xbf16>,
    } else {
    }
    %c3_i32 = arith.constant 3 : i32
    %10 = arith.cmpi eq, %arg1, %c3_i32 : i32
    %11 = arith.extui %10 : i1 to i32
    %c0_i32_3 = arith.constant 0 : i32
    %12 = arith.cmpi ne, %11, %c0_i32_3 : i32
    scf.if %12 {
      %c0_i32_4 = arith.constant 0 : i32
      %13 = arith.cmpi eq, %arg2, %c0_i32_4 : i32
      %14 = arith.extui %13 : i1 to i32
      %c0_i32_5 = arith.constant 0 : i32
      %15 = arith.cmpi ne, %14, %c0_i32_5 : i32
      scf.if %15 {
        %c0_18 = arith.constant 0 : index
        %c0_19 = arith.constant 0 : index
        %33 = vector.load %arg11[%c0_18, %c0_19] : memref<2x128xf32, #tpu.memory_space<vmem>>, vector<1x128xf32>
        %cst = arith.constant 3.906250e-03 : f32
        %34 = vector.broadcast %cst : f32 to vector<1x128xf32>
        %35 = arith.mulf %33, %34 : vector<1x128xf32>
        %c1_20 = arith.constant 1 : index
        %c0_21 = arith.constant 0 : index
        %36 = vector.load %arg11[%c1_20, %c0_21] : memref<2x128xf32, #tpu.memory_space<vmem>>, vector<1x128xf32>
        %cst_22 = arith.constant 3.906250e-03 : f32
        %37 = vector.broadcast %cst_22 : f32 to vector<1x128xf32>
        %38 = arith.mulf %36, %37 : vector<1x128xf32>
        %39 = arith.mulf %35, %35 : vector<1x128xf32>
        %40 = arith.subf %38, %39 : vector<1x128xf32>
        %cst_23 = arith.constant 0.000000e+00 : f32
        %41 = vector.broadcast %cst_23 : f32 to vector<1x128xf32>
        %42 = arith.maximumf %40, %41 : vector<1x128xf32>
        %c0_24 = arith.constant 0 : index
        %c0_25 = arith.constant 0 : index
        %43 = vector.load %arg11[%c0_24, %c0_25] : memref<2x128xf32, #tpu.memory_space<vmem>>, vector<1x128xf32>
        tpu.vector_store %arg11[%c0_24, %c0_25], %35 {strides = array<i32>} : memref<2x128xf32, #tpu.memory_space<vmem>>, vector<1x128xf32>,
        %cst_26 = arith.constant 9.99999974E-6 : f32
        %44 = vector.broadcast %cst_26 : f32 to vector<1x128xf32>
        %45 = arith.addf %42, %44 : vector<1x128xf32>
        %46 = math.rsqrt %45 : vector<1x128xf32>
        %c1_27 = arith.constant 1 : index
        %c0_28 = arith.constant 0 : index
        %47 = vector.load %arg11[%c1_27, %c0_28] : memref<2x128xf32, #tpu.memory_space<vmem>>, vector<1x128xf32>
        tpu.vector_store %arg11[%c1_27, %c0_28], %46 {strides = array<i32>} : memref<2x128xf32, #tpu.memory_space<vmem>>, vector<1x128xf32>,
      } else {
      }
      %c0 = arith.constant 0 : index
      %c0_6 = arith.constant 0 : index
      %16 = vector.load %arg11[%c0, %c0_6] : memref<2x128xf32, #tpu.memory_space<vmem>>, vector<1x128xf32>
      %c1 = arith.constant 1 : index
      %c0_7 = arith.constant 0 : index
      %17 = vector.load %arg11[%c1, %c0_7] : memref<2x128xf32, #tpu.memory_space<vmem>>, vector<1x128xf32>
      %18 = arith.index_cast %0 : i32 to index
      %c0_8 = arith.constant 0 : index
      %c0_9 = arith.constant 0 : index
      %19 = vector.load %arg9[%18, %c0_8, %c0_9] : memref<16x16x128xbf16, #tpu.memory_space<vmem>>, vector<8x16x128xbf16>
      %20 = arith.extf %19 : vector<8x16x128xbf16> to vector<8x16x128xf32>
      %21 = vector.shape_cast %16 : vector<1x128xf32> to vector<1x1x128xf32>
      %22 = vector.broadcast %21 : vector<1x1x128xf32> to vector<8x16x128xf32>
      %23 = arith.subf %20, %22 : vector<8x16x128xf32>
      %24 = vector.shape_cast %17 : vector<1x128xf32> to vector<1x1x128xf32>
      %25 = vector.broadcast %24 : vector<1x1x128xf32> to vector<8x16x128xf32>
      %26 = arith.mulf %23, %25 : vector<8x16x128xf32>
      %c0_10 = arith.constant 0 : index
      %c0_11 = arith.constant 0 : index
      %c0_12 = arith.constant 0 : index
      %c0_13 = arith.constant 0 : index
      %27 = vector.load %arg3[%c0_10, %c0_11, %c0_12, %c0_13] : memref<1x8x16x128xf32, #tpu.memory_space<vmem>>, vector<1x8x16x128xf32>
      %28 = vector.shape_cast %27 : vector<1x8x16x128xf32> to vector<8x16x128xf32>
      %29 = arith.addf %28, %26 : vector<8x16x128xf32>
      %c0_14 = arith.constant 0 : index
      %c0_15 = arith.constant 0 : index
      %c0_16 = arith.constant 0 : index
      %c0_17 = arith.constant 0 : index
      %30 = vector.load %arg6[%c0_14, %c0_15, %c0_16, %c0_17] : memref<1x8x16x128xf32, #tpu.memory_space<vmem>>, vector<1x8x16x128xf32>
      %31 = vector.shape_cast %30 : vector<1x8x16x128xf32> to vector<8x16x128xf32>
      %32 = vector.shape_cast %29 : vector<8x16x128xf32> to vector<1x8x16x128xf32>
      tpu.vector_store %arg6[%c0_14, %c0_15, %c0_16, %c0_17], %32 {strides = array<i32>} : memref<1x8x16x128xf32, #tpu.memory_space<vmem>>, vector<1x8x16x128xf32>,
    } else {
    }
    return
  }
  func.func @transform_0(%arg0: i32, %arg1: i32, %arg2: i32) -> (i32, i32, i32, i32) {
    %c0_i32 = arith.constant 0 : i32
    %0 = arith.cmpi eq, %arg1, %c0_i32 : i32
    %c3_i32 = arith.constant 3 : i32
    %1 = arith.cmpi eq, %arg1, %c3_i32 : i32
    %2 = arith.ori %0, %1 : i1
    %c0_i32_0 = arith.constant 0 : i32
    %3 = arith.select %2, %arg2, %c0_i32_0 : i32
    %c0_i32_1 = arith.constant 0 : i32
    %c0_i32_2 = arith.constant 0 : i32
    %c0_i32_3 = arith.constant 0 : i32
    return %arg0, %3, %c0_i32_1, %c0_i32_2 : i32, i32, i32, i32
  }
  func.func @transform_1(%arg0: i32, %arg1: i32, %arg2: i32) -> (i32, i32, i32) {
    %c0_i32 = arith.constant 0 : i32
    %c0_i32_0 = arith.constant 0 : i32
    %c0_i32_1 = arith.constant 0 : i32
    %c0_i32_2 = arith.constant 0 : i32
    return %c0_i32, %c0_i32_0, %c0_i32_1 : i32, i32, i32
  }
  func.func @transform_2(%arg0: i32, %arg1: i32, %arg2: i32) -> (i32, i32, i32) {
    %c0_i32 = arith.constant 0 : i32
    %c0_i32_0 = arith.constant 0 : i32
    %c0_i32_1 = arith.constant 0 : i32
    %c0_i32_2 = arith.constant 0 : i32
    return %c0_i32, %c0_i32_0, %c0_i32_1 : i32, i32, i32
  }
  func.func @transform_3(%arg0: i32, %arg1: i32, %arg2: i32) -> (i32, i32, i32, i32) {
    %c3_i32 = arith.constant 3 : i32
    %0 = arith.cmpi eq, %arg1, %c3_i32 : i32
    %c0_i32 = arith.constant 0 : i32
    %1 = arith.select %0, %arg2, %c0_i32 : i32
    %c0_i32_0 = arith.constant 0 : i32
    %c0_i32_1 = arith.constant 0 : i32
    %c0_i32_2 = arith.constant 0 : i32
    return %arg0, %1, %c0_i32_0, %c0_i32_1 : i32, i32, i32, i32
  }
}

</mosaic_0001>

<llo_original>
// kernel: tpu_custom_call.1
$region0: #{tpu_custom_call.1}
  #allocation0 [shape = 'u32[]', space=smem, size = 0x4, offset = 0x4, fixed_abs, tag = 'smem constant byte address 0x4 - core index']
  #allocation1 [shape = 'u32[144,128]{1,0:T(1,128)}', space=vmem, size = 0x12000, scoped, tag = 'internal scratch']
  #allocation2 [shape = 'bf16[18,16,128]{2,1,0:T(16,128)(2,1)}', space=vmem, size = 0x12000, scoped, tag = 'scratch operand']
  #allocation3 [shape = 'bf16[18,16,128]{2,1,0:T(16,128)(2,1)}', space=vmem, size = 0x12000, scoped, tag = 'scratch operand']
  #allocation4 [shape = 'bf16[16,16,128]{2,1,0:T(16,128)(2,1)}', space=vmem, size = 0x10000, scoped, tag = 'scratch operand']
  #allocation5 [shape = 'f32[2,128]{1,0:T(2,128)}', space=vmem, size = 0x400, scoped, tag = 'scratch operand']
  #allocation6 [shape = 'f32[2,128]{1,0:T(2,128)}', space=vmem, size = 0x400, scoped, tag = 'scratch operand']
  %s0 = inlined_call_operand.hbm [shape: f32[2,16,16,128], index: 0, kind: input, shape index: {}]
  %s1 = inlined_call_operand.hbm [shape: bf16[3,384,128], index: 1, kind: input, shape index: {}]
  %s2 = inlined_call_operand.hbm [shape: bf16[3,384,128], index: 2, kind: input, shape index: {}]
  %s3 = inlined_call_operand.hbm [shape: f32[2,16,16,128], index: 3, kind: output, shape index: {}]
  %s4 = sld [smem:[#allocation0]]
  $region97: #{tpu_custom_call.1} parent=0
    _
  %s6 = ssub.s32 1, %s4
  %s7 = scalar_select 0, %s6, %s4
  $region1: #{tpu_custom_call.1} parent=0
    #allocation7 [shape = 'u8[131072]{0}', space=vmem, size = 0x20000, scoped, tag = 'input window, operand 0']
    #allocation8 [shape = 's32[2]{0}', space=sflag, size = 0x8, scoped, tag = 'scoped memory for tpu_custom_call.1']
    #allocation9 [shape = 's32[2]{0}', space=sflag, size = 0x8, scoped, tag = 'scoped memory for tpu_custom_call.1']
    #allocation10 [shape = 'u8[294912]{0}', space=vmem, size = 0x48000, scoped, tag = 'input window, operand 1, single buffered']
    #allocation11 [shape = 's32[1]{0}', space=sflag, size = 0x4, scoped, tag = 'scoped memory for tpu_custom_call.1']
    #allocation12 [shape = 'u8[294912]{0}', space=vmem, size = 0x48000, scoped, tag = 'input window, operand 2, single buffered']
    #allocation13 [shape = 'u8[131072]{0}', space=vmem, size = 0x20000, scoped, tag = 'output window, operand 0']
    %8 = vsyncpa [#allocation8], 0
    %s9 = scalar_lea.sflag [#allocation8], 1
    %10 = vsyncpa %s9, 0
    %11 = vsyncpa [#allocation11], 0
    %12 = vsyncpa [#allocation9], 0
    %s13 = scalar_lea.sflag [#allocation9], 1
    %14 = vsyncpa %s13, 0
    loop: start=0, step=1, limit=18
    $region2: #{tpu_custom_call.1} parent=1 // loop_pre_header
      _
    $region3: #{tpu_custom_call.1} parent=1 // loop_header
      %s16 = sphi 0, %s20
      %p17 = scmp.ge.s32.totalorder %s16, 18
      %s23 = sphi 0, %s42
      %s24 = sphi 0, %s38
      %s25 = sphi 0, %s34
      %s26 = sphi 0, %s23
      %s27 = sphi 0, %s24
      %s28 = sphi 0, %s25
      %s29 = sphi 0, %s26
      %s30 = sphi 0, %s27
      %s31 = sphi 0, %s28
      %s55 = sphi 0, %s57
      %s58 = sphi 0, %s55
      %s59 = sphi 0, %s58
      %s75 = sphi 0, %s59
      %s79 = sphi 0, %s79
      %s81 = sphi 0, %s79
      %s82 = sphi 0, %s81
      %s96 = sphi 0, %s82
      %s100 = sphi 0, %s100
      %s102 = sphi 0, %s100
      %s103 = sphi 0, %s102
      %s117 = sphi 0, %s103
      %s129 = sphi 0, %s131
      %s132 = sphi 0, %s129
      %s133 = sphi 0, %s132
      %s149 = sphi 0, %s133
    $region4: #{tpu_custom_call.1} parent=1 // loop_header_branch
      %19 = sbr.rel (%p17) target = $region8
    $region5: #{tpu_custom_call.1} parent=1 // loop_body
      %s21 = ssub.s32 %s16, 1
      %s22 = ssub.s32 %s16, 2
      %s32 = sadd.s32 1, %s25
      %p33 = scmp.ge.s32.totalorder %s32, 2
      %s34 = scalar_select %p33, 0, %s32
      %s35 = sadd.s32 1, %s24
      %s36 = scalar_select %p33, %s35, %s24
      %p37 = scmp.ge.s32.totalorder %s36, 4
      %s38 = scalar_select %p37, 0, %s36
      %s39 = sadd.s32 1, %s23
      %s40 = scalar_select %p37, %s39, %s23
      %p41 = scmp.ge.s32.totalorder %s40, 2
      %s42 = scalar_select %p41, 0, %s40
      %p43 = scmp.eq.s32.totalorder %s24, 0
      %p44 = scmp.eq.s32.totalorder %s24, 3
      %p45 = por %p43, %p44
      %s46 = scalar_select %p45, %s25, 0
      %p47 = scmp.eq.s32.totalorder %s38, 0
      %p48 = scmp.eq.s32.totalorder %s38, 3
      %p49 = por %p47, %p48
      %s50 = scalar_select %p49, %s34, 0
      %s51 = ssub.s32 %s23, %s42
      %s52 = ssub.s32 %s46, %s50
      %s53 = sor.u32 %s51, %s52
      %p54 = scmp.eq.s32.totalorder %s53, 0
      %s56 = sadd.s32 %s55, 1
      %s57 = scalar_select %p54, %s55, %s56
      %p60 = pneg %p54
      %p61 = scmp.eq.s32.totalorder %s16, 15
      %p62 = por %p60, %p61
      %p63 = scmp.ne.s32.totalorder %s55, %s58
      %p64 = scmp.eq.s32.totalorder %s16, 0
      %p65 = por %p63, %p64
      %p66 = scmp.ne.s32.totalorder %s55, %s58
      %p67 = scmp.eq.s32.totalorder %s21, 15
      %p68 = por %p66, %p67
      %p69 = scmp.ne.s32.totalorder %s58, %s59
      %p70 = scmp.eq.s32.totalorder %s21, 0
      %p71 = por %p69, %p70
      %p72 = scmp.ne.s32.totalorder %s58, %s59
      %p73 = scmp.eq.s32.totalorder %s22, 15
      %p74 = por %p72, %p73
      %p76 = scmp.ne.s32.totalorder %s59, %s75
      %p77 = scmp.eq.s32.totalorder %s22, 0
      %p78 = por %p76, %p77
      %s80 = sadd.s32 %s79, 1
      %p83 = scmp.eq.s32.totalorder %s16, 15
      %p84 = scmp.ne.s32.totalorder %s79, %s81
      %p85 = scmp.eq.s32.totalorder %s16, 0
      %p86 = por %p84, %p85
      %p87 = scmp.ne.s32.totalorder %s79, %s81
      %p88 = scmp.eq.s32.totalorder %s21, 15
      %p89 = por %p87, %p88
      %p90 = scmp.ne.s32.totalorder %s81, %s82
      %p91 = scmp.eq.s32.totalorder %s21, 0
      %p92 = por %p90, %p91
      %p93 = scmp.ne.s32.totalorder %s81, %s82
      %p94 = scmp.eq.s32.totalorder %s22, 15
      %p95 = por %p93, %p94
      %p97 = scmp.ne.s32.totalorder %s82, %s96
      %p98 = scmp.eq.s32.totalorder %s22, 0
      %p99 = por %p97, %p98
      %s101 = sadd.s32 %s100, 1
      %p104 = scmp.eq.s32.totalorder %s16, 15
      %p105 = scmp.ne.s32.totalorder %s100, %s102
      %p106 = scmp.eq.s32.totalorder %s16, 0
      %p107 = por %p105, %p106
      %p108 = scmp.ne.s32.totalorder %s100, %s102
      %p109 = scmp.eq.s32.totalorder %s21, 15
      %p110 = por %p108, %p109
      %p111 = scmp.ne.s32.totalorder %s102, %s103
      %p112 = scmp.eq.s32.totalorder %s21, 0
      %p113 = por %p111, %p112
      %p114 = scmp.ne.s32.totalorder %s102, %s103
      %p115 = scmp.eq.s32.totalorder %s22, 15
      %p116 = por %p114, %p115
      %p118 = scmp.ne.s32.totalorder %s103, %s117
      %p119 = scmp.eq.s32.totalorder %s22, 0
      %p120 = por %p118, %p119
      %p121 = scmp.eq.s32.totalorder %s24, 3
      %s122 = scalar_select %p121, %s25, 0
      %p123 = scmp.eq.s32.totalorder %s38, 3
      %s124 = scalar_select %p123, %s34, 0
      %s125 = ssub.s32 %s23, %s42
      %s126 = ssub.s32 %s122, %s124
      %s127 = sor.u32 %s125, %s126
      %p128 = scmp.eq.s32.totalorder %s127, 0
      %s130 = sadd.s32 %s129, 1
      %s131 = scalar_select %p128, %s129, %s130
      %p134 = pneg %p128
      %p135 = scmp.eq.s32.totalorder %s16, 15
      %p136 = por %p134, %p135
      %p137 = scmp.ne.s32.totalorder %s129, %s132
      %p138 = scmp.eq.s32.totalorder %s16, 0
      %p139 = por %p137, %p138
      %p140 = scmp.ne.s32.totalorder %s129, %s132
      %p141 = scmp.eq.s32.totalorder %s21, 15
      %p142 = por %p140, %p141
      %p143 = scmp.ne.s32.totalorder %s132, %s133
      %p144 = scmp.eq.s32.totalorder %s21, 0
      %p145 = por %p143, %p144
      %p146 = scmp.ne.s32.totalorder %s132, %s133
      %p147 = scmp.eq.s32.totalorder %s22, 15
      %p148 = por %p146, %p147
      %p150 = scmp.ne.s32.totalorder %s133, %s149
      %p151 = scmp.eq.s32.totalorder %s22, 0
      %p152 = por %p150, %p151
      %p153 = scmp.le.s32.totalorder 1, %s16
      %p154 = scmp.lt.s32.totalorder %s16, 17
      %p155 = pnand %p153, %p154
      %p156 = pneg %p155
      // Predicated region
      $region9: #{tpu_custom_call.1} parent=5 // pred_check
        _
      $region10: #{tpu_custom_call.1} parent=5 // pred_check_branch
        %158 = sbr.rel (%p155) target = $region12
      $region11: #{tpu_custom_call.1} parent=5 // pred_region
        %s159 = ssub.s32 %s16, 1
        // Predicated region
        $region13: #{tpu_custom_call.1} parent=11 // pred_check
          %p160 = pneg %p92
        $region14: #{tpu_custom_call.1} parent=11 // pred_check_branch
          %162 = sbr.rel (%p160) target = $region16
        $region15: #{tpu_custom_call.1} parent=11 // pred_region
          %s164 = ssub.s32 9216, 9216
          %165 = vsyncadd [#allocation11], %s164
          %s166 = sshll.u32 [#allocation10], 4
          %s167 = int_to_ptr.vmem [resolvable:$true] %s166
          %172 = dma.hbm_to_vmem [thread:$0]  %s1, 9216, %s167, [#allocation11], 64, 64, 4
        $region16: #{tpu_custom_call.1} parent=11 // pred_fallthru
          _
        // Predicated region
        $region17: #{tpu_custom_call.1} parent=11 // pred_check
          %p173 = pneg %p113
        $region18: #{tpu_custom_call.1} parent=11 // pred_check_branch
          %175 = sbr.rel (%p173) target = $region20
        $region19: #{tpu_custom_call.1} parent=11 // pred_region
          %s177 = ssub.s32 9216, 9216
          %178 = vsyncadd [#allocation11], %s177
          %s179 = sshll.u32 [#allocation12], 4
          %s180 = int_to_ptr.vmem [resolvable:$true] %s179
          %185 = dma.hbm_to_vmem [thread:$0]  %s2, 9216, %s180, [#allocation11], 64, 64, 4
        $region20: #{tpu_custom_call.1} parent=11 // pred_fallthru
          _
      $region12: #{tpu_custom_call.1} parent=5 // pred_fallthru
        _
      %p186 = scmp.lt.s32.totalorder %s16, 16
      // Predicated region
      $region21: #{tpu_custom_call.1} parent=5 // pred_check
        %p187 = pneg %p186
      $region22: #{tpu_custom_call.1} parent=5 // pred_check_branch
        %189 = sbr.rel (%p187) target = $region24
      $region23: #{tpu_custom_call.1} parent=5 // pred_region
        // Predicated region
        $region25: #{tpu_custom_call.1} parent=23 // pred_check
          %p190 = pneg %p65
        $region26: #{tpu_custom_call.1} parent=23 // pred_check_branch
          %192 = sbr.rel (%p190) target = $region28
        $region27: #{tpu_custom_call.1} parent=23 // pred_region
          %s193 = sand.u32 %s55, 1
          %s194 = scalar_lea.sflag [#allocation8], %s193
          %s195 = sand.u32 %s55, 1
          %s196 = smul.addr %s195, 128
          %s197 = scalar_lea.vmem [#allocation7], %s196
          %p198 = scmp.eq.s32.totalorder %s24, 0
          %p199 = scmp.eq.s32.totalorder %s24, 3
          %p200 = por %p198, %p199
          %s201 = scalar_select %p200, %s25, 0
          %s202 = smul.u32 8, %s201
          %s204 = ssub.s32 2048, 2048
          %205 = vsyncadd %s194, %s204
          %s206 = smul.addr %s202, 2
          %s207 = smul.addr %s23, 32
          %s208 = sadd.s32 %s206, %s207
          %s209 = smul.addr %s208, 128
          %s210 = scalar_lea.hbm %s0, %s209
          %s211 = sshll.u32 %s197, 4
          %s212 = int_to_ptr.vmem [resolvable:$true] %s211
          %217 = dma.hbm_to_vmem [thread:$0]  %s210, 2048, %s212, %s194, 128, 128, 8
        $region28: #{tpu_custom_call.1} parent=23 // pred_fallthru
          _
      $region24: #{tpu_custom_call.1} parent=5 // pred_fallthru
        _
      %p218 = scmp.le.s32.totalorder 1, %s16
      %p219 = scmp.lt.s32.totalorder %s16, 17
      %p220 = pnand %p218, %p219
      %p221 = pneg %p220
      // Predicated region
      $region29: #{tpu_custom_call.1} parent=5 // pred_check
        _
      $region30: #{tpu_custom_call.1} parent=5 // pred_check_branch
        %223 = sbr.rel (%p220) target = $region32
      $region31: #{tpu_custom_call.1} parent=5 // pred_region
        %s224 = ssub.s32 %s16, 1
        %s225 = sand.u32 %s58, 1
        %s226 = scalar_lea.sflag [#allocation8], %s225
        %s227 = sand.u32 %s58, 1
        %s228 = smul.addr %s227, 128
        %s229 = scalar_lea.vmem [#allocation7], %s228
        // Predicated region
        $region33: #{tpu_custom_call.1} parent=31 // pred_check
          %p230 = pneg %p71
        $region34: #{tpu_custom_call.1} parent=31 // pred_check_branch
          %232 = sbr.rel (%p230) target = $region36
        $region35: #{tpu_custom_call.1} parent=31 // pred_region
          %233 = dma.done %s226, 2048
        $region36: #{tpu_custom_call.1} parent=31 // pred_fallthru
          _
        // Predicated region
        $region37: #{tpu_custom_call.1} parent=31 // pred_check
          %p234 = pneg %p92
        $region38: #{tpu_custom_call.1} parent=31 // pred_check_branch
          %236 = sbr.rel (%p234) target = $region40
        $region39: #{tpu_custom_call.1} parent=31 // pred_region
          %237 = dma.done [#allocation11], 9216
        $region40: #{tpu_custom_call.1} parent=31 // pred_fallthru
          _
        // Predicated region
        $region41: #{tpu_custom_call.1} parent=31 // pred_check
          %p238 = pneg %p113
        $region42: #{tpu_custom_call.1} parent=31 // pred_check_branch
          %240 = sbr.rel (%p238) target = $region44
        $region43: #{tpu_custom_call.1} parent=31 // pred_region
          %241 = dma.done [#allocation11], 9216
        $region44: #{tpu_custom_call.1} parent=31 // pred_fallthru
          _
        %s242 = sand.u32 %s58, 1
        %s243 = scalar_lea.sflag [#allocation8], %s242
        %s244 = sand.u32 %s58, 1
        %s245 = smul.addr %s244, 128
        %s246 = scalar_lea.vmem [#allocation7], %s245
        %p247 = pneg %p71
        %p248 = pneg %p68
        %p249 = pneg %p92
        %p250 = pneg %p89
        %p251 = pneg %p113
        %p252 = pneg %p110
        %p253 = pneg %p145
        %p254 = pneg %p142
        %s255 = sand.u32 %s132, 1
        %s256 = scalar_lea.sflag [#allocation9], %s255
        %s257 = sand.u32 %s132, 1
        %s258 = smul.addr %s257, 128
        %s259 = scalar_lea.vmem [#allocation13], %s258
        %p260 = scmp.eq.s32.totalorder %s27, 0
        %p261 = scmp.eq.s32.totalorder %s27, 3
        %p262 = por %p260, %p261
        %s263 = scalar_select %p262, %s28, 0
        %s264 = smul.u32 8, %s263
        %p265 = scmp.eq.s32.totalorder %s27, 3
        %s266 = scalar_select %p265, %s28, 0
        %s267 = smul.u32 8, %s266
        %s269 = smul.u32 %s28, 8
        %p270 = scmp.eq.s32.totalorder %s27, 0
        // Predicated region
        $region45: #{tpu_custom_call.1} parent=31 // pred_check
          %p271 = pneg %p270
        $region46: #{tpu_custom_call.1} parent=31 // pred_check_branch
          %273 = sbr.rel (%p271) target = $region48
        $region47: #{tpu_custom_call.1} parent=31 // pred_region
          %v274 = vld [vmem:[%s229] sm:$0xff]
          %v275 = vld [vmem:[%s229 + $0x8] sm:$0xff]
          %v276 = vld [vmem:[%s229 + $0x10] sm:$0xff]
          %v277 = vld [vmem:[%s229 + $0x18] sm:$0xff]
          %v278 = vld [vmem:[%s229 + $0x20] sm:$0xff]
          %v279 = vld [vmem:[%s229 + $0x28] sm:$0xff]
          %v280 = vld [vmem:[%s229 + $0x30] sm:$0xff]
          %v281 = vld [vmem:[%s229 + $0x38] sm:$0xff]
          %v282 = vld [vmem:[%s229 + $0x40] sm:$0xff]
          %v283 = vld [vmem:[%s229 + $0x48] sm:$0xff]
          %v284 = vld [vmem:[%s229 + $0x50] sm:$0xff]
          %v285 = vld [vmem:[%s229 + $0x58] sm:$0xff]
          %v286 = vld [vmem:[%s229 + $0x60] sm:$0xff]
          %v287 = vld [vmem:[%s229 + $0x68] sm:$0xff]
          %v288 = vld [vmem:[%s229 + $0x70] sm:$0xff]
          %v289 = vld [vmem:[%s229 + $0x78] sm:$0xff]
          %v290 = vpack.c.bf16 %v275, %v274
          %v291 = vpack.c.bf16 %v277, %v276
          %v292 = vpack.c.bf16 %v279, %v278
          %v293 = vpack.c.bf16 %v281, %v280
          %v294 = vpack.c.bf16 %v283, %v282
          %v295 = vpack.c.bf16 %v285, %v284
          %v296 = vpack.c.bf16 %v287, %v286
          %v297 = vpack.c.bf16 %v289, %v288
          %s298 = sadd.s32 %s269, 1
          %s299 = smul.addr %s298, 8
          %s300 = scalar_lea.vmem [#allocation2], %s299
          %301 = vst [vmem:[%s300] sm:$0xff] %v290
          %302 = vst [vmem:[%s300 + $0x8] sm:$0xff] %v291
          %303 = vst [vmem:[%s300 + $0x10] sm:$0xff] %v292
          %304 = vst [vmem:[%s300 + $0x18] sm:$0xff] %v293
          %305 = vst [vmem:[%s300 + $0x20] sm:$0xff] %v294
          %306 = vst [vmem:[%s300 + $0x28] sm:$0xff] %v295
          %307 = vst [vmem:[%s300 + $0x30] sm:$0xff] %v296
          %308 = vst [vmem:[%s300 + $0x38] sm:$0xff] %v297
          %p309 = scmp.eq.s32.totalorder %s28, 0
          // Predicated region
          $region49: #{tpu_custom_call.1} parent=47 // pred_check
            %p310 = pneg %p309
          $region50: #{tpu_custom_call.1} parent=47 // pred_check_branch
            %312 = sbr.rel (%p310) target = $region52
          $region51: #{tpu_custom_call.1} parent=47 // pred_region
            %313 = vst [vmem:[#allocation2] sm:$0xff] %v291
            %314 = vst [vmem:[#allocation5] sm:$0x3] 0.0
            %315 = vst [vmem:[#allocation6] sm:$0x3] 0.0
          $region52: #{tpu_custom_call.1} parent=47 // pred_fallthru
            _
          %p316 = scmp.eq.s32.totalorder %s28, 1
          // Predicated region
          $region53: #{tpu_custom_call.1} parent=47 // pred_check
            %p317 = pneg %p316
          $region54: #{tpu_custom_call.1} parent=47 // pred_check_branch
            %319 = sbr.rel (%p317) target = $region56
          $region55: #{tpu_custom_call.1} parent=47 // pred_region
            %s320 = scalar_lea.vmem [#allocation2], 136
            %321 = vst [vmem:[%s320] sm:$0xff] %v296
          $region56: #{tpu_custom_call.1} parent=47 // pred_fallthru
            _
        $region48: #{tpu_custom_call.1} parent=31 // pred_fallthru
          _
        %p322 = scmp.eq.s32.totalorder %s27, 1
        // Predicated region
        $region57: #{tpu_custom_call.1} parent=31 // pred_check
          %p323 = pneg %p322
        $region58: #{tpu_custom_call.1} parent=31 // pred_check_branch
          %325 = sbr.rel (%p323) target = $region60
        $region59: #{tpu_custom_call.1} parent=31 // pred_region
          %s326 = smul.addr %s269, 8
          %s327 = scalar_lea.vmem [#allocation2], %s326
          %v328 = vld [vmem:[%s327] sm:$0xff]
          %v329 = vld [vmem:[%s327 + $0x8] sm:$0xff]
          %v330 = vld [vmem:[%s327 + $0x10] sm:$0xff]
          %v331 = vld [vmem:[%s327 + $0x18] sm:$0xff]
          %v332 = vld [vmem:[%s327 + $0x20] sm:$0xff]
          %v333 = vld [vmem:[%s327 + $0x28] sm:$0xff]
          %v334 = vld [vmem:[%s327 + $0x30] sm:$0xff]
          %v335 = vld [vmem:[%s327 + $0x38] sm:$0xff]
          %v336 = vld [vmem:[%s327 + $0x40] sm:$0xff]
          %v337 = vld [vmem:[%s327 + $0x48] sm:$0xff]
          %v339 = vshrl.u32 %v328, 16
          %v342 = vshrl.u32 %v329, 16
          %v345 = vshrl.u32 %v330, 16
          %v348 = vshrl.u32 %v331, 16
          %v351 = vshrl.u32 %v332, 16
          %v354 = vshrl.u32 %v333, 16
          %v357 = vshrl.u32 %v334, 16
          %v360 = vshrl.u32 %v335, 16
          %v370 = vrot.slane %v339, 7
          %v371 = vshll.u32 %v328, 16
          %v373 = vor.u32 %v370, %v371
          %v374 = vrot.slane %v342, 7
          %v375 = vshll.u32 %v329, 16
          %v377 = vor.u32 %v374, %v375
          %v378 = vrot.slane %v345, 7
          %v379 = vshll.u32 %v330, 16
          %v381 = vor.u32 %v378, %v379
          %v382 = vrot.slane %v348, 7
          %v383 = vshll.u32 %v331, 16
          %v385 = vor.u32 %v382, %v383
          %v386 = vrot.slane %v351, 7
          %v387 = vshll.u32 %v332, 16
          %v389 = vor.u32 %v386, %v387
          %v390 = vrot.slane %v354, 7
          %v391 = vshll.u32 %v333, 16
          %v393 = vor.u32 %v390, %v391
          %v394 = vrot.slane %v357, 7
          %v395 = vshll.u32 %v334, 16
          %v397 = vor.u32 %v394, %v395
          %v398 = vrot.slane %v360, 7
          %v399 = vshll.u32 %v335, 16
          %v401 = vor.u32 %v398, %v399
          %vm410 = vcmask 1040384
          %vm411 = vsmask.f32 256
          %vm412 = vmand %vm410, %vm411
          %v413 = vsel %vm412, %v339, %v373
          %v414 = vsel %vm412, %v342, %v377
          %v415 = vsel %vm412, %v345, %v381
          %v416 = vsel %vm412, %v348, %v385
          %v417 = vsel %vm412, %v351, %v389
          %v418 = vsel %vm412, %v354, %v393
          %v419 = vsel %vm412, %v357, %v397
          %v420 = vsel %vm412, %v360, %v401
          %v421 = vrot.slane %v371, 1
          %v422 = vor.u32 %v339, %v421
          %v423 = vrot.slane %v375, 1
          %v424 = vor.u32 %v342, %v423
          %v425 = vrot.slane %v379, 1
          %v426 = vor.u32 %v345, %v425
          %v427 = vrot.slane %v383, 1
          %v428 = vor.u32 %v348, %v427
          %v429 = vrot.slane %v387, 1
          %v430 = vor.u32 %v351, %v429
          %v431 = vrot.slane %v391, 1
          %v432 = vor.u32 %v354, %v431
          %v433 = vrot.slane %v395, 1
          %v434 = vor.u32 %v357, %v433
          %v435 = vrot.slane %v399, 1
          %v436 = vor.u32 %v360, %v435
          %vm453 = vcmask 1047552
          %vm454 = vsmask.f32 7424
          %vm455 = vmand %vm453, %vm454
          %v456 = vsel %vm455, %v422, %v371
          %v457 = vsel %vm455, %v424, %v375
          %v458 = vsel %vm455, %v426, %v379
          %v459 = vsel %vm455, %v428, %v383
          %v460 = vsel %vm455, %v430, %v387
          %v461 = vsel %vm455, %v432, %v391
          %v462 = vsel %vm455, %v434, %v395
          %v463 = vsel %vm455, %v436, %v399
          %v464 = vld [vmem:[#allocation10] sm:$0xf]
          %v465 = vld [vmem:[#allocation10 + $0x4] sm:$0xf]
          %v466 = vld [vmem:[#allocation10 + $0x8] sm:$0xf]
          %v467 = vld [vmem:[#allocation10 + $0xc] sm:$0xf]
          %v468 = vld [vmem:[#allocation10 + $0x10] sm:$0xf]
          %v469 = vld [vmem:[#allocation10 + $0x14] sm:$0xf]
          %v470 = vld [vmem:[#allocation10 + $0x18] sm:$0xf]
          %v471 = vld [vmem:[#allocation10 + $0x1c] sm:$0xf]
          %v472 = vld [vmem:[#allocation10 + $0x20] sm:$0xf]
          %v473 = vld [vmem:[#allocation10 + $0x24] sm:$0xf]
          %v474 = vld [vmem:[#allocation10 + $0x28] sm:$0xf]
          %v475 = vld [vmem:[#allocation10 + $0x2c] sm:$0xf]
          %v476 = vld [vmem:[#allocation10 + $0x30] sm:$0xf]
          %v477 = vld [vmem:[#allocation10 + $0x34] sm:$0xf]
          %v478 = vld [vmem:[#allocation10 + $0x38] sm:$0xf]
          %v479 = vld [vmem:[#allocation10 + $0x3c] sm:$0xf]
          %v480 = vld [vmem:[#allocation10 + $0x40] sm:$0xf]
          %v481 = vld [vmem:[#allocation10 + $0x44] sm:$0xf]
          %v482 = vld [vmem:[#allocation10 + $0x48] sm:$0xf]
          %v483 = vld [vmem:[#allocation10 + $0x4c] sm:$0xf]
          %v484 = vld [vmem:[#allocation10 + $0x50] sm:$0xf]
          %v485 = vld [vmem:[#allocation10 + $0x54] sm:$0xf]
          %v486 = vld [vmem:[#allocation10 + $0x58] sm:$0xf]
          %v487 = vld [vmem:[#allocation10 + $0x5c] sm:$0xf]
          %v488 = vld [vmem:[#allocation10 + $0x60] sm:$0xf]
          %v489 = vld [vmem:[#allocation10 + $0x64] sm:$0xf]
          %v490 = vld [vmem:[#allocation10 + $0x68] sm:$0xf]
          %v491 = vld [vmem:[#allocation10 + $0x6c] sm:$0xf]
          %v492 = vld [vmem:[#allocation10 + $0x70] sm:$0xf]
          %v493 = vld [vmem:[#allocation10 + $0x74] sm:$0xf]
          %v494 = vld [vmem:[#allocation10 + $0x78] sm:$0xf]
          %v495 = vld [vmem:[#allocation10 + $0x7c] sm:$0xf]
          %v496 = vld [vmem:[#allocation10 + $0x80] sm:$0xf]
          %v497 = vld [vmem:[#allocation10 + $0x84] sm:$0xf]
          %v498 = vld [vmem:[#allocation10 + $0x88] sm:$0xf]
          %v499 = vld [vmem:[#allocation10 + $0x8c] sm:$0xf]
          %v500 = vld [vmem:[#allocation10 + $0x90] sm:$0xf]
          %v501 = vld [vmem:[#allocation10 + $0x94] sm:$0xf]
          %v502 = vld [vmem:[#allocation10 + $0x98] sm:$0xf]
          %v503 = vld [vmem:[#allocation10 + $0x9c] sm:$0xf]
          %v504 = vld [vmem:[#allocation10 + $0xa0] sm:$0xf]
          %v505 = vld [vmem:[#allocation10 + $0xa4] sm:$0xf]
          %v506 = vld [vmem:[#allocation10 + $0xa8] sm:$0xf]
          %v507 = vld [vmem:[#allocation10 + $0xac] sm:$0xf]
          %v508 = vld [vmem:[#allocation10 + $0xb0] sm:$0xf]
          %v509 = vld [vmem:[#allocation10 + $0xb4] sm:$0xf]
          %v510 = vld [vmem:[#allocation10 + $0xb8] sm:$0xf]
          %v511 = vld [vmem:[#allocation10 + $0xbc] sm:$0xf]
          %v513 = vshrl.u32 %v336, 16
          %v516 = vrot.slane %v513, 7
          %v517 = vshll.u32 %v336, 16
          %v519 = vor.u32 %v516, %v517
          %v521 = vsel %vm412, %v513, %v519
          %v522 = vrot.slane %v517, 1
          %v523 = vor.u32 %v513, %v522
          %v526 = vsel %vm455, %v523, %v517
          %s527 = scalar_lea.vmem [#allocation10], 192
          %v528 = vld [vmem:[%s527] sm:$0xf]
          %v529 = vld [vmem:[%s527 + $0x4] sm:$0xf]
          %v530 = vld [vmem:[%s527 + $0x8] sm:$0xf]
          %v531 = vld [vmem:[%s527 + $0xc] sm:$0xf]
          %v532 = vld [vmem:[%s527 + $0x10] sm:$0xf]
          %v533 = vld [vmem:[%s527 + $0x14] sm:$0xf]
          %v534 = vld [vmem:[%s527 + $0x18] sm:$0xf]
          %v535 = vld [vmem:[%s527 + $0x1c] sm:$0xf]
          %v536 = vld [vmem:[%s527 + $0x20] sm:$0xf]
          %v537 = vld [vmem:[%s527 + $0x24] sm:$0xf]
          %v538 = vld [vmem:[%s527 + $0x28] sm:$0xf]
          %v539 = vld [vmem:[%s527 + $0x2c] sm:$0xf]
          %v540 = vld [vmem:[%s527 + $0x30] sm:$0xf]
          %v541 = vld [vmem:[%s527 + $0x34] sm:$0xf]
          %v542 = vld [vmem:[%s527 + $0x38] sm:$0xf]
          %v543 = vld [vmem:[%s527 + $0x3c] sm:$0xf]
          %v544 = vld [vmem:[%s527 + $0x40] sm:$0xf]
          %v545 = vld [vmem:[%s527 + $0x44] sm:$0xf]
          %v546 = vld [vmem:[%s527 + $0x48] sm:$0xf]
          %v547 = vld [vmem:[%s527 + $0x4c] sm:$0xf]
          %v548 = vld [vmem:[%s527 + $0x50] sm:$0xf]
          %v549 = vld [vmem:[%s527 + $0x54] sm:$0xf]
          %v550 = vld [vmem:[%s527 + $0x58] sm:$0xf]
          %v551 = vld [vmem:[%s527 + $0x5c] sm:$0xf]
          %v552 = vld [vmem:[%s527 + $0x60] sm:$0xf]
          %v553 = vld [vmem:[%s527 + $0x64] sm:$0xf]
          %v554 = vld [vmem:[%s527 + $0x68] sm:$0xf]
          %v555 = vld [vmem:[%s527 + $0x6c] sm:$0xf]
          %v556 = vld [vmem:[%s527 + $0x70] sm:$0xf]
          %v557 = vld [vmem:[%s527 + $0x74] sm:$0xf]
          %v558 = vld [vmem:[%s527 + $0x78] sm:$0xf]
          %v559 = vld [vmem:[%s527 + $0x7c] sm:$0xf]
          %v560 = vld [vmem:[%s527 + $0x80] sm:$0xf]
          %v561 = vld [vmem:[%s527 + $0x84] sm:$0xf]
          %v562 = vld [vmem:[%s527 + $0x88] sm:$0xf]
          %v563 = vld [vmem:[%s527 + $0x8c] sm:$0xf]
          %v564 = vld [vmem:[%s527 + $0x90] sm:$0xf]
          %v565 = vld [vmem:[%s527 + $0x94] sm:$0xf]
          %v566 = vld [vmem:[%s527 + $0x98] sm:$0xf]
          %v567 = vld [vmem:[%s527 + $0x9c] sm:$0xf]
          %v568 = vld [vmem:[%s527 + $0xa0] sm:$0xf]
          %v569 = vld [vmem:[%s527 + $0xa4] sm:$0xf]
          %v570 = vld [vmem:[%s527 + $0xa8] sm:$0xf]
          %v571 = vld [vmem:[%s527 + $0xac] sm:$0xf]
          %v572 = vld [vmem:[%s527 + $0xb0] sm:$0xf]
          %v573 = vld [vmem:[%s527 + $0xb4] sm:$0xf]
          %v574 = vld [vmem:[%s527 + $0xb8] sm:$0xf]
          %v575 = vld [vmem:[%s527 + $0xbc] sm:$0xf]
          %v624 = vunpack.c.l.b16 %v528
          %v625 = vunpack.c.l.b16 %v529
          %v626 = vunpack.c.l.b16 %v530
          %v627 = vunpack.c.l.b16 %v531
          %v628 = vunpack.c.l.b16 %v532
          %v629 = vunpack.c.l.b16 %v533
          %v630 = vunpack.c.l.b16 %v534
          %v631 = vunpack.c.l.b16 %v535
          %v632 = vunpack.c.l.b16 %v536
          %v633 = vunpack.c.l.b16 %v537
          %v634 = vunpack.c.l.b16 %v538
          %v635 = vunpack.c.l.b16 %v539
          %v636 = vunpack.c.l.b16 %v540
          %v637 = vunpack.c.l.b16 %v541
          %v638 = vunpack.c.l.b16 %v542
          %v639 = vunpack.c.l.b16 %v543
          %v640 = vunpack.c.l.b16 %v544
          %v641 = vunpack.c.l.b16 %v545
          %v642 = vunpack.c.l.b16 %v546
          %v643 = vunpack.c.l.b16 %v547
          %v644 = vunpack.c.l.b16 %v548
          %v645 = vunpack.c.l.b16 %v549
          %v646 = vunpack.c.l.b16 %v550
          %v647 = vunpack.c.l.b16 %v551
          %v648 = vunpack.c.l.b16 %v552
          %v649 = vunpack.c.l.b16 %v553
          %v650 = vunpack.c.l.b16 %v554
          %v651 = vunpack.c.l.b16 %v555
          %v652 = vunpack.c.l.b16 %v556
          %v653 = vunpack.c.l.b16 %v557
          %v654 = vunpack.c.l.b16 %v558
          %v655 = vunpack.c.l.b16 %v559
          %v656 = vunpack.c.l.b16 %v560
          %v657 = vunpack.c.l.b16 %v561
          %v658 = vunpack.c.l.b16 %v562
          %v659 = vunpack.c.l.b16 %v563
          %v660 = vunpack.c.l.b16 %v564
          %v661 = vunpack.c.l.b16 %v565
          %v662 = vunpack.c.l.b16 %v566
          %v663 = vunpack.c.l.b16 %v567
          %v664 = vunpack.c.l.b16 %v568
          %v665 = vunpack.c.l.b16 %v569
          %v666 = vunpack.c.l.b16 %v570
          %v667 = vunpack.c.l.b16 %v571
          %v668 = vunpack.c.l.b16 %v572
          %v669 = vunpack.c.l.b16 %v573
          %v670 = vunpack.c.l.b16 %v574
          %v671 = vunpack.c.l.b16 %v575
          %v672 = vpack.c.b16 %v625, %v624
          %v673 = vpack.c.b16 %v627, %v626
          %v674 = vpack.c.b16 %v629, %v628
          %v675 = vpack.c.b16 %v631, %v630
          %v676 = vpack.c.b16 %v633, %v632
          %v677 = vpack.c.b16 %v635, %v634
          %v678 = vpack.c.b16 %v637, %v636
          %v679 = vpack.c.b16 %v639, %v638
          %v680 = vpack.c.b16 %v641, %v640
          %v681 = vpack.c.b16 %v643, %v642
          %v682 = vpack.c.b16 %v645, %v644
          %v683 = vpack.c.b16 %v647, %v646
          %v684 = vpack.c.b16 %v649, %v648
          %v685 = vpack.c.b16 %v651, %v650
          %v686 = vpack.c.b16 %v653, %v652
          %v687 = vpack.c.b16 %v655, %v654
          %v688 = vpack.c.b16 %v657, %v656
          %v689 = vpack.c.b16 %v659, %v658
          %v690 = vpack.c.b16 %v661, %v660
          %v691 = vpack.c.b16 %v663, %v662
          %v692 = vpack.c.b16 %v665, %v664
          %v693 = vpack.c.b16 %v667, %v666
          %v694 = vpack.c.b16 %v669, %v668
          %v695 = vpack.c.b16 %v671, %v670
          %720 = vmatprep.subr.bf16.mxu0 0
          %721 = vmatpush1.bf16.msra.mxu0 %v672
          %722 = vmatprep.subr.bf16.mxu0 0
          %723 = vmatpush1.bf16.msra.mxu0 %v673
          %724 = vmatprep.subr.bf16.mxu0 0
          %725 = vmatpush1.bf16.msra.mxu0 %v674
          %726 = vmatprep.subr.bf16.mxu0 0
          %727 = vmatpush1.bf16.msra.mxu0 %v675
          %728 = vmatprep.subr.bf16.mxu0 0
          %729 = vmatpush1.bf16.msra.mxu0 %v676
          %730 = vmatprep.subr.bf16.mxu0 0
          %731 = vmatpush1.bf16.msra.mxu0 %v677
          %732 = vmatprep.subr.bf16.mxu0 0
          %733 = vmatpush1.bf16.msra.mxu0 %v678
          %734 = vmatprep.subr.bf16.mxu0 0
          %735 = vmatpush1.bf16.msra.mxu0 %v679
          %736 = vmatprep.subr.bf16.mxu0 0
          %737 = vmatpush1.bf16.msra.mxu0 %v680
          %738 = vmatprep.subr.bf16.mxu0 0
          %739 = vmatpush1.bf16.msra.mxu0 %v681
          %740 = vmatprep.subr.bf16.mxu0 0
          %741 = vmatpush1.bf16.msra.mxu0 %v682
          %742 = vmatprep.subr.bf16.mxu0 0
          %743 = vmatpush1.bf16.msra.mxu0 %v683
          %744 = vmatprep.subr.bf16.mxu0 0
          %745 = vmatpush1.bf16.msra.mxu0 %v684
          %746 = vmatprep.subr.bf16.mxu0 0
          %747 = vmatpush1.bf16.msra.mxu0 %v685
          %748 = vmatprep.subr.bf16.mxu0 0
          %749 = vmatpush1.bf16.msra.mxu0 %v686
          %750 = vmatprep.subr.bf16.mxu0 0
          %751 = vmatpush1.bf16.msra.mxu0 %v687
          %752 = vmatprep.mubr.bf16.mxu0 %v329
          %753 = vmatmul.mubr.bf16.gmra.mrb[0].mxu0 %v414
          %v754 = vpop.f32.mrb[0].mxu0
          %v755 = vadd.f32 0.0, %v754
          %v756 = vpop.f32.mrb[0].mxu0
          %v757 = vpop.f32.mrb[0].mxu0
          %v758 = vadd.f32 0.0, %v757
          %v759 = vpop.f32.mrb[0].mxu0
          %760 = vmatprep.mubr.bf16.mxu0 %v330
          %761 = vmatmul.mubr.bf16.gmra.mrb[0].mxu0 %v415
          %v762 = vpop.f32.mrb[0].mxu0
          %v763 = vadd.f32 0.0, %v762
          %v764 = vpop.f32.mrb[0].mxu0
          %v765 = vpop.f32.mrb[0].mxu0
          %v766 = vadd.f32 0.0, %v765
          %v767 = vpop.f32.mrb[0].mxu0
          %768 = vmatprep.mubr.bf16.mxu0 %v331
          %769 = vmatmul.mubr.bf16.gmra.mrb[0].mxu0 %v416
          %v770 = vpop.f32.mrb[0].mxu0
          %v771 = vadd.f32 0.0, %v770
          %v772 = vpop.f32.mrb[0].mxu0
          %v773 = vpop.f32.mrb[0].mxu0
          %v774 = vadd.f32 0.0, %v773
          %v775 = vpop.f32.mrb[0].mxu0
          %776 = vmatprep.mubr.bf16.mxu0 %v332
          %777 = vmatmul.mubr.bf16.gmra.mrb[0].mxu0 %v417
          %v778 = vpop.f32.mrb[0].mxu0
          %v779 = vadd.f32 0.0, %v778
          %v780 = vpop.f32.mrb[0].mxu0
          %v781 = vpop.f32.mrb[0].mxu0
          %v782 = vadd.f32 0.0, %v781
          %v783 = vpop.f32.mrb[0].mxu0
          %784 = vmatprep.mubr.bf16.mxu0 %v333
          %785 = vmatmul.mubr.bf16.gmra.mrb[0].mxu0 %v418
          %v786 = vpop.f32.mrb[0].mxu0
          %v787 = vadd.f32 0.0, %v786
          %v788 = vpop.f32.mrb[0].mxu0
          %v789 = vpop.f32.mrb[0].mxu0
          %v790 = vadd.f32 0.0, %v789
          %v791 = vpop.f32.mrb[0].mxu0
          %792 = vmatprep.mubr.bf16.mxu0 %v334
          %793 = vmatmul.mubr.bf16.gmra.mrb[0].mxu0 %v419
          %v794 = vpop.f32.mrb[0].mxu0
          %v795 = vadd.f32 0.0, %v794
          %v796 = vpop.f32.mrb[0].mxu0
          %v797 = vpop.f32.mrb[0].mxu0
          %v798 = vadd.f32 0.0, %v797
          %v799 = vpop.f32.mrb[0].mxu0
          %800 = vmatprep.mubr.bf16.mxu0 %v335
          %801 = vmatmul.mubr.bf16.gmra.mrb[0].mxu0 %v420
          %v802 = vpop.f32.mrb[0].mxu0
          %v803 = vadd.f32 0.0, %v802
          %v804 = vpop.f32.mrb[0].mxu0
          %v805 = vpop.f32.mrb[0].mxu0
          %v806 = vadd.f32 0.0, %v805
          %v807 = vpop.f32.mrb[0].mxu0
          %808 = vmatprep.mubr.bf16.mxu0 %v336
          %809 = vmatmul.mubr.bf16.gmra.mrb[0].mxu0 %v521
          %v810 = vpop.f32.mrb[0].mxu0
          %v811 = vadd.f32 0.0, %v810
          %v812 = vpop.f32.mrb[0].mxu0
          %v813 = vpop.f32.mrb[0].mxu0
          %v814 = vadd.f32 0.0, %v813
          %v815 = vpop.f32.mrb[0].mxu0
          %816 = vdwg.mxu0
          %817 = vmatprep.subr.bf16.mxu0 0
          %818 = vmatpush1.bf16.msra.mxu0 %v688
          %819 = vmatprep.subr.bf16.mxu0 0
          %820 = vmatpush1.bf16.msra.mxu0 %v689
          %821 = vmatprep.subr.bf16.mxu0 0
          %822 = vmatpush1.bf16.msra.mxu0 %v690
          %823 = vmatprep.subr.bf16.mxu0 0
          %824 = vmatpush1.bf16.msra.mxu0 %v691
          %825 = vmatprep.subr.bf16.mxu0 0
          %826 = vmatpush1.bf16.msra.mxu0 %v692
          %827 = vmatprep.subr.bf16.mxu0 0
          %828 = vmatpush1.bf16.msra.mxu0 %v693
          %829 = vmatprep.subr.bf16.mxu0 0
          %830 = vmatpush1.bf16.msra.mxu0 %v694
          %831 = vmatprep.subr.bf16.mxu0 0
          %832 = vmatpush1.bf16.msra.mxu0 %v695
          %833 = vmatprep.subr.bf16.mxu0 0
          %834 = vmatpush1.bf16.msra.mxu0 0
          %835 = vmatprep.subr.bf16.mxu0 0
          %836 = vmatpush1.bf16.msra.mxu0 0
          %837 = vmatprep.subr.bf16.mxu0 0
          %838 = vmatpush1.bf16.msra.mxu0 0
          %839 = vmatprep.subr.bf16.mxu0 0
          %840 = vmatpush1.bf16.msra.mxu0 0
          %841 = vmatprep.subr.bf16.mxu0 0
          %842 = vmatpush1.bf16.msra.mxu0 0
          %843 = vmatprep.subr.bf16.mxu0 0
          %844 = vmatpush1.bf16.msra.mxu0 0
          %845 = vmatprep.subr.bf16.mxu0 0
          %846 = vmatpush1.bf16.msra.mxu0 0
          %847 = vmatprep.subr.bf16.mxu0 0
          %848 = vmatpush1.bf16.msra.mxu0 0
          %849 = vmatprep.mubr.bf16.mxu0 0
          %850 = vmatmul.mubr.bf16.gmra.mrb[0].mxu0 %v457
          %v851 = vpop.f32.mrb[0].mxu0
          %v852 = vadd.f32 %v755, %v851
          %v853 = vpop.f32.mrb[0].mxu0
          %v854 = vpop.f32.mrb[0].mxu0
          %v855 = vadd.f32 %v758, %v854
          %v856 = vpop.f32.mrb[0].mxu0
          %857 = vmatprep.mubr.bf16.mxu0 0
          %858 = vmatmul.mubr.bf16.gmra.mrb[0].mxu0 %v458
          %v859 = vpop.f32.mrb[0].mxu0
          %v860 = vadd.f32 %v763, %v859
          %v861 = vpop.f32.mrb[0].mxu0
          %v862 = vpop.f32.mrb[0].mxu0
          %v863 = vadd.f32 %v766, %v862
          %v864 = vpop.f32.mrb[0].mxu0
          %865 = vmatprep.mubr.bf16.mxu0 0
          %866 = vmatmul.mubr.bf16.gmra.mrb[0].mxu0 %v459
          %v867 = vpop.f32.mrb[0].mxu0
          %v868 = vadd.f32 %v771, %v867
          %v869 = vpop.f32.mrb[0].mxu0
          %v870 = vpop.f32.mrb[0].mxu0
          %v871 = vadd.f32 %v774, %v870
          %v872 = vpop.f32.mrb[0].mxu0
          %873 = vmatprep.mubr.bf16.mxu0 0
          %874 = vmatmul.mubr.bf16.gmra.mrb[0].mxu0 %v460
          %v875 = vpop.f32.mrb[0].mxu0
          %v876 = vadd.f32 %v779, %v875
          %v877 = vpop.f32.mrb[0].mxu0
          %v878 = vpop.f32.mrb[0].mxu0
          %v879 = vadd.f32 %v782, %v878
          %v880 = vpop.f32.mrb[0].mxu0
          %881 = vmatprep.mubr.bf16.mxu0 0
          %882 = vmatmul.mubr.bf16.gmra.mrb[0].mxu0 %v461
          %v883 = vpop.f32.mrb[0].mxu0
          %v884 = vadd.f32 %v787, %v883
          %v885 = vpop.f32.mrb[0].mxu0
          %v886 = vpop.f32.mrb[0].mxu0
          %v887 = vadd.f32 %v790, %v886
          %v888 = vpop.f32.mrb[0].mxu0
          %889 = vmatprep.mubr.bf16.mxu0 0
          %890 = vmatmul.mubr.bf16.gmra.mrb[0].mxu0 %v462
          %v891 = vpop.f32.mrb[0].mxu0
          %v892 = vadd.f32 %v795, %v891
          %v893 = vpop.f32.mrb[0].mxu0
          %v894 = vpop.f32.mrb[0].mxu0
          %v895 = vadd.f32 %v798, %v894
          %v896 = vpop.f32.mrb[0].mxu0
          %897 = vmatprep.mubr.bf16.mxu0 0
          %898 = vmatmul.mubr.bf16.gmra.mrb[0].mxu0 %v463
          %v899 = vpop.f32.mrb[0].mxu0
          %v900 = vadd.f32 %v803, %v899
          %v901 = vpop.f32.mrb[0].mxu0
          %v902 = vpop.f32.mrb[0].mxu0
          %v903 = vadd.f32 %v806, %v902
          %v904 = vpop.f32.mrb[0].mxu0
          %905 = vmatprep.mubr.bf16.mxu0 0
          %906 = vmatmul.mubr.bf16.gmra.mrb[0].mxu0 %v526
          %v907 = vpop.f32.mrb[0].mxu0
          %v908 = vadd.f32 %v811, %v907
          %v909 = vpop.f32.mrb[0].mxu0
          %v910 = vpop.f32.mrb[0].mxu0
          %v911 = vadd.f32 %v814, %v910
          %v912 = vpop.f32.mrb[0].mxu0
          %913 = vdwg.mxu0
          %v962 = vunpack.c.l.b16 %v464
          %v963 = vunpack.c.l.b16 %v465
          %v964 = vunpack.c.l.b16 %v466
          %v965 = vunpack.c.l.b16 %v467
          %v966 = vunpack.c.l.b16 %v468
          %v967 = vunpack.c.l.b16 %v469
          %v968 = vunpack.c.l.b16 %v470
          %v969 = vunpack.c.l.b16 %v471
          %v970 = vunpack.c.l.b16 %v472
          %v971 = vunpack.c.l.b16 %v473
          %v972 = vunpack.c.l.b16 %v474
          %v973 = vunpack.c.l.b16 %v475
          %v974 = vunpack.c.l.b16 %v476
          %v975 = vunpack.c.l.b16 %v477
          %v976 = vunpack.c.l.b16 %v478
          %v977 = vunpack.c.l.b16 %v479
          %v978 = vunpack.c.l.b16 %v480
          %v979 = vunpack.c.l.b16 %v481
          %v980 = vunpack.c.l.b16 %v482
          %v981 = vunpack.c.l.b16 %v483
          %v982 = vunpack.c.l.b16 %v484
          %v983 = vunpack.c.l.b16 %v485
          %v984 = vunpack.c.l.b16 %v486
          %v985 = vunpack.c.l.b16 %v487
          %v986 = vunpack.c.l.b16 %v488
          %v987 = vunpack.c.l.b16 %v489
          %v988 = vunpack.c.l.b16 %v490
          %v989 = vunpack.c.l.b16 %v491
          %v990 = vunpack.c.l.b16 %v492
          %v991 = vunpack.c.l.b16 %v493
          %v992 = vunpack.c.l.b16 %v494
          %v993 = vunpack.c.l.b16 %v495
          %v994 = vunpack.c.l.b16 %v496
          %v995 = vunpack.c.l.b16 %v497
          %v996 = vunpack.c.l.b16 %v498
          %v997 = vunpack.c.l.b16 %v499
          %v998 = vunpack.c.l.b16 %v500
          %v999 = vunpack.c.l.b16 %v501
          %v1000 = vunpack.c.l.b16 %v502
          %v1001 = vunpack.c.l.b16 %v503
          %v1002 = vunpack.c.l.b16 %v504
          %v1003 = vunpack.c.l.b16 %v505
          %v1004 = vunpack.c.l.b16 %v506
          %v1005 = vunpack.c.l.b16 %v507
          %v1006 = vunpack.c.l.b16 %v508
          %v1007 = vunpack.c.l.b16 %v509
          %v1008 = vunpack.c.l.b16 %v510
          %v1009 = vunpack.c.l.b16 %v511
          %v1010 = vpack.c.b16 %v963, %v962
          %v1011 = vpack.c.b16 %v965, %v964
          %v1012 = vpack.c.b16 %v967, %v966
          %v1013 = vpack.c.b16 %v969, %v968
          %v1014 = vpack.c.b16 %v971, %v970
          %v1015 = vpack.c.b16 %v973, %v972
          %v1016 = vpack.c.b16 %v975, %v974
          %v1017 = vpack.c.b16 %v977, %v976
          %v1018 = vpack.c.b16 %v979, %v978
          %v1019 = vpack.c.b16 %v981, %v980
          %v1020 = vpack.c.b16 %v983, %v982
          %v1021 = vpack.c.b16 %v985, %v984
          %v1022 = vpack.c.b16 %v987, %v986
          %v1023 = vpack.c.b16 %v989, %v988
          %v1024 = vpack.c.b16 %v991, %v990
          %v1025 = vpack.c.b16 %v993, %v992
          %v1026 = vpack.c.b16 %v995, %v994
          %v1027 = vpack.c.b16 %v997, %v996
          %v1028 = vpack.c.b16 %v999, %v998
          %v1029 = vpack.c.b16 %v1001, %v1000
          %v1030 = vpack.c.b16 %v1003, %v1002
          %v1031 = vpack.c.b16 %v1005, %v1004
          %v1032 = vpack.c.b16 %v1007, %v1006
          %v1033 = vpack.c.b16 %v1009, %v1008
          %1058 = vmatprep.subr.bf16.mxu0 0
          %1059 = vmatpush1.bf16.msra.mxu0 %v1010
          %1060 = vmatprep.subr.bf16.mxu0 0
          %1061 = vmatpush1.bf16.msra.mxu0 %v1011
          %1062 = vmatprep.subr.bf16.mxu0 0
          %1063 = vmatpush1.bf16.msra.mxu0 %v1012
          %1064 = vmatprep.subr.bf16.mxu0 0
          %1065 = vmatpush1.bf16.msra.mxu0 %v1013
          %1066 = vmatprep.subr.bf16.mxu0 0
          %1067 = vmatpush1.bf16.msra.mxu0 %v1014
          %1068 = vmatprep.subr.bf16.mxu0 0
          %1069 = vmatpush1.bf16.msra.mxu0 %v1015
          %1070 = vmatprep.subr.bf16.mxu0 0
          %1071 = vmatpush1.bf16.msra.mxu0 %v1016
          %1072 = vmatprep.subr.bf16.mxu0 0
          %1073 = vmatpush1.bf16.msra.mxu0 %v1017
          %1074 = vmatprep.subr.bf16.mxu0 0
          %1075 = vmatpush1.bf16.msra.mxu0 %v1018
          %1076 = vmatprep.subr.bf16.mxu0 0
          %1077 = vmatpush1.bf16.msra.mxu0 %v1019
          %1078 = vmatprep.subr.bf16.mxu0 0
          %1079 = vmatpush1.bf16.msra.mxu0 %v1020
          %1080 = vmatprep.subr.bf16.mxu0 0
          %1081 = vmatpush1.bf16.msra.mxu0 %v1021
          %1082 = vmatprep.subr.bf16.mxu0 0
          %1083 = vmatpush1.bf16.msra.mxu0 %v1022
          %1084 = vmatprep.subr.bf16.mxu0 0
          %1085 = vmatpush1.bf16.msra.mxu0 %v1023
          %1086 = vmatprep.subr.bf16.mxu0 0
          %1087 = vmatpush1.bf16.msra.mxu0 %v1024
          %1088 = vmatprep.subr.bf16.mxu0 0
          %1089 = vmatpush1.bf16.msra.mxu0 %v1025
          %1090 = vmatprep.mubr.bf16.mxu0 %v328
          %1091 = vmatmul.mubr.bf16.gmra.mrb[0].mxu0 %v413
          %v1092 = vpop.f32.mrb[0].mxu0
          %v1093 = vadd.f32 %v852, %v1092
          %v1094 = vpop.f32.mrb[0].mxu0
          %v1095 = vpop.f32.mrb[0].mxu0
          %v1096 = vadd.f32 %v855, %v1095
          %v1097 = vpop.f32.mrb[0].mxu0
          %1098 = vmatprep.mubr.bf16.mxu0 %v329
          %1099 = vmatmul.mubr.bf16.gmra.mrb[0].mxu0 %v414
          %v1100 = vpop.f32.mrb[0].mxu0
          %v1101 = vadd.f32 %v860, %v1100
          %v1102 = vpop.f32.mrb[0].mxu0
          %v1103 = vpop.f32.mrb[0].mxu0
          %v1104 = vadd.f32 %v863, %v1103
          %v1105 = vpop.f32.mrb[0].mxu0
          %1106 = vmatprep.mubr.bf16.mxu0 %v330
          %1107 = vmatmul.mubr.bf16.gmra.mrb[0].mxu0 %v415
          %v1108 = vpop.f32.mrb[0].mxu0
          %v1109 = vadd.f32 %v868, %v1108
          %v1110 = vpop.f32.mrb[0].mxu0
          %v1111 = vpop.f32.mrb[0].mxu0
          %v1112 = vadd.f32 %v871, %v1111
          %v1113 = vpop.f32.mrb[0].mxu0
          %1114 = vmatprep.mubr.bf16.mxu0 %v331
          %1115 = vmatmul.mubr.bf16.gmra.mrb[0].mxu0 %v416
          %v1116 = vpop.f32.mrb[0].mxu0
          %v1117 = vadd.f32 %v876, %v1116
          %v1118 = vpop.f32.mrb[0].mxu0
          %v1119 = vpop.f32.mrb[0].mxu0
          %v1120 = vadd.f32 %v879, %v1119
          %v1121 = vpop.f32.mrb[0].mxu0
          %1122 = vmatprep.mubr.bf16.mxu0 %v332
          %1123 = vmatmul.mubr.bf16.gmra.mrb[0].mxu0 %v417
          %v1124 = vpop.f32.mrb[0].mxu0
          %v1125 = vadd.f32 %v884, %v1124
          %v1126 = vpop.f32.mrb[0].mxu0
          %v1127 = vpop.f32.mrb[0].mxu0
          %v1128 = vadd.f32 %v887, %v1127
          %v1129 = vpop.f32.mrb[0].mxu0
          %1130 = vmatprep.mubr.bf16.mxu0 %v333
          %1131 = vmatmul.mubr.bf16.gmra.mrb[0].mxu0 %v418
          %v1132 = vpop.f32.mrb[0].mxu0
          %v1133 = vadd.f32 %v892, %v1132
          %v1134 = vpop.f32.mrb[0].mxu0
          %v1135 = vpop.f32.mrb[0].mxu0
          %v1136 = vadd.f32 %v895, %v1135
          %v1137 = vpop.f32.mrb[0].mxu0
          %1138 = vmatprep.mubr.bf16.mxu0 %v334
          %1139 = vmatmul.mubr.bf16.gmra.mrb[0].mxu0 %v419
          %v1140 = vpop.f32.mrb[0].mxu0
          %v1141 = vadd.f32 %v900, %v1140
          %v1142 = vpop.f32.mrb[0].mxu0
          %v1143 = vpop.f32.mrb[0].mxu0
          %v1144 = vadd.f32 %v903, %v1143
          %v1145 = vpop.f32.mrb[0].mxu0
          %1146 = vmatprep.mubr.bf16.mxu0 %v335
          %1147 = vmatmul.mubr.bf16.gmra.mrb[0].mxu0 %v420
          %v1148 = vpop.f32.mrb[0].mxu0
          %v1149 = vadd.f32 %v908, %v1148
          %v1150 = vpop.f32.mrb[0].mxu0
          %v1151 = vpop.f32.mrb[0].mxu0
          %v1152 = vadd.f32 %v911, %v1151
          %v1153 = vpop.f32.mrb[0].mxu0
          %1154 = vdwg.mxu0
          %1155 = vmatprep.subr.bf16.mxu0 0
          %1156 = vmatpush1.bf16.msra.mxu0 %v1026
          %1157 = vmatprep.subr.bf16.mxu0 0
          %1158 = vmatpush1.bf16.msra.mxu0 %v1027
          %1159 = vmatprep.subr.bf16.mxu0 0
          %1160 = vmatpush1.bf16.msra.mxu0 %v1028
          %1161 = vmatprep.subr.bf16.mxu0 0
          %1162 = vmatpush1.bf16.msra.mxu0 %v1029
          %1163 = vmatprep.subr.bf16.mxu0 0
          %1164 = vmatpush1.bf16.msra.mxu0 %v1030
          %1165 = vmatprep.subr.bf16.mxu0 0
          %1166 = vmatpush1.bf16.msra.mxu0 %v1031
          %1167 = vmatprep.subr.bf16.mxu0 0
          %1168 = vmatpush1.bf16.msra.mxu0 %v1032
          %1169 = vmatprep.subr.bf16.mxu0 0
          %1170 = vmatpush1.bf16.msra.mxu0 %v1033
          %1171 = vmatprep.subr.bf16.mxu0 0
          %1172 = vmatpush1.bf16.msra.mxu0 0
          %1173 = vmatprep.subr.bf16.mxu0 0
          %1174 = vmatpush1.bf16.msra.mxu0 0
          %1175 = vmatprep.subr.bf16.mxu0 0
          %1176 = vmatpush1.bf16.msra.mxu0 0
          %1177 = vmatprep.subr.bf16.mxu0 0
          %1178 = vmatpush1.bf16.msra.mxu0 0
          %1179 = vmatprep.subr.bf16.mxu0 0
          %1180 = vmatpush1.bf16.msra.mxu0 0
          %1181 = vmatprep.subr.bf16.mxu0 0
          %1182 = vmatpush1.bf16.msra.mxu0 0
          %1183 = vmatprep.subr.bf16.mxu0 0
          %1184 = vmatpush1.bf16.msra.mxu0 0
          %1185 = vmatprep.subr.bf16.mxu0 0
          %1186 = vmatpush1.bf16.msra.mxu0 0
          %1187 = vmatprep.mubr.bf16.mxu0 0
          %1188 = vmatmul.mubr.bf16.gmra.mrb[0].mxu0 %v456
          %v1189 = vpop.f32.mrb[0].mxu0
          %v1190 = vadd.f32 %v1093, %v1189
          %v1191 = vpop.f32.mrb[0].mxu0
          %v1192 = vpop.f32.mrb[0].mxu0
          %v1193 = vadd.f32 %v1096, %v1192
          %v1194 = vpop.f32.mrb[0].mxu0
          %1195 = vmatprep.mubr.bf16.mxu0 0
          %1196 = vmatmul.mubr.bf16.gmra.mrb[0].mxu0 %v457
          %v1197 = vpop.f32.mrb[0].mxu0
          %v1198 = vadd.f32 %v1101, %v1197
          %v1199 = vpop.f32.mrb[0].mxu0
          %v1200 = vpop.f32.mrb[0].mxu0
          %v1201 = vadd.f32 %v1104, %v1200
          %v1202 = vpop.f32.mrb[0].mxu0
          %1203 = vmatprep.mubr.bf16.mxu0 0
          %1204 = vmatmul.mubr.bf16.gmra.mrb[0].mxu0 %v458
          %v1205 = vpop.f32.mrb[0].mxu0
          %v1206 = vadd.f32 %v1109, %v1205
          %v1207 = vpop.f32.mrb[0].mxu0
          %v1208 = vpop.f32.mrb[0].mxu0
          %v1209 = vadd.f32 %v1112, %v1208
          %v1210 = vpop.f32.mrb[0].mxu0
          %1211 = vmatprep.mubr.bf16.mxu0 0
          %1212 = vmatmul.mubr.bf16.gmra.mrb[0].mxu0 %v459
          %v1213 = vpop.f32.mrb[0].mxu0
          %v1214 = vadd.f32 %v1117, %v1213
          %v1215 = vpop.f32.mrb[0].mxu0
          %v1216 = vpop.f32.mrb[0].mxu0
          %v1217 = vadd.f32 %v1120, %v1216
          %v1218 = vpop.f32.mrb[0].mxu0
          %1219 = vmatprep.mubr.bf16.mxu0 0
          %1220 = vmatmul.mubr.bf16.gmra.mrb[0].mxu0 %v460
          %v1221 = vpop.f32.mrb[0].mxu0
          %v1222 = vadd.f32 %v1125, %v1221
          %v1223 = vpop.f32.mrb[0].mxu0
          %v1224 = vpop.f32.mrb[0].mxu0
          %v1225 = vadd.f32 %v1128, %v1224
          %v1226 = vpop.f32.mrb[0].mxu0
          %1227 = vmatprep.mubr.bf16.mxu0 0
          %1228 = vmatmul.mubr.bf16.gmra.mrb[0].mxu0 %v461
          %v1229 = vpop.f32.mrb[0].mxu0
          %v1230 = vadd.f32 %v1133, %v1229
          %v1231 = vpop.f32.mrb[0].mxu0
          %v1232 = vpop.f32.mrb[0].mxu0
          %v1233 = vadd.f32 %v1136, %v1232
          %v1234 = vpop.f32.mrb[0].mxu0
          %1235 = vmatprep.mubr.bf16.mxu0 0
          %1236 = vmatmul.mubr.bf16.gmra.mrb[0].mxu0 %v462
          %v1237 = vpop.f32.mrb[0].mxu0
          %v1238 = vadd.f32 %v1141, %v1237
          %v1239 = vpop.f32.mrb[0].mxu0
          %v1240 = vpop.f32.mrb[0].mxu0
          %v1241 = vadd.f32 %v1144, %v1240
          %v1242 = vpop.f32.mrb[0].mxu0
          %1243 = vmatprep.mubr.bf16.mxu0 0
          %1244 = vmatmul.mubr.bf16.gmra.mrb[0].mxu0 %v463
          %v1245 = vpop.f32.mrb[0].mxu0
          %v1246 = vadd.f32 %v1149, %v1245
          %v1247 = vpop.f32.mrb[0].mxu0
          %v1248 = vpop.f32.mrb[0].mxu0
          %v1249 = vadd.f32 %v1152, %v1248
          %v1250 = vpop.f32.mrb[0].mxu0
          %1251 = vdwg.mxu0
          %v1253 = vshrl.u32 %v337, 16
          %v1256 = vrot.slane %v1253, 7
          %v1257 = vshll.u32 %v337, 16
          %v1259 = vor.u32 %v1256, %v1257
          %v1261 = vsel %vm412, %v1253, %v1259
          %v1262 = vrot.slane %v1257, 1
          %v1263 = vor.u32 %v1253, %v1262
          %v1266 = vsel %vm455, %v1263, %v1257
          %s1267 = scalar_lea.vmem [#allocation10], 384
          %v1268 = vld [vmem:[%s1267] sm:$0xf]
          %v1269 = vld [vmem:[%s1267 + $0x4] sm:$0xf]
          %v1270 = vld [vmem:[%s1267 + $0x8] sm:$0xf]
          %v1271 = vld [vmem:[%s1267 + $0xc] sm:$0xf]
          %v1272 = vld [vmem:[%s1267 + $0x10] sm:$0xf]
          %v1273 = vld [vmem:[%s1267 + $0x14] sm:$0xf]
          %v1274 = vld [vmem:[%s1267 + $0x18] sm:$0xf]
          %v1275 = vld [vmem:[%s1267 + $0x1c] sm:$0xf]
          %v1276 = vld [vmem:[%s1267 + $0x20] sm:$0xf]
          %v1277 = vld [vmem:[%s1267 + $0x24] sm:$0xf]
          %v1278 = vld [vmem:[%s1267 + $0x28] sm:$0xf]
          %v1279 = vld [vmem:[%s1267 + $0x2c] sm:$0xf]
          %v1280 = vld [vmem:[%s1267 + $0x30] sm:$0xf]
          %v1281 = vld [vmem:[%s1267 + $0x34] sm:$0xf]
          %v1282 = vld [vmem:[%s1267 + $0x38] sm:$0xf]
          %v1283 = vld [vmem:[%s1267 + $0x3c] sm:$0xf]
          %v1284 = vld [vmem:[%s1267 + $0x40] sm:$0xf]
          %v1285 = vld [vmem:[%s1267 + $0x44] sm:$0xf]
          %v1286 = vld [vmem:[%s1267 + $0x48] sm:$0xf]
          %v1287 = vld [vmem:[%s1267 + $0x4c] sm:$0xf]
          %v1288 = vld [vmem:[%s1267 + $0x50] sm:$0xf]
          %v1289 = vld [vmem:[%s1267 + $0x54] sm:$0xf]
          %v1290 = vld [vmem:[%s1267 + $0x58] sm:$0xf]
          %v1291 = vld [vmem:[%s1267 + $0x5c] sm:$0xf]
          %v1292 = vld [vmem:[%s1267 + $0x60] sm:$0xf]
          %v1293 = vld [vmem:[%s1267 + $0x64] sm:$0xf]
          %v1294 = vld [vmem:[%s1267 + $0x68] sm:$0xf]
          %v1295 = vld [vmem:[%s1267 + $0x6c] sm:$0xf]
          %v1296 = vld [vmem:[%s1267 + $0x70] sm:$0xf]
          %v1297 = vld [vmem:[%s1267 + $0x74] sm:$0xf]
          %v1298 = vld [vmem:[%s1267 + $0x78] sm:$0xf]
          %v1299 = vld [vmem:[%s1267 + $0x7c] sm:$0xf]
          %v1300 = vld [vmem:[%s1267 + $0x80] sm:$0xf]
          %v1301 = vld [vmem:[%s1267 + $0x84] sm:$0xf]
          %v1302 = vld [vmem:[%s1267 + $0x88] sm:$0xf]
          %v1303 = vld [vmem:[%s1267 + $0x8c] sm:$0xf]
          %v1304 = vld [vmem:[%s1267 + $0x90] sm:$0xf]
          %v1305 = vld [vmem:[%s1267 + $0x94] sm:$0xf]
          %v1306 = vld [vmem:[%s1267 + $0x98] sm:$0xf]
          %v1307 = vld [vmem:[%s1267 + $0x9c] sm:$0xf]
          %v1308 = vld [vmem:[%s1267 + $0xa0] sm:$0xf]
          %v1309 = vld [vmem:[%s1267 + $0xa4] sm:$0xf]
          %v1310 = vld [vmem:[%s1267 + $0xa8] sm:$0xf]
          %v1311 = vld [vmem:[%s1267 + $0xac] sm:$0xf]
          %v1312 = vld [vmem:[%s1267 + $0xb0] sm:$0xf]
          %v1313 = vld [vmem:[%s1267 + $0xb4] sm:$0xf]
          %v1314 = vld [vmem:[%s1267 + $0xb8] sm:$0xf]
          %v1315 = vld [vmem:[%s1267 + $0xbc] sm:$0xf]
          %v1364 = vunpack.c.l.b16 %v1268
          %v1365 = vunpack.c.l.b16 %v1269
          %v1366 = vunpack.c.l.b16 %v1270
          %v1367 = vunpack.c.l.b16 %v1271
          %v1368 = vunpack.c.l.b16 %v1272
          %v1369 = vunpack.c.l.b16 %v1273
          %v1370 = vunpack.c.l.b16 %v1274
          %v1371 = vunpack.c.l.b16 %v1275
          %v1372 = vunpack.c.l.b16 %v1276
          %v1373 = vunpack.c.l.b16 %v1277
          %v1374 = vunpack.c.l.b16 %v1278
          %v1375 = vunpack.c.l.b16 %v1279
          %v1376 = vunpack.c.l.b16 %v1280
          %v1377 = vunpack.c.l.b16 %v1281
          %v1378 = vunpack.c.l.b16 %v1282
          %v1379 = vunpack.c.l.b16 %v1283
          %v1380 = vunpack.c.l.b16 %v1284
          %v1381 = vunpack.c.l.b16 %v1285
          %v1382 = vunpack.c.l.b16 %v1286
          %v1383 = vunpack.c.l.b16 %v1287
          %v1384 = vunpack.c.l.b16 %v1288
          %v1385 = vunpack.c.l.b16 %v1289
          %v1386 = vunpack.c.l.b16 %v1290
          %v1387 = vunpack.c.l.b16 %v1291
          %v1388 = vunpack.c.l.b16 %v1292
          %v1389 = vunpack.c.l.b16 %v1293
          %v1390 = vunpack.c.l.b16 %v1294
          %v1391 = vunpack.c.l.b16 %v1295
          %v1392 = vunpack.c.l.b16 %v1296
          %v1393 = vunpack.c.l.b16 %v1297
          %v1394 = vunpack.c.l.b16 %v1298
          %v1395 = vunpack.c.l.b16 %v1299
          %v1396 = vunpack.c.l.b16 %v1300
          %v1397 = vunpack.c.l.b16 %v1301
          %v1398 = vunpack.c.l.b16 %v1302
          %v1399 = vunpack.c.l.b16 %v1303
          %v1400 = vunpack.c.l.b16 %v1304
          %v1401 = vunpack.c.l.b16 %v1305
          %v1402 = vunpack.c.l.b16 %v1306
          %v1403 = vunpack.c.l.b16 %v1307
          %v1404 = vunpack.c.l.b16 %v1308
          %v1405 = vunpack.c.l.b16 %v1309
          %v1406 = vunpack.c.l.b16 %v1310
          %v1407 = vunpack.c.l.b16 %v1311
          %v1408 = vunpack.c.l.b16 %v1312
          %v1409 = vunpack.c.l.b16 %v1313
          %v1410 = vunpack.c.l.b16 %v1314
          %v1411 = vunpack.c.l.b16 %v1315
          %v1412 = vpack.c.b16 %v1365, %v1364
          %v1413 = vpack.c.b16 %v1367, %v1366
          %v1414 = vpack.c.b16 %v1369, %v1368
          %v1415 = vpack.c.b16 %v1371, %v1370
          %v1416 = vpack.c.b16 %v1373, %v1372
          %v1417 = vpack.c.b16 %v1375, %v1374
          %v1418 = vpack.c.b16 %v1377, %v1376
          %v1419 = vpack.c.b16 %v1379, %v1378
          %v1420 = vpack.c.b16 %v1381, %v1380
          %v1421 = vpack.c.b16 %v1383, %v1382
          %v1422 = vpack.c.b16 %v1385, %v1384
          %v1423 = vpack.c.b16 %v1387, %v1386
          %v1424 = vpack.c.b16 %v1389, %v1388
          %v1425 = vpack.c.b16 %v1391, %v1390
          %v1426 = vpack.c.b16 %v1393, %v1392
          %v1427 = vpack.c.b16 %v1395, %v1394
          %v1428 = vpack.c.b16 %v1397, %v1396
          %v1429 = vpack.c.b16 %v1399, %v1398
          %v1430 = vpack.c.b16 %v1401, %v1400
          %v1431 = vpack.c.b16 %v1403, %v1402
          %v1432 = vpack.c.b16 %v1405, %v1404
          %v1433 = vpack.c.b16 %v1407, %v1406
          %v1434 = vpack.c.b16 %v1409, %v1408
          %v1435 = vpack.c.b16 %v1411, %v1410
          %1460 = vmatprep.subr.bf16.mxu0 0
          %1461 = vmatpush1.bf16.msra.mxu0 %v1412
          %1462 = vmatprep.subr.bf16.mxu0 0
          %1463 = vmatpush1.bf16.msra.mxu0 %v1413
          %1464 = vmatprep.subr.bf16.mxu0 0
          %1465 = vmatpush1.bf16.msra.mxu0 %v1414
          %1466 = vmatprep.subr.bf16.mxu0 0
          %1467 = vmatpush1.bf16.msra.mxu0 %v1415
          %1468 = vmatprep.subr.bf16.mxu0 0
          %1469 = vmatpush1.bf16.msra.mxu0 %v1416
          %1470 = vmatprep.subr.bf16.mxu0 0
          %1471 = vmatpush1.bf16.msra.mxu0 %v1417
          %1472 = vmatprep.subr.bf16.mxu0 0
          %1473 = vmatpush1.bf16.msra.mxu0 %v1418
          %1474 = vmatprep.subr.bf16.mxu0 0
          %1475 = vmatpush1.bf16.msra.mxu0 %v1419
          %1476 = vmatprep.subr.bf16.mxu0 0
          %1477 = vmatpush1.bf16.msra.mxu0 %v1420
          %1478 = vmatprep.subr.bf16.mxu0 0
          %1479 = vmatpush1.bf16.msra.mxu0 %v1421
          %1480 = vmatprep.subr.bf16.mxu0 0
          %1481 = vmatpush1.bf16.msra.mxu0 %v1422
          %1482 = vmatprep.subr.bf16.mxu0 0
          %1483 = vmatpush1.bf16.msra.mxu0 %v1423
          %1484 = vmatprep.subr.bf16.mxu0 0
          %1485 = vmatpush1.bf16.msra.mxu0 %v1424
          %1486 = vmatprep.subr.bf16.mxu0 0
          %1487 = vmatpush1.bf16.msra.mxu0 %v1425
          %1488 = vmatprep.subr.bf16.mxu0 0
          %1489 = vmatpush1.bf16.msra.mxu0 %v1426
          %1490 = vmatprep.subr.bf16.mxu0 0
          %1491 = vmatpush1.bf16.msra.mxu0 %v1427
          %1492 = vmatprep.mubr.bf16.mxu0 %v330
          %1493 = vmatmul.mubr.bf16.gmra.mrb[0].mxu0 %v415
          %v1494 = vpop.f32.mrb[0].mxu0
          %v1495 = vadd.f32 0.0, %v1494
          %v1496 = vpop.f32.mrb[0].mxu0
          %v1497 = vpop.f32.mrb[0].mxu0
          %v1498 = vadd.f32 0.0, %v1497
          %v1499 = vpop.f32.mrb[0].mxu0
          %1500 = vmatprep.mubr.bf16.mxu0 %v331
          %1501 = vmatmul.mubr.bf16.gmra.mrb[0].mxu0 %v416
          %v1502 = vpop.f32.mrb[0].mxu0
          %v1503 = vadd.f32 0.0, %v1502
          %v1504 = vpop.f32.mrb[0].mxu0
          %v1505 = vpop.f32.mrb[0].mxu0
          %v1506 = vadd.f32 0.0, %v1505
          %v1507 = vpop.f32.mrb[0].mxu0
          %1508 = vmatprep.mubr.bf16.mxu0 %v332
          %1509 = vmatmul.mubr.bf16.gmra.mrb[0].mxu0 %v417
          %v1510 = vpop.f32.mrb[0].mxu0
          %v1511 = vadd.f32 0.0, %v1510
          %v1512 = vpop.f32.mrb[0].mxu0
          %v1513 = vpop.f32.mrb[0].mxu0
          %v1514 = vadd.f32 0.0, %v1513
          %v1515 = vpop.f32.mrb[0].mxu0
          %1516 = vmatprep.mubr.bf16.mxu0 %v333
          %1517 = vmatmul.mubr.bf16.gmra.mrb[0].mxu0 %v418
          %v1518 = vpop.f32.mrb[0].mxu0
          %v1519 = vadd.f32 0.0, %v1518
          %v1520 = vpop.f32.mrb[0].mxu0
          %v1521 = vpop.f32.mrb[0].mxu0
          %v1522 = vadd.f32 0.0, %v1521
          %v1523 = vpop.f32.mrb[0].mxu0
          %1524 = vmatprep.mubr.bf16.mxu0 %v334
          %1525 = vmatmul.mubr.bf16.gmra.mrb[0].mxu0 %v419
          %v1526 = vpop.f32.mrb[0].mxu0
          %v1527 = vadd.f32 0.0, %v1526
          %v1528 = vpop.f32.mrb[0].mxu0
          %v1529 = vpop.f32.mrb[0].mxu0
          %v1530 = vadd.f32 0.0, %v1529
          %v1531 = vpop.f32.mrb[0].mxu0
          %1532 = vmatprep.mubr.bf16.mxu0 %v335
          %1533 = vmatmul.mubr.bf16.gmra.mrb[0].mxu0 %v420
          %v1534 = vpop.f32.mrb[0].mxu0
          %v1535 = vadd.f32 0.0, %v1534
          %v1536 = vpop.f32.mrb[0].mxu0
          %v1537 = vpop.f32.mrb[0].mxu0
          %v1538 = vadd.f32 0.0, %v1537
          %v1539 = vpop.f32.mrb[0].mxu0
          %1540 = vmatprep.mubr.bf16.mxu0 %v336
          %1541 = vmatmul.mubr.bf16.gmra.mrb[0].mxu0 %v521
          %v1542 = vpop.f32.mrb[0].mxu0
          %v1543 = vadd.f32 0.0, %v1542
          %v1544 = vpop.f32.mrb[0].mxu0
          %v1545 = vpop.f32.mrb[0].mxu0
          %v1546 = vadd.f32 0.0, %v1545
          %v1547 = vpop.f32.mrb[0].mxu0
          %1548 = vmatprep.mubr.bf16.mxu0 %v337
          %1549 = vmatmul.mubr.bf16.gmra.mrb[0].mxu0 %v1261
          %v1550 = vpop.f32.mrb[0].mxu0
          %v1551 = vadd.f32 0.0, %v1550
          %v1552 = vpop.f32.mrb[0].mxu0
          %v1553 = vpop.f32.mrb[0].mxu0
          %v1554 = vadd.f32 0.0, %v1553
          %v1555 = vpop.f32.mrb[0].mxu0
          %1556 = vdwg.mxu0
          %1557 = vmatprep.subr.bf16.mxu0 0
          %1558 = vmatpush1.bf16.msra.mxu0 %v1428
          %1559 = vmatprep.subr.bf16.mxu0 0
          %1560 = vmatpush1.bf16.msra.mxu0 %v1429
          %1561 = vmatprep.subr.bf16.mxu0 0
          %1562 = vmatpush1.bf16.msra.mxu0 %v1430
          %1563 = vmatprep.subr.bf16.mxu0 0
          %1564 = vmatpush1.bf16.msra.mxu0 %v1431
          %1565 = vmatprep.subr.bf16.mxu0 0
          %1566 = vmatpush1.bf16.msra.mxu0 %v1432
          %1567 = vmatprep.subr.bf16.mxu0 0
          %1568 = vmatpush1.bf16.msra.mxu0 %v1433
          %1569 = vmatprep.subr.bf16.mxu0 0
          %1570 = vmatpush1.bf16.msra.mxu0 %v1434
          %1571 = vmatprep.subr.bf16.mxu0 0
          %1572 = vmatpush1.bf16.msra.mxu0 %v1435
          %1573 = vmatprep.subr.bf16.mxu0 0
          %1574 = vmatpush1.bf16.msra.mxu0 0
          %1575 = vmatprep.subr.bf16.mxu0 0
          %1576 = vmatpush1.bf16.msra.mxu0 0
          %1577 = vmatprep.subr.bf16.mxu0 0
          %1578 = vmatpush1.bf16.msra.mxu0 0
          %1579 = vmatprep.subr.bf16.mxu0 0
          %1580 = vmatpush1.bf16.msra.mxu0 0
          %1581 = vmatprep.subr.bf16.mxu0 0
          %1582 = vmatpush1.bf16.msra.mxu0 0
          %1583 = vmatprep.subr.bf16.mxu0 0
          %1584 = vmatpush1.bf16.msra.mxu0 0
          %1585 = vmatprep.subr.bf16.mxu0 0
          %1586 = vmatpush1.bf16.msra.mxu0 0
          %1587 = vmatprep.subr.bf16.mxu0 0
          %1588 = vmatpush1.bf16.msra.mxu0 0
          %1589 = vmatprep.mubr.bf16.mxu0 0
          %1590 = vmatmul.mubr.bf16.gmra.mrb[0].mxu0 %v458
          %v1591 = vpop.f32.mrb[0].mxu0
          %v1592 = vadd.f32 %v1495, %v1591
          %v1593 = vpop.f32.mrb[0].mxu0
          %v1594 = vpop.f32.mrb[0].mxu0
          %v1595 = vadd.f32 %v1498, %v1594
          %v1596 = vpop.f32.mrb[0].mxu0
          %1597 = vmatprep.mubr.bf16.mxu0 0
          %1598 = vmatmul.mubr.bf16.gmra.mrb[0].mxu0 %v459
          %v1599 = vpop.f32.mrb[0].mxu0
          %v1600 = vadd.f32 %v1503, %v1599
          %v1601 = vpop.f32.mrb[0].mxu0
          %v1602 = vpop.f32.mrb[0].mxu0
          %v1603 = vadd.f32 %v1506, %v1602
          %v1604 = vpop.f32.mrb[0].mxu0
          %1605 = vmatprep.mubr.bf16.mxu0 0
          %1606 = vmatmul.mubr.bf16.gmra.mrb[0].mxu0 %v460
          %v1607 = vpop.f32.mrb[0].mxu0
          %v1608 = vadd.f32 %v1511, %v1607
          %v1609 = vpop.f32.mrb[0].mxu0
          %v1610 = vpop.f32.mrb[0].mxu0
          %v1611 = vadd.f32 %v1514, %v1610
          %v1612 = vpop.f32.mrb[0].mxu0
          %1613 = vmatprep.mubr.bf16.mxu0 0
          %1614 = vmatmul.mubr.bf16.gmra.mrb[0].mxu0 %v461
          %v1615 = vpop.f32.mrb[0].mxu0
          %v1616 = vadd.f32 %v1519, %v1615
          %v1617 = vpop.f32.mrb[0].mxu0
          %v1618 = vpop.f32.mrb[0].mxu0
          %v1619 = vadd.f32 %v1522, %v1618
          %v1620 = vpop.f32.mrb[0].mxu0
          %1621 = vmatprep.mubr.bf16.mxu0 0
          %1622 = vmatmul.mubr.bf16.gmra.mrb[0].mxu0 %v462
          %v1623 = vpop.f32.mrb[0].mxu0
          %v1624 = vadd.f32 %v1527, %v1623
          %v1625 = vpop.f32.mrb[0].mxu0
          %v1626 = vpop.f32.mrb[0].mxu0
          %v1627 = vadd.f32 %v1530, %v1626
          %v1628 = vpop.f32.mrb[0].mxu0
          %1629 = vmatprep.mubr.bf16.mxu0 0
          %1630 = vmatmul.mubr.bf16.gmra.mrb[0].mxu0 %v463
          %v1631 = vpop.f32.mrb[0].mxu0
          %v1632 = vadd.f32 %v1535, %v1631
          %v1633 = vpop.f32.mrb[0].mxu0
          %v1634 = vpop.f32.mrb[0].mxu0
          %v1635 = vadd.f32 %v1538, %v1634
          %v1636 = vpop.f32.mrb[0].mxu0
          %1637 = vmatprep.mubr.bf16.mxu0 0
          %1638 = vmatmul.mubr.bf16.gmra.mrb[0].mxu0 %v526
          %v1639 = vpop.f32.mrb[0].mxu0
          %v1640 = vadd.f32 %v1543, %v1639
          %v1641 = vpop.f32.mrb[0].mxu0
          %v1642 = vpop.f32.mrb[0].mxu0
          %v1643 = vadd.f32 %v1546, %v1642
          %v1644 = vpop.f32.mrb[0].mxu0
          %1645 = vmatprep.mubr.bf16.mxu0 0
          %1646 = vmatmul.mubr.bf16.gmra.mrb[0].mxu0 %v1266
          %v1647 = vpop.f32.mrb[0].mxu0
          %v1648 = vadd.f32 %v1551, %v1647
          %v1649 = vpop.f32.mrb[0].mxu0
          %v1650 = vpop.f32.mrb[0].mxu0
          %v1651 = vadd.f32 %v1554, %v1650
          %v1652 = vpop.f32.mrb[0].mxu0
          %1653 = vdwg.mxu0
          %v1654 = vadd.f32 %v1190, %v1592
          %v1655 = vadd.f32 %v1193, %v1595
          %v1656 = vadd.f32 %v1198, %v1600
          %v1657 = vadd.f32 %v1201, %v1603
          %v1658 = vadd.f32 %v1206, %v1608
          %v1659 = vadd.f32 %v1209, %v1611
          %v1660 = vadd.f32 %v1214, %v1616
          %v1661 = vadd.f32 %v1217, %v1619
          %v1662 = vadd.f32 %v1222, %v1624
          %v1663 = vadd.f32 %v1225, %v1627
          %v1664 = vadd.f32 %v1230, %v1632
          %v1665 = vadd.f32 %v1233, %v1635
          %v1666 = vadd.f32 %v1238, %v1640
          %v1667 = vadd.f32 %v1241, %v1643
          %v1668 = vadd.f32 %v1246, %v1648
          %v1669 = vadd.f32 %v1249, %v1651
          %v1670 = vld [vmem:[#allocation5] sm:$0x1]
          %v1671 = vadd.f32 %v1654, %v1655
          %v1672 = vadd.f32 %v1671, %v1656
          %v1673 = vadd.f32 %v1672, %v1657
          %v1674 = vadd.f32 %v1673, %v1658
          %v1675 = vadd.f32 %v1674, %v1659
          %v1676 = vadd.f32 %v1675, %v1660
          %v1677 = vadd.f32 %v1676, %v1661
          %v1678 = vadd.f32 %v1677, %v1662
          %v1679 = vadd.f32 %v1678, %v1663
          %v1680 = vadd.f32 %v1679, %v1664
          %v1681 = vadd.f32 %v1680, %v1665
          %v1682 = vadd.f32 %v1681, %v1666
          %v1683 = vadd.f32 %v1682, %v1667
          %v1684 = vadd.f32 %v1683, %v1668
          %v1685 = vadd.f32 %v1684, %v1669
          %v1686 = vrot.slane %v1685, 4
          %v1687 = vadd.f32 %v1685, %v1686
          %v1688 = vrot.slane %v1687, 2
          %v1689 = vadd.f32 %v1687, %v1688
          %v1690 = vrot.slane %v1689, 1
          %v1691 = vadd.f32 %v1689, %v1690
          %v1692 = vadd.f32 %v1670, %v1691
          %1693 = vst [vmem:[#allocation5] sm:$0x1] %v1692
          %v1694 = vld [vmem:[#allocation5 + $0x1] sm:$0x1]
          %v1695 = vmul.f32 %v1654, %v1654
          %v1696 = vmul.f32 %v1655, %v1655
          %v1697 = vmul.f32 %v1656, %v1656
          %v1698 = vmul.f32 %v1657, %v1657
          %v1699 = vmul.f32 %v1658, %v1658
          %v1700 = vmul.f32 %v1659, %v1659
          %v1701 = vmul.f32 %v1660, %v1660
          %v1702 = vmul.f32 %v1661, %v1661
          %v1703 = vmul.f32 %v1662, %v1662
          %v1704 = vmul.f32 %v1663, %v1663
          %v1705 = vmul.f32 %v1664, %v1664
          %v1706 = vmul.f32 %v1665, %v1665
          %v1707 = vmul.f32 %v1666, %v1666
          %v1708 = vmul.f32 %v1667, %v1667
          %v1709 = vmul.f32 %v1668, %v1668
          %v1710 = vmul.f32 %v1669, %v1669
          %v1711 = vadd.f32 %v1695, %v1696
          %v1712 = vadd.f32 %v1711, %v1697
          %v1713 = vadd.f32 %v1712, %v1698
          %v1714 = vadd.f32 %v1713, %v1699
          %v1715 = vadd.f32 %v1714, %v1700
          %v1716 = vadd.f32 %v1715, %v1701
          %v1717 = vadd.f32 %v1716, %v1702
          %v1718 = vadd.f32 %v1717, %v1703
          %v1719 = vadd.f32 %v1718, %v1704
          %v1720 = vadd.f32 %v1719, %v1705
          %v1721 = vadd.f32 %v1720, %v1706
          %v1722 = vadd.f32 %v1721, %v1707
          %v1723 = vadd.f32 %v1722, %v1708
          %v1724 = vadd.f32 %v1723, %v1709
          %v1725 = vadd.f32 %v1724, %v1710
          %v1726 = vrot.slane %v1725, 4
          %v1727 = vadd.f32 %v1725, %v1726
          %v1728 = vrot.slane %v1727, 2
          %v1729 = vadd.f32 %v1727, %v1728
          %v1730 = vrot.slane %v1729, 1
          %v1731 = vadd.f32 %v1729, %v1730
          %v1732 = vadd.f32 %v1694, %v1731
          %1733 = vst [vmem:[#allocation5 + $0x1] sm:$0x1] %v1732
          %v1734 = vpack.c.bf16 %v1655, %v1654
          %v1735 = vpack.c.bf16 %v1657, %v1656
          %v1736 = vpack.c.bf16 %v1659, %v1658
          %v1737 = vpack.c.bf16 %v1661, %v1660
          %v1738 = vpack.c.bf16 %v1663, %v1662
          %v1739 = vpack.c.bf16 %v1665, %v1664
          %v1740 = vpack.c.bf16 %v1667, %v1666
          %v1741 = vpack.c.bf16 %v1669, %v1668
          %s1742 = sadd.s32 %s269, 1
          %s1743 = smul.addr %s1742, 8
          %s1744 = scalar_lea.vmem [#allocation3], %s1743
          %1745 = vst [vmem:[%s1744] sm:$0xff] %v1734
          %1746 = vst [vmem:[%s1744 + $0x8] sm:$0xff] %v1735
          %1747 = vst [vmem:[%s1744 + $0x10] sm:$0xff] %v1736
          %1748 = vst [vmem:[%s1744 + $0x18] sm:$0xff] %v1737
          %1749 = vst [vmem:[%s1744 + $0x20] sm:$0xff] %v1738
          %1750 = vst [vmem:[%s1744 + $0x28] sm:$0xff] %v1739
          %1751 = vst [vmem:[%s1744 + $0x30] sm:$0xff] %v1740
          %1752 = vst [vmem:[%s1744 + $0x38] sm:$0xff] %v1741
          %p1753 = scmp.eq.s32.totalorder %s28, 0
          // Predicated region
          $region61: #{tpu_custom_call.1} parent=59 // pred_check
            %p1754 = pneg %p1753
          $region62: #{tpu_custom_call.1} parent=59 // pred_check_branch
            %1756 = sbr.rel (%p1754) target = $region64
          $region63: #{tpu_custom_call.1} parent=59 // pred_region
            %1757 = vst [vmem:[#allocation3] sm:$0xff] %v1735
          $region64: #{tpu_custom_call.1} parent=59 // pred_fallthru
            _
          %p1758 = scmp.eq.s32.totalorder %s28, 1
          // Predicated region
          $region65: #{tpu_custom_call.1} parent=59 // pred_check
            %p1759 = pneg %p1758
          $region66: #{tpu_custom_call.1} parent=59 // pred_check_branch
            %1761 = sbr.rel (%p1759) target = $region68
          $region67: #{tpu_custom_call.1} parent=59 // pred_region
            %s1762 = scalar_lea.vmem [#allocation3], 136
            %1763 = vst [vmem:[%s1762] sm:$0xff] %v1740
          $region68: #{tpu_custom_call.1} parent=59 // pred_fallthru
            _
        $region60: #{tpu_custom_call.1} parent=31 // pred_fallthru
          _
        %p1764 = scmp.eq.s32.totalorder %s27, 2
        // Predicated region
        $region69: #{tpu_custom_call.1} parent=31 // pred_check
          %p1765 = pneg %p1764
        $region70: #{tpu_custom_call.1} parent=31 // pred_check_branch
          %1767 = sbr.rel (%p1765) target = $region72
        $region71: #{tpu_custom_call.1} parent=31 // pred_region
          %p1768 = scmp.eq.s32.totalorder %s28, 0
          // Predicated region
          $region73: #{tpu_custom_call.1} parent=71 // pred_check
            %p1769 = pneg %p1768
          $region74: #{tpu_custom_call.1} parent=71 // pred_check_branch
            %1771 = sbr.rel (%p1769) target = $region76
          $region75: #{tpu_custom_call.1} parent=71 // pred_region
            %v1772 = vld [vmem:[#allocation5] sm:$0x1]
            %v1773 = vmul.f32 %v1772, 0.00390625
            %v1774 = vld [vmem:[#allocation5 + $0x1] sm:$0x1]
            %v1775 = vmul.f32 %v1774, 0.00390625
            %v1776 = vmul.f32 %v1773, %v1773
            %v1777 = vsub.f32 %v1775, %v1776
            %v1778 = vmax.f32 %v1777, 0.0
            %1779 = vst [vmem:[#allocation5] sm:$0x1] %v1773
            %v1780 = vadd.f32 %v1778, 1e-05
            %v1781 = vrsqrt.pop %v1780
            %1782 = vst [vmem:[#allocation5 + $0x1] sm:$0x1] %v1781
          $region76: #{tpu_custom_call.1} parent=71 // pred_fallthru
            _
          %v1783 = vld [vmem:[#allocation5] sm:$0x1]
          %v1784 = vld [vmem:[#allocation5 + $0x1] sm:$0x1]
          %s1785 = smul.addr %s269, 8
          %s1786 = scalar_lea.vmem [#allocation3], %s1785
          %v1787 = vld [vmem:[%s1786] sm:$0xff]
          %v1788 = vld [vmem:[%s1786 + $0x8] sm:$0xff]
          %v1789 = vld [vmem:[%s1786 + $0x10] sm:$0xff]
          %v1790 = vld [vmem:[%s1786 + $0x18] sm:$0xff]
          %v1791 = vld [vmem:[%s1786 + $0x20] sm:$0xff]
          %v1792 = vld [vmem:[%s1786 + $0x28] sm:$0xff]
          %v1793 = vld [vmem:[%s1786 + $0x30] sm:$0xff]
          %v1794 = vld [vmem:[%s1786 + $0x38] sm:$0xff]
          %v1795 = vld [vmem:[%s1786 + $0x40] sm:$0xff]
          %v1796 = vld [vmem:[%s1786 + $0x48] sm:$0xff]
          %v1797 = vunpack.c.l.bf16 %v1787
          %v1798 = vunpack.c.h.bf16 %v1787
          %v1799 = vunpack.c.l.bf16 %v1788
          %v1800 = vunpack.c.h.bf16 %v1788
          %v1801 = vunpack.c.l.bf16 %v1789
          %v1802 = vunpack.c.h.bf16 %v1789
          %v1803 = vunpack.c.l.bf16 %v1790
          %v1804 = vunpack.c.h.bf16 %v1790
          %v1805 = vunpack.c.l.bf16 %v1791
          %v1806 = vunpack.c.h.bf16 %v1791
          %v1807 = vunpack.c.l.bf16 %v1792
          %v1808 = vunpack.c.h.bf16 %v1792
          %v1809 = vunpack.c.l.bf16 %v1793
          %v1810 = vunpack.c.h.bf16 %v1793
          %v1811 = vunpack.c.l.bf16 %v1794
          %v1812 = vunpack.c.h.bf16 %v1794
          %v1813 = vunpack.c.l.bf16 %v1795
          %v1814 = vunpack.c.h.bf16 %v1795
          %v1815 = vunpack.c.l.bf16 %v1796
          %v1816 = vunpack.c.h.bf16 %v1796
          %v1817 = vlaneseq
          %v1818 = vshrl.u32 %v1817, 7
          %v1819 = vsub.s32 0, %v1818
          %v1820 = vrot.slane %v1783, %v1819
          %v1821 = vsub.f32 %v1797, %v1820
          %v1822 = vsub.f32 %v1798, %v1820
          %v1823 = vsub.f32 %v1799, %v1820
          %v1824 = vsub.f32 %v1800, %v1820
          %v1825 = vsub.f32 %v1801, %v1820
          %v1826 = vsub.f32 %v1802, %v1820
          %v1827 = vsub.f32 %v1803, %v1820
          %v1828 = vsub.f32 %v1804, %v1820
          %v1829 = vsub.f32 %v1805, %v1820
          %v1830 = vsub.f32 %v1806, %v1820
          %v1831 = vsub.f32 %v1807, %v1820
          %v1832 = vsub.f32 %v1808, %v1820
          %v1833 = vsub.f32 %v1809, %v1820
          %v1834 = vsub.f32 %v1810, %v1820
          %v1835 = vsub.f32 %v1811, %v1820
          %v1836 = vsub.f32 %v1812, %v1820
          %v1837 = vsub.f32 %v1813, %v1820
          %v1838 = vsub.f32 %v1814, %v1820
          %v1839 = vsub.f32 %v1815, %v1820
          %v1840 = vsub.f32 %v1816, %v1820
          %v1841 = vlaneseq
          %v1842 = vshrl.u32 %v1841, 7
          %v1843 = vsub.s32 0, %v1842
          %v1844 = vrot.slane %v1784, %v1843
          %v1845 = vmul.f32 %v1821, %v1844
          %v1846 = vmul.f32 %v1822, %v1844
          %v1847 = vmul.f32 %v1823, %v1844
          %v1848 = vmul.f32 %v1824, %v1844
          %v1849 = vmul.f32 %v1825, %v1844
          %v1850 = vmul.f32 %v1826, %v1844
          %v1851 = vmul.f32 %v1827, %v1844
          %v1852 = vmul.f32 %v1828, %v1844
          %v1853 = vmul.f32 %v1829, %v1844
          %v1854 = vmul.f32 %v1830, %v1844
          %v1855 = vmul.f32 %v1831, %v1844
          %v1856 = vmul.f32 %v1832, %v1844
          %v1857 = vmul.f32 %v1833, %v1844
          %v1858 = vmul.f32 %v1834, %v1844
          %v1859 = vmul.f32 %v1835, %v1844
          %v1860 = vmul.f32 %v1836, %v1844
          %v1861 = vmul.f32 %v1837, %v1844
          %v1862 = vmul.f32 %v1838, %v1844
          %v1863 = vmul.f32 %v1839, %v1844
          %v1864 = vmul.f32 %v1840, %v1844
          %v1865 = vmax.f32 %v1845, 0.0
          %v1866 = vmax.f32 %v1846, 0.0
          %v1867 = vmax.f32 %v1847, 0.0
          %v1868 = vmax.f32 %v1848, 0.0
          %v1869 = vmax.f32 %v1849, 0.0
          %v1870 = vmax.f32 %v1850, 0.0
          %v1871 = vmax.f32 %v1851, 0.0
          %v1872 = vmax.f32 %v1852, 0.0
          %v1873 = vmax.f32 %v1853, 0.0
          %v1874 = vmax.f32 %v1854, 0.0
          %v1875 = vmax.f32 %v1855, 0.0
          %v1876 = vmax.f32 %v1856, 0.0
          %v1877 = vmax.f32 %v1857, 0.0
          %v1878 = vmax.f32 %v1858, 0.0
          %v1879 = vmax.f32 %v1859, 0.0
          %v1880 = vmax.f32 %v1860, 0.0
          %v1881 = vmax.f32 %v1861, 0.0
          %v1882 = vmax.f32 %v1862, 0.0
          %v1883 = vmax.f32 %v1863, 0.0
          %v1884 = vmax.f32 %v1864, 0.0
          %v1885 = vpack.c.bf16 %v1866, %v1865
          %v1886 = vpack.c.bf16 %v1868, %v1867
          %v1887 = vpack.c.bf16 %v1870, %v1869
          %v1888 = vpack.c.bf16 %v1872, %v1871
          %v1889 = vpack.c.bf16 %v1874, %v1873
          %v1890 = vpack.c.bf16 %v1876, %v1875
          %v1891 = vpack.c.bf16 %v1878, %v1877
          %v1892 = vpack.c.bf16 %v1880, %v1879
          %v1893 = vpack.c.bf16 %v1882, %v1881
          %v1894 = vpack.c.bf16 %v1884, %v1883
          %v1896 = vshrl.u32 %v1885, 16
          %v1899 = vshrl.u32 %v1886, 16
          %v1902 = vshrl.u32 %v1887, 16
          %v1905 = vshrl.u32 %v1888, 16
          %v1908 = vshrl.u32 %v1889, 16
          %v1911 = vshrl.u32 %v1890, 16
          %v1914 = vshrl.u32 %v1891, 16
          %v1917 = vshrl.u32 %v1892, 16
          %v1927 = vrot.slane %v1896, 7
          %v1928 = vshll.u32 %v1885, 16
          %v1930 = vor.u32 %v1927, %v1928
          %v1931 = vrot.slane %v1899, 7
          %v1932 = vshll.u32 %v1886, 16
          %v1934 = vor.u32 %v1931, %v1932
          %v1935 = vrot.slane %v1902, 7
          %v1936 = vshll.u32 %v1887, 16
          %v1938 = vor.u32 %v1935, %v1936
          %v1939 = vrot.slane %v1905, 7
          %v1940 = vshll.u32 %v1888, 16
          %v1942 = vor.u32 %v1939, %v1940
          %v1943 = vrot.slane %v1908, 7
          %v1944 = vshll.u32 %v1889, 16
          %v1946 = vor.u32 %v1943, %v1944
          %v1947 = vrot.slane %v1911, 7
          %v1948 = vshll.u32 %v1890, 16
          %v1950 = vor.u32 %v1947, %v1948
          %v1951 = vrot.slane %v1914, 7
          %v1952 = vshll.u32 %v1891, 16
          %v1954 = vor.u32 %v1951, %v1952
          %v1955 = vrot.slane %v1917, 7
          %v1956 = vshll.u32 %v1892, 16
          %v1958 = vor.u32 %v1955, %v1956
          %vm1967 = vcmask 1040384
          %vm1968 = vsmask.f32 256
          %vm1969 = vmand %vm1967, %vm1968
          %v1970 = vsel %vm1969, %v1896, %v1930
          %v1971 = vsel %vm1969, %v1899, %v1934
          %v1972 = vsel %vm1969, %v1902, %v1938
          %v1973 = vsel %vm1969, %v1905, %v1942
          %v1974 = vsel %vm1969, %v1908, %v1946
          %v1975 = vsel %vm1969, %v1911, %v1950
          %v1976 = vsel %vm1969, %v1914, %v1954
          %v1977 = vsel %vm1969, %v1917, %v1958
          %v1978 = vrot.slane %v1928, 1
          %v1979 = vor.u32 %v1896, %v1978
          %v1980 = vrot.slane %v1932, 1
          %v1981 = vor.u32 %v1899, %v1980
          %v1982 = vrot.slane %v1936, 1
          %v1983 = vor.u32 %v1902, %v1982
          %v1984 = vrot.slane %v1940, 1
          %v1985 = vor.u32 %v1905, %v1984
          %v1986 = vrot.slane %v1944, 1
          %v1987 = vor.u32 %v1908, %v1986
          %v1988 = vrot.slane %v1948, 1
          %v1989 = vor.u32 %v1911, %v1988
          %v1990 = vrot.slane %v1952, 1
          %v1991 = vor.u32 %v1914, %v1990
          %v1992 = vrot.slane %v1956, 1
          %v1993 = vor.u32 %v1917, %v1992
          %vm2010 = vcmask 1047552
          %vm2011 = vsmask.f32 7424
          %vm2012 = vmand %vm2010, %vm2011
          %v2013 = vsel %vm2012, %v1979, %v1928
          %v2014 = vsel %vm2012, %v1981, %v1932
          %v2015 = vsel %vm2012, %v1983, %v1936
          %v2016 = vsel %vm2012, %v1985, %v1940
          %v2017 = vsel %vm2012, %v1987, %v1944
          %v2018 = vsel %vm2012, %v1989, %v1948
          %v2019 = vsel %vm2012, %v1991, %v1952
          %v2020 = vsel %vm2012, %v1993, %v1956
          %v2021 = vld [vmem:[#allocation12] sm:$0xf]
          %v2022 = vld [vmem:[#allocation12 + $0x4] sm:$0xf]
          %v2023 = vld [vmem:[#allocation12 + $0x8] sm:$0xf]
          %v2024 = vld [vmem:[#allocation12 + $0xc] sm:$0xf]
          %v2025 = vld [vmem:[#allocation12 + $0x10] sm:$0xf]
          %v2026 = vld [vmem:[#allocation12 + $0x14] sm:$0xf]
          %v2027 = vld [vmem:[#allocation12 + $0x18] sm:$0xf]
          %v2028 = vld [vmem:[#allocation12 + $0x1c] sm:$0xf]
          %v2029 = vld [vmem:[#allocation12 + $0x20] sm:$0xf]
          %v2030 = vld [vmem:[#allocation12 + $0x24] sm:$0xf]
          %v2031 = vld [vmem:[#allocation12 + $0x28] sm:$0xf]
          %v2032 = vld [vmem:[#allocation12 + $0x2c] sm:$0xf]
          %v2033 = vld [vmem:[#allocation12 + $0x30] sm:$0xf]
          %v2034 = vld [vmem:[#allocation12 + $0x34] sm:$0xf]
          %v2035 = vld [vmem:[#allocation12 + $0x38] sm:$0xf]
          %v2036 = vld [vmem:[#allocation12 + $0x3c] sm:$0xf]
          %v2037 = vld [vmem:[#allocation12 + $0x40] sm:$0xf]
          %v2038 = vld [vmem:[#allocation12 + $0x44] sm:$0xf]
          %v2039 = vld [vmem:[#allocation12 + $0x48] sm:$0xf]
          %v2040 = vld [vmem:[#allocation12 + $0x4c] sm:$0xf]
          %v2041 = vld [vmem:[#allocation12 + $0x50] sm:$0xf]
          %v2042 = vld [vmem:[#allocation12 + $0x54] sm:$0xf]
          %v2043 = vld [vmem:[#allocation12 + $0x58] sm:$0xf]
          %v2044 = vld [vmem:[#allocation12 + $0x5c] sm:$0xf]
          %v2045 = vld [vmem:[#allocation12 + $0x60] sm:$0xf]
          %v2046 = vld [vmem:[#allocation12 + $0x64] sm:$0xf]
          %v2047 = vld [vmem:[#allocation12 + $0x68] sm:$0xf]
          %v2048 = vld [vmem:[#allocation12 + $0x6c] sm:$0xf]
          %v2049 = vld [vmem:[#allocation12 + $0x70] sm:$0xf]
          %v2050 = vld [vmem:[#allocation12 + $0x74] sm:$0xf]
          %v2051 = vld [vmem:[#allocation12 + $0x78] sm:$0xf]
          %v2052 = vld [vmem:[#allocation12 + $0x7c] sm:$0xf]
          %v2053 = vld [vmem:[#allocation12 + $0x80] sm:$0xf]
          %v2054 = vld [vmem:[#allocation12 + $0x84] sm:$0xf]
          %v2055 = vld [vmem:[#allocation12 + $0x88] sm:$0xf]
          %v2056 = vld [vmem:[#allocation12 + $0x8c] sm:$0xf]
          %v2057 = vld [vmem:[#allocation12 + $0x90] sm:$0xf]
          %v2058 = vld [vmem:[#allocation12 + $0x94] sm:$0xf]
          %v2059 = vld [vmem:[#allocation12 + $0x98] sm:$0xf]
          %v2060 = vld [vmem:[#allocation12 + $0x9c] sm:$0xf]
          %v2061 = vld [vmem:[#allocation12 + $0xa0] sm:$0xf]
          %v2062 = vld [vmem:[#allocation12 + $0xa4] sm:$0xf]
          %v2063 = vld [vmem:[#allocation12 + $0xa8] sm:$0xf]
          %v2064 = vld [vmem:[#allocation12 + $0xac] sm:$0xf]
          %v2065 = vld [vmem:[#allocation12 + $0xb0] sm:$0xf]
          %v2066 = vld [vmem:[#allocation12 + $0xb4] sm:$0xf]
          %v2067 = vld [vmem:[#allocation12 + $0xb8] sm:$0xf]
          %v2068 = vld [vmem:[#allocation12 + $0xbc] sm:$0xf]
          %v2070 = vshrl.u32 %v1893, 16
          %v2073 = vrot.slane %v2070, 7
          %v2074 = vshll.u32 %v1893, 16
          %v2076 = vor.u32 %v2073, %v2074
          %v2078 = vsel %vm1969, %v2070, %v2076
          %v2079 = vrot.slane %v2074, 1
          %v2080 = vor.u32 %v2070, %v2079
          %v2083 = vsel %vm2012, %v2080, %v2074
          %s2084 = scalar_lea.vmem [#allocation12], 192
          %v2085 = vld [vmem:[%s2084] sm:$0xf]
          %v2086 = vld [vmem:[%s2084 + $0x4] sm:$0xf]
          %v2087 = vld [vmem:[%s2084 + $0x8] sm:$0xf]
          %v2088 = vld [vmem:[%s2084 + $0xc] sm:$0xf]
          %v2089 = vld [vmem:[%s2084 + $0x10] sm:$0xf]
          %v2090 = vld [vmem:[%s2084 + $0x14] sm:$0xf]
          %v2091 = vld [vmem:[%s2084 + $0x18] sm:$0xf]
          %v2092 = vld [vmem:[%s2084 + $0x1c] sm:$0xf]
          %v2093 = vld [vmem:[%s2084 + $0x20] sm:$0xf]
          %v2094 = vld [vmem:[%s2084 + $0x24] sm:$0xf]
          %v2095 = vld [vmem:[%s2084 + $0x28] sm:$0xf]
          %v2096 = vld [vmem:[%s2084 + $0x2c] sm:$0xf]
          %v2097 = vld [vmem:[%s2084 + $0x30] sm:$0xf]
          %v2098 = vld [vmem:[%s2084 + $0x34] sm:$0xf]
          %v2099 = vld [vmem:[%s2084 + $0x38] sm:$0xf]
          %v2100 = vld [vmem:[%s2084 + $0x3c] sm:$0xf]
          %v2101 = vld [vmem:[%s2084 + $0x40] sm:$0xf]
          %v2102 = vld [vmem:[%s2084 + $0x44] sm:$0xf]
          %v2103 = vld [vmem:[%s2084 + $0x48] sm:$0xf]
          %v2104 = vld [vmem:[%s2084 + $0x4c] sm:$0xf]
          %v2105 = vld [vmem:[%s2084 + $0x50] sm:$0xf]
          %v2106 = vld [vmem:[%s2084 + $0x54] sm:$0xf]
          %v2107 = vld [vmem:[%s2084 + $0x58] sm:$0xf]
          %v2108 = vld [vmem:[%s2084 + $0x5c] sm:$0xf]
          %v2109 = vld [vmem:[%s2084 + $0x60] sm:$0xf]
          %v2110 = vld [vmem:[%s2084 + $0x64] sm:$0xf]
          %v2111 = vld [vmem:[%s2084 + $0x68] sm:$0xf]
          %v2112 = vld [vmem:[%s2084 + $0x6c] sm:$0xf]
          %v2113 = vld [vmem:[%s2084 + $0x70] sm:$0xf]
          %v2114 = vld [vmem:[%s2084 + $0x74] sm:$0xf]
          %v2115 = vld [vmem:[%s2084 + $0x78] sm:$0xf]
          %v2116 = vld [vmem:[%s2084 + $0x7c] sm:$0xf]
          %v2117 = vld [vmem:[%s2084 + $0x80] sm:$0xf]
          %v2118 = vld [vmem:[%s2084 + $0x84] sm:$0xf]
          %v2119 = vld [vmem:[%s2084 + $0x88] sm:$0xf]
          %v2120 = vld [vmem:[%s2084 + $0x8c] sm:$0xf]
          %v2121 = vld [vmem:[%s2084 + $0x90] sm:$0xf]
          %v2122 = vld [vmem:[%s2084 + $0x94] sm:$0xf]
          %v2123 = vld [vmem:[%s2084 + $0x98] sm:$0xf]
          %v2124 = vld [vmem:[%s2084 + $0x9c] sm:$0xf]
          %v2125 = vld [vmem:[%s2084 + $0xa0] sm:$0xf]
          %v2126 = vld [vmem:[%s2084 + $0xa4] sm:$0xf]
          %v2127 = vld [vmem:[%s2084 + $0xa8] sm:$0xf]
          %v2128 = vld [vmem:[%s2084 + $0xac] sm:$0xf]
          %v2129 = vld [vmem:[%s2084 + $0xb0] sm:$0xf]
          %v2130 = vld [vmem:[%s2084 + $0xb4] sm:$0xf]
          %v2131 = vld [vmem:[%s2084 + $0xb8] sm:$0xf]
          %v2132 = vld [vmem:[%s2084 + $0xbc] sm:$0xf]
          %v2181 = vunpack.c.l.b16 %v2085
          %v2182 = vunpack.c.l.b16 %v2086
          %v2183 = vunpack.c.l.b16 %v2087
          %v2184 = vunpack.c.l.b16 %v2088
          %v2185 = vunpack.c.l.b16 %v2089
          %v2186 = vunpack.c.l.b16 %v2090
          %v2187 = vunpack.c.l.b16 %v2091
          %v2188 = vunpack.c.l.b16 %v2092
          %v2189 = vunpack.c.l.b16 %v2093
          %v2190 = vunpack.c.l.b16 %v2094
          %v2191 = vunpack.c.l.b16 %v2095
          %v2192 = vunpack.c.l.b16 %v2096
          %v2193 = vunpack.c.l.b16 %v2097
          %v2194 = vunpack.c.l.b16 %v2098
          %v2195 = vunpack.c.l.b16 %v2099
          %v2196 = vunpack.c.l.b16 %v2100
          %v2197 = vunpack.c.l.b16 %v2101
          %v2198 = vunpack.c.l.b16 %v2102
          %v2199 = vunpack.c.l.b16 %v2103
          %v2200 = vunpack.c.l.b16 %v2104
          %v2201 = vunpack.c.l.b16 %v2105
          %v2202 = vunpack.c.l.b16 %v2106
          %v2203 = vunpack.c.l.b16 %v2107
          %v2204 = vunpack.c.l.b16 %v2108
          %v2205 = vunpack.c.l.b16 %v2109
          %v2206 = vunpack.c.l.b16 %v2110
          %v2207 = vunpack.c.l.b16 %v2111
          %v2208 = vunpack.c.l.b16 %v2112
          %v2209 = vunpack.c.l.b16 %v2113
          %v2210 = vunpack.c.l.b16 %v2114
          %v2211 = vunpack.c.l.b16 %v2115
          %v2212 = vunpack.c.l.b16 %v2116
          %v2213 = vunpack.c.l.b16 %v2117
          %v2214 = vunpack.c.l.b16 %v2118
          %v2215 = vunpack.c.l.b16 %v2119
          %v2216 = vunpack.c.l.b16 %v2120
          %v2217 = vunpack.c.l.b16 %v2121
          %v2218 = vunpack.c.l.b16 %v2122
          %v2219 = vunpack.c.l.b16 %v2123
          %v2220 = vunpack.c.l.b16 %v2124
          %v2221 = vunpack.c.l.b16 %v2125
          %v2222 = vunpack.c.l.b16 %v2126
          %v2223 = vunpack.c.l.b16 %v2127
          %v2224 = vunpack.c.l.b16 %v2128
          %v2225 = vunpack.c.l.b16 %v2129
          %v2226 = vunpack.c.l.b16 %v2130
          %v2227 = vunpack.c.l.b16 %v2131
          %v2228 = vunpack.c.l.b16 %v2132
          %v2229 = vpack.c.b16 %v2182, %v2181
          %v2230 = vpack.c.b16 %v2184, %v2183
          %v2231 = vpack.c.b16 %v2186, %v2185
          %v2232 = vpack.c.b16 %v2188, %v2187
          %v2233 = vpack.c.b16 %v2190, %v2189
          %v2234 = vpack.c.b16 %v2192, %v2191
          %v2235 = vpack.c.b16 %v2194, %v2193
          %v2236 = vpack.c.b16 %v2196, %v2195
          %v2237 = vpack.c.b16 %v2198, %v2197
          %v2238 = vpack.c.b16 %v2200, %v2199
          %v2239 = vpack.c.b16 %v2202, %v2201
          %v2240 = vpack.c.b16 %v2204, %v2203
          %v2241 = vpack.c.b16 %v2206, %v2205
          %v2242 = vpack.c.b16 %v2208, %v2207
          %v2243 = vpack.c.b16 %v2210, %v2209
          %v2244 = vpack.c.b16 %v2212, %v2211
          %v2245 = vpack.c.b16 %v2214, %v2213
          %v2246 = vpack.c.b16 %v2216, %v2215
          %v2247 = vpack.c.b16 %v2218, %v2217
          %v2248 = vpack.c.b16 %v2220, %v2219
          %v2249 = vpack.c.b16 %v2222, %v2221
          %v2250 = vpack.c.b16 %v2224, %v2223
          %v2251 = vpack.c.b16 %v2226, %v2225
          %v2252 = vpack.c.b16 %v2228, %v2227
          %2277 = vmatprep.subr.bf16.mxu0 0
          %2278 = vmatpush1.bf16.msra.mxu0 %v2229
          %2279 = vmatprep.subr.bf16.mxu0 0
          %2280 = vmatpush1.bf16.msra.mxu0 %v2230
          %2281 = vmatprep.subr.bf16.mxu0 0
          %2282 = vmatpush1.bf16.msra.mxu0 %v2231
          %2283 = vmatprep.subr.bf16.mxu0 0
          %2284 = vmatpush1.bf16.msra.mxu0 %v2232
          %2285 = vmatprep.subr.bf16.mxu0 0
          %2286 = vmatpush1.bf16.msra.mxu0 %v2233
          %2287 = vmatprep.subr.bf16.mxu0 0
          %2288 = vmatpush1.bf16.msra.mxu0 %v2234
          %2289 = vmatprep.subr.bf16.mxu0 0
          %2290 = vmatpush1.bf16.msra.mxu0 %v2235
          %2291 = vmatprep.subr.bf16.mxu0 0
          %2292 = vmatpush1.bf16.msra.mxu0 %v2236
          %2293 = vmatprep.subr.bf16.mxu0 0
          %2294 = vmatpush1.bf16.msra.mxu0 %v2237
          %2295 = vmatprep.subr.bf16.mxu0 0
          %2296 = vmatpush1.bf16.msra.mxu0 %v2238
          %2297 = vmatprep.subr.bf16.mxu0 0
          %2298 = vmatpush1.bf16.msra.mxu0 %v2239
          %2299 = vmatprep.subr.bf16.mxu0 0
          %2300 = vmatpush1.bf16.msra.mxu0 %v2240
          %2301 = vmatprep.subr.bf16.mxu0 0
          %2302 = vmatpush1.bf16.msra.mxu0 %v2241
          %2303 = vmatprep.subr.bf16.mxu0 0
          %2304 = vmatpush1.bf16.msra.mxu0 %v2242
          %2305 = vmatprep.subr.bf16.mxu0 0
          %2306 = vmatpush1.bf16.msra.mxu0 %v2243
          %2307 = vmatprep.subr.bf16.mxu0 0
          %2308 = vmatpush1.bf16.msra.mxu0 %v2244
          %2309 = vmatprep.mubr.bf16.mxu0 %v1886
          %2310 = vmatmul.mubr.bf16.gmra.mrb[0].mxu0 %v1971
          %v2311 = vpop.f32.mrb[0].mxu0
          %v2312 = vadd.f32 0.0, %v2311
          %v2313 = vpop.f32.mrb[0].mxu0
          %v2314 = vpop.f32.mrb[0].mxu0
          %v2315 = vadd.f32 0.0, %v2314
          %v2316 = vpop.f32.mrb[0].mxu0
          %2317 = vmatprep.mubr.bf16.mxu0 %v1887
          %2318 = vmatmul.mubr.bf16.gmra.mrb[0].mxu0 %v1972
          %v2319 = vpop.f32.mrb[0].mxu0
          %v2320 = vadd.f32 0.0, %v2319
          %v2321 = vpop.f32.mrb[0].mxu0
          %v2322 = vpop.f32.mrb[0].mxu0
          %v2323 = vadd.f32 0.0, %v2322
          %v2324 = vpop.f32.mrb[0].mxu0
          %2325 = vmatprep.mubr.bf16.mxu0 %v1888
          %2326 = vmatmul.mubr.bf16.gmra.mrb[0].mxu0 %v1973
          %v2327 = vpop.f32.mrb[0].mxu0
          %v2328 = vadd.f32 0.0, %v2327
          %v2329 = vpop.f32.mrb[0].mxu0
          %v2330 = vpop.f32.mrb[0].mxu0
          %v2331 = vadd.f32 0.0, %v2330
          %v2332 = vpop.f32.mrb[0].mxu0
          %2333 = vmatprep.mubr.bf16.mxu0 %v1889
          %2334 = vmatmul.mubr.bf16.gmra.mrb[0].mxu0 %v1974
          %v2335 = vpop.f32.mrb[0].mxu0
          %v2336 = vadd.f32 0.0, %v2335
          %v2337 = vpop.f32.mrb[0].mxu0
          %v2338 = vpop.f32.mrb[0].mxu0
          %v2339 = vadd.f32 0.0, %v2338
          %v2340 = vpop.f32.mrb[0].mxu0
          %2341 = vmatprep.mubr.bf16.mxu0 %v1890
          %2342 = vmatmul.mubr.bf16.gmra.mrb[0].mxu0 %v1975
          %v2343 = vpop.f32.mrb[0].mxu0
          %v2344 = vadd.f32 0.0, %v2343
          %v2345 = vpop.f32.mrb[0].mxu0
          %v2346 = vpop.f32.mrb[0].mxu0
          %v2347 = vadd.f32 0.0, %v2346
          %v2348 = vpop.f32.mrb[0].mxu0
          %2349 = vmatprep.mubr.bf16.mxu0 %v1891
          %2350 = vmatmul.mubr.bf16.gmra.mrb[0].mxu0 %v1976
          %v2351 = vpop.f32.mrb[0].mxu0
          %v2352 = vadd.f32 0.0, %v2351
          %v2353 = vpop.f32.mrb[0].mxu0
          %v2354 = vpop.f32.mrb[0].mxu0
          %v2355 = vadd.f32 0.0, %v2354
          %v2356 = vpop.f32.mrb[0].mxu0
          %2357 = vmatprep.mubr.bf16.mxu0 %v1892
          %2358 = vmatmul.mubr.bf16.gmra.mrb[0].mxu0 %v1977
          %v2359 = vpop.f32.mrb[0].mxu0
          %v2360 = vadd.f32 0.0, %v2359
          %v2361 = vpop.f32.mrb[0].mxu0
          %v2362 = vpop.f32.mrb[0].mxu0
          %v2363 = vadd.f32 0.0, %v2362
          %v2364 = vpop.f32.mrb[0].mxu0
          %2365 = vmatprep.mubr.bf16.mxu0 %v1893
          %2366 = vmatmul.mubr.bf16.gmra.mrb[0].mxu0 %v2078
          %v2367 = vpop.f32.mrb[0].mxu0
          %v2368 = vadd.f32 0.0, %v2367
          %v2369 = vpop.f32.mrb[0].mxu0
          %v2370 = vpop.f32.mrb[0].mxu0
          %v2371 = vadd.f32 0.0, %v2370
          %v2372 = vpop.f32.mrb[0].mxu0
          %2373 = vdwg.mxu0
          %2374 = vmatprep.subr.bf16.mxu0 0
          %2375 = vmatpush1.bf16.msra.mxu0 %v2245
          %2376 = vmatprep.subr.bf16.mxu0 0
          %2377 = vmatpush1.bf16.msra.mxu0 %v2246
          %2378 = vmatprep.subr.bf16.mxu0 0
          %2379 = vmatpush1.bf16.msra.mxu0 %v2247
          %2380 = vmatprep.subr.bf16.mxu0 0
          %2381 = vmatpush1.bf16.msra.mxu0 %v2248
          %2382 = vmatprep.subr.bf16.mxu0 0
          %2383 = vmatpush1.bf16.msra.mxu0 %v2249
          %2384 = vmatprep.subr.bf16.mxu0 0
          %2385 = vmatpush1.bf16.msra.mxu0 %v2250
          %2386 = vmatprep.subr.bf16.mxu0 0
          %2387 = vmatpush1.bf16.msra.mxu0 %v2251
          %2388 = vmatprep.subr.bf16.mxu0 0
          %2389 = vmatpush1.bf16.msra.mxu0 %v2252
          %2390 = vmatprep.subr.bf16.mxu0 0
          %2391 = vmatpush1.bf16.msra.mxu0 0
          %2392 = vmatprep.subr.bf16.mxu0 0
          %2393 = vmatpush1.bf16.msra.mxu0 0
          %2394 = vmatprep.subr.bf16.mxu0 0
          %2395 = vmatpush1.bf16.msra.mxu0 0
          %2396 = vmatprep.subr.bf16.mxu0 0
          %2397 = vmatpush1.bf16.msra.mxu0 0
          %2398 = vmatprep.subr.bf16.mxu0 0
          %2399 = vmatpush1.bf16.msra.mxu0 0
          %2400 = vmatprep.subr.bf16.mxu0 0
          %2401 = vmatpush1.bf16.msra.mxu0 0
          %2402 = vmatprep.subr.bf16.mxu0 0
          %2403 = vmatpush1.bf16.msra.mxu0 0
          %2404 = vmatprep.subr.bf16.mxu0 0
          %2405 = vmatpush1.bf16.msra.mxu0 0
          %2406 = vmatprep.mubr.bf16.mxu0 0
          %2407 = vmatmul.mubr.bf16.gmra.mrb[0].mxu0 %v2014
          %v2408 = vpop.f32.mrb[0].mxu0
          %v2409 = vadd.f32 %v2312, %v2408
          %v2410 = vpop.f32.mrb[0].mxu0
          %v2411 = vpop.f32.mrb[0].mxu0
          %v2412 = vadd.f32 %v2315, %v2411
          %v2413 = vpop.f32.mrb[0].mxu0
          %2414 = vmatprep.mubr.bf16.mxu0 0
          %2415 = vmatmul.mubr.bf16.gmra.mrb[0].mxu0 %v2015
          %v2416 = vpop.f32.mrb[0].mxu0
          %v2417 = vadd.f32 %v2320, %v2416
          %v2418 = vpop.f32.mrb[0].mxu0
          %v2419 = vpop.f32.mrb[0].mxu0
          %v2420 = vadd.f32 %v2323, %v2419
          %v2421 = vpop.f32.mrb[0].mxu0
          %2422 = vmatprep.mubr.bf16.mxu0 0
          %2423 = vmatmul.mubr.bf16.gmra.mrb[0].mxu0 %v2016
          %v2424 = vpop.f32.mrb[0].mxu0
          %v2425 = vadd.f32 %v2328, %v2424
          %v2426 = vpop.f32.mrb[0].mxu0
          %v2427 = vpop.f32.mrb[0].mxu0
          %v2428 = vadd.f32 %v2331, %v2427
          %v2429 = vpop.f32.mrb[0].mxu0
          %2430 = vmatprep.mubr.bf16.mxu0 0
          %2431 = vmatmul.mubr.bf16.gmra.mrb[0].mxu0 %v2017
          %v2432 = vpop.f32.mrb[0].mxu0
          %v2433 = vadd.f32 %v2336, %v2432
          %v2434 = vpop.f32.mrb[0].mxu0
          %v2435 = vpop.f32.mrb[0].mxu0
          %v2436 = vadd.f32 %v2339, %v2435
          %v2437 = vpop.f32.mrb[0].mxu0
          %2438 = vmatprep.mubr.bf16.mxu0 0
          %2439 = vmatmul.mubr.bf16.gmra.mrb[0].mxu0 %v2018
          %v2440 = vpop.f32.mrb[0].mxu0
          %v2441 = vadd.f32 %v2344, %v2440
          %v2442 = vpop.f32.mrb[0].mxu0
          %v2443 = vpop.f32.mrb[0].mxu0
          %v2444 = vadd.f32 %v2347, %v2443
          %v2445 = vpop.f32.mrb[0].mxu0
          %2446 = vmatprep.mubr.bf16.mxu0 0
          %2447 = vmatmul.mubr.bf16.gmra.mrb[0].mxu0 %v2019
          %v2448 = vpop.f32.mrb[0].mxu0
          %v2449 = vadd.f32 %v2352, %v2448
          %v2450 = vpop.f32.mrb[0].mxu0
          %v2451 = vpop.f32.mrb[0].mxu0
          %v2452 = vadd.f32 %v2355, %v2451
          %v2453 = vpop.f32.mrb[0].mxu0
          %2454 = vmatprep.mubr.bf16.mxu0 0
          %2455 = vmatmul.mubr.bf16.gmra.mrb[0].mxu0 %v2020
          %v2456 = vpop.f32.mrb[0].mxu0
          %v2457 = vadd.f32 %v2360, %v2456
          %v2458 = vpop.f32.mrb[0].mxu0
          %v2459 = vpop.f32.mrb[0].mxu0
          %v2460 = vadd.f32 %v2363, %v2459
          %v2461 = vpop.f32.mrb[0].mxu0
          %2462 = vmatprep.mubr.bf16.mxu0 0
          %2463 = vmatmul.mubr.bf16.gmra.mrb[0].mxu0 %v2083
          %v2464 = vpop.f32.mrb[0].mxu0
          %v2465 = vadd.f32 %v2368, %v2464
          %v2466 = vpop.f32.mrb[0].mxu0
          %v2467 = vpop.f32.mrb[0].mxu0
          %v2468 = vadd.f32 %v2371, %v2467
          %v2469 = vpop.f32.mrb[0].mxu0
          %2470 = vdwg.mxu0
          %v2519 = vunpack.c.l.b16 %v2021
          %v2520 = vunpack.c.l.b16 %v2022
          %v2521 = vunpack.c.l.b16 %v2023
          %v2522 = vunpack.c.l.b16 %v2024
          %v2523 = vunpack.c.l.b16 %v2025
          %v2524 = vunpack.c.l.b16 %v2026
          %v2525 = vunpack.c.l.b16 %v2027
          %v2526 = vunpack.c.l.b16 %v2028
          %v2527 = vunpack.c.l.b16 %v2029
          %v2528 = vunpack.c.l.b16 %v2030
          %v2529 = vunpack.c.l.b16 %v2031
          %v2530 = vunpack.c.l.b16 %v2032
          %v2531 = vunpack.c.l.b16 %v2033
          %v2532 = vunpack.c.l.b16 %v2034
          %v2533 = vunpack.c.l.b16 %v2035
          %v2534 = vunpack.c.l.b16 %v2036
          %v2535 = vunpack.c.l.b16 %v2037
          %v2536 = vunpack.c.l.b16 %v2038
          %v2537 = vunpack.c.l.b16 %v2039
          %v2538 = vunpack.c.l.b16 %v2040
          %v2539 = vunpack.c.l.b16 %v2041
          %v2540 = vunpack.c.l.b16 %v2042
          %v2541 = vunpack.c.l.b16 %v2043
          %v2542 = vunpack.c.l.b16 %v2044
          %v2543 = vunpack.c.l.b16 %v2045
          %v2544 = vunpack.c.l.b16 %v2046
          %v2545 = vunpack.c.l.b16 %v2047
          %v2546 = vunpack.c.l.b16 %v2048
          %v2547 = vunpack.c.l.b16 %v2049
          %v2548 = vunpack.c.l.b16 %v2050
          %v2549 = vunpack.c.l.b16 %v2051
          %v2550 = vunpack.c.l.b16 %v2052
          %v2551 = vunpack.c.l.b16 %v2053
          %v2552 = vunpack.c.l.b16 %v2054
          %v2553 = vunpack.c.l.b16 %v2055
          %v2554 = vunpack.c.l.b16 %v2056
          %v2555 = vunpack.c.l.b16 %v2057
          %v2556 = vunpack.c.l.b16 %v2058
          %v2557 = vunpack.c.l.b16 %v2059
          %v2558 = vunpack.c.l.b16 %v2060
          %v2559 = vunpack.c.l.b16 %v2061
          %v2560 = vunpack.c.l.b16 %v2062
          %v2561 = vunpack.c.l.b16 %v2063
          %v2562 = vunpack.c.l.b16 %v2064
          %v2563 = vunpack.c.l.b16 %v2065
          %v2564 = vunpack.c.l.b16 %v2066
          %v2565 = vunpack.c.l.b16 %v2067
          %v2566 = vunpack.c.l.b16 %v2068
          %v2567 = vpack.c.b16 %v2520, %v2519
          %v2568 = vpack.c.b16 %v2522, %v2521
          %v2569 = vpack.c.b16 %v2524, %v2523
          %v2570 = vpack.c.b16 %v2526, %v2525
          %v2571 = vpack.c.b16 %v2528, %v2527
          %v2572 = vpack.c.b16 %v2530, %v2529
          %v2573 = vpack.c.b16 %v2532, %v2531
          %v2574 = vpack.c.b16 %v2534, %v2533
          %v2575 = vpack.c.b16 %v2536, %v2535
          %v2576 = vpack.c.b16 %v2538, %v2537
          %v2577 = vpack.c.b16 %v2540, %v2539
          %v2578 = vpack.c.b16 %v2542, %v2541
          %v2579 = vpack.c.b16 %v2544, %v2543
          %v2580 = vpack.c.b16 %v2546, %v2545
          %v2581 = vpack.c.b16 %v2548, %v2547
          %v2582 = vpack.c.b16 %v2550, %v2549
          %v2583 = vpack.c.b16 %v2552, %v2551
          %v2584 = vpack.c.b16 %v2554, %v2553
          %v2585 = vpack.c.b16 %v2556, %v2555
          %v2586 = vpack.c.b16 %v2558, %v2557
          %v2587 = vpack.c.b16 %v2560, %v2559
          %v2588 = vpack.c.b16 %v2562, %v2561
          %v2589 = vpack.c.b16 %v2564, %v2563
          %v2590 = vpack.c.b16 %v2566, %v2565
          %2615 = vmatprep.subr.bf16.mxu0 0
          %2616 = vmatpush1.bf16.msra.mxu0 %v2567
          %2617 = vmatprep.subr.bf16.mxu0 0
          %2618 = vmatpush1.bf16.msra.mxu0 %v2568
          %2619 = vmatprep.subr.bf16.mxu0 0
          %2620 = vmatpush1.bf16.msra.mxu0 %v2569
          %2621 = vmatprep.subr.bf16.mxu0 0
          %2622 = vmatpush1.bf16.msra.mxu0 %v2570
          %2623 = vmatprep.subr.bf16.mxu0 0
          %2624 = vmatpush1.bf16.msra.mxu0 %v2571
          %2625 = vmatprep.subr.bf16.mxu0 0
          %2626 = vmatpush1.bf16.msra.mxu0 %v2572
          %2627 = vmatprep.subr.bf16.mxu0 0
          %2628 = vmatpush1.bf16.msra.mxu0 %v2573
          %2629 = vmatprep.subr.bf16.mxu0 0
          %2630 = vmatpush1.bf16.msra.mxu0 %v2574
          %2631 = vmatprep.subr.bf16.mxu0 0
          %2632 = vmatpush1.bf16.msra.mxu0 %v2575
          %2633 = vmatprep.subr.bf16.mxu0 0
          %2634 = vmatpush1.bf16.msra.mxu0 %v2576
          %2635 = vmatprep.subr.bf16.mxu0 0
          %2636 = vmatpush1.bf16.msra.mxu0 %v2577
          %2637 = vmatprep.subr.bf16.mxu0 0
          %2638 = vmatpush1.bf16.msra.mxu0 %v2578
          %2639 = vmatprep.subr.bf16.mxu0 0
          %2640 = vmatpush1.bf16.msra.mxu0 %v2579
          %2641 = vmatprep.subr.bf16.mxu0 0
          %2642 = vmatpush1.bf16.msra.mxu0 %v2580
          %2643 = vmatprep.subr.bf16.mxu0 0
          %2644 = vmatpush1.bf16.msra.mxu0 %v2581
          %2645 = vmatprep.subr.bf16.mxu0 0
          %2646 = vmatpush1.bf16.msra.mxu0 %v2582
          %2647 = vmatprep.mubr.bf16.mxu0 %v1885
          %2648 = vmatmul.mubr.bf16.gmra.mrb[0].mxu0 %v1970
          %v2649 = vpop.f32.mrb[0].mxu0
          %v2650 = vadd.f32 %v2409, %v2649
          %v2651 = vpop.f32.mrb[0].mxu0
          %v2652 = vpop.f32.mrb[0].mxu0
          %v2653 = vadd.f32 %v2412, %v2652
          %v2654 = vpop.f32.mrb[0].mxu0
          %2655 = vmatprep.mubr.bf16.mxu0 %v1886
          %2656 = vmatmul.mubr.bf16.gmra.mrb[0].mxu0 %v1971
          %v2657 = vpop.f32.mrb[0].mxu0
          %v2658 = vadd.f32 %v2417, %v2657
          %v2659 = vpop.f32.mrb[0].mxu0
          %v2660 = vpop.f32.mrb[0].mxu0
          %v2661 = vadd.f32 %v2420, %v2660
          %v2662 = vpop.f32.mrb[0].mxu0
          %2663 = vmatprep.mubr.bf16.mxu0 %v1887
          %2664 = vmatmul.mubr.bf16.gmra.mrb[0].mxu0 %v1972
          %v2665 = vpop.f32.mrb[0].mxu0
          %v2666 = vadd.f32 %v2425, %v2665
          %v2667 = vpop.f32.mrb[0].mxu0
          %v2668 = vpop.f32.mrb[0].mxu0
          %v2669 = vadd.f32 %v2428, %v2668
          %v2670 = vpop.f32.mrb[0].mxu0
          %2671 = vmatprep.mubr.bf16.mxu0 %v1888
          %2672 = vmatmul.mubr.bf16.gmra.mrb[0].mxu0 %v1973
          %v2673 = vpop.f32.mrb[0].mxu0
          %v2674 = vadd.f32 %v2433, %v2673
          %v2675 = vpop.f32.mrb[0].mxu0
          %v2676 = vpop.f32.mrb[0].mxu0
          %v2677 = vadd.f32 %v2436, %v2676
          %v2678 = vpop.f32.mrb[0].mxu0
          %2679 = vmatprep.mubr.bf16.mxu0 %v1889
          %2680 = vmatmul.mubr.bf16.gmra.mrb[0].mxu0 %v1974
          %v2681 = vpop.f32.mrb[0].mxu0
          %v2682 = vadd.f32 %v2441, %v2681
          %v2683 = vpop.f32.mrb[0].mxu0
          %v2684 = vpop.f32.mrb[0].mxu0
          %v2685 = vadd.f32 %v2444, %v2684
          %v2686 = vpop.f32.mrb[0].mxu0
          %2687 = vmatprep.mubr.bf16.mxu0 %v1890
          %2688 = vmatmul.mubr.bf16.gmra.mrb[0].mxu0 %v1975
          %v2689 = vpop.f32.mrb[0].mxu0
          %v2690 = vadd.f32 %v2449, %v2689
          %v2691 = vpop.f32.mrb[0].mxu0
          %v2692 = vpop.f32.mrb[0].mxu0
          %v2693 = vadd.f32 %v2452, %v2692
          %v2694 = vpop.f32.mrb[0].mxu0
          %2695 = vmatprep.mubr.bf16.mxu0 %v1891
          %2696 = vmatmul.mubr.bf16.gmra.mrb[0].mxu0 %v1976
          %v2697 = vpop.f32.mrb[0].mxu0
          %v2698 = vadd.f32 %v2457, %v2697
          %v2699 = vpop.f32.mrb[0].mxu0
          %v2700 = vpop.f32.mrb[0].mxu0
          %v2701 = vadd.f32 %v2460, %v2700
          %v2702 = vpop.f32.mrb[0].mxu0
          %2703 = vmatprep.mubr.bf16.mxu0 %v1892
          %2704 = vmatmul.mubr.bf16.gmra.mrb[0].mxu0 %v1977
          %v2705 = vpop.f32.mrb[0].mxu0
          %v2706 = vadd.f32 %v2465, %v2705
          %v2707 = vpop.f32.mrb[0].mxu0
          %v2708 = vpop.f32.mrb[0].mxu0
          %v2709 = vadd.f32 %v2468, %v2708
          %v2710 = vpop.f32.mrb[0].mxu0
          %2711 = vdwg.mxu0
          %2712 = vmatprep.subr.bf16.mxu0 0
          %2713 = vmatpush1.bf16.msra.mxu0 %v2583
          %2714 = vmatprep.subr.bf16.mxu0 0
          %2715 = vmatpush1.bf16.msra.mxu0 %v2584
          %2716 = vmatprep.subr.bf16.mxu0 0
          %2717 = vmatpush1.bf16.msra.mxu0 %v2585
          %2718 = vmatprep.subr.bf16.mxu0 0
          %2719 = vmatpush1.bf16.msra.mxu0 %v2586
          %2720 = vmatprep.subr.bf16.mxu0 0
          %2721 = vmatpush1.bf16.msra.mxu0 %v2587
          %2722 = vmatprep.subr.bf16.mxu0 0
          %2723 = vmatpush1.bf16.msra.mxu0 %v2588
          %2724 = vmatprep.subr.bf16.mxu0 0
          %2725 = vmatpush1.bf16.msra.mxu0 %v2589
          %2726 = vmatprep.subr.bf16.mxu0 0
          %2727 = vmatpush1.bf16.msra.mxu0 %v2590
          %2728 = vmatprep.subr.bf16.mxu0 0
          %2729 = vmatpush1.bf16.msra.mxu0 0
          %2730 = vmatprep.subr.bf16.mxu0 0
          %2731 = vmatpush1.bf16.msra.mxu0 0
          %2732 = vmatprep.subr.bf16.mxu0 0
          %2733 = vmatpush1.bf16.msra.mxu0 0
          %2734 = vmatprep.subr.bf16.mxu0 0
          %2735 = vmatpush1.bf16.msra.mxu0 0
          %2736 = vmatprep.subr.bf16.mxu0 0
          %2737 = vmatpush1.bf16.msra.mxu0 0
          %2738 = vmatprep.subr.bf16.mxu0 0
          %2739 = vmatpush1.bf16.msra.mxu0 0
          %2740 = vmatprep.subr.bf16.mxu0 0
          %2741 = vmatpush1.bf16.msra.mxu0 0
          %2742 = vmatprep.subr.bf16.mxu0 0
          %2743 = vmatpush1.bf16.msra.mxu0 0
          %2744 = vmatprep.mubr.bf16.mxu0 0
          %2745 = vmatmul.mubr.bf16.gmra.mrb[0].mxu0 %v2013
          %v2746 = vpop.f32.mrb[0].mxu0
          %v2747 = vadd.f32 %v2650, %v2746
          %v2748 = vpop.f32.mrb[0].mxu0
          %v2749 = vpop.f32.mrb[0].mxu0
          %v2750 = vadd.f32 %v2653, %v2749
          %v2751 = vpop.f32.mrb[0].mxu0
          %2752 = vmatprep.mubr.bf16.mxu0 0
          %2753 = vmatmul.mubr.bf16.gmra.mrb[0].mxu0 %v2014
          %v2754 = vpop.f32.mrb[0].mxu0
          %v2755 = vadd.f32 %v2658, %v2754
          %v2756 = vpop.f32.mrb[0].mxu0
          %v2757 = vpop.f32.mrb[0].mxu0
          %v2758 = vadd.f32 %v2661, %v2757
          %v2759 = vpop.f32.mrb[0].mxu0
          %2760 = vmatprep.mubr.bf16.mxu0 0
          %2761 = vmatmul.mubr.bf16.gmra.mrb[0].mxu0 %v2015
          %v2762 = vpop.f32.mrb[0].mxu0
          %v2763 = vadd.f32 %v2666, %v2762
          %v2764 = vpop.f32.mrb[0].mxu0
          %v2765 = vpop.f32.mrb[0].mxu0
          %v2766 = vadd.f32 %v2669, %v2765
          %v2767 = vpop.f32.mrb[0].mxu0
          %2768 = vmatprep.mubr.bf16.mxu0 0
          %2769 = vmatmul.mubr.bf16.gmra.mrb[0].mxu0 %v2016
          %v2770 = vpop.f32.mrb[0].mxu0
          %v2771 = vadd.f32 %v2674, %v2770
          %v2772 = vpop.f32.mrb[0].mxu0
          %v2773 = vpop.f32.mrb[0].mxu0
          %v2774 = vadd.f32 %v2677, %v2773
          %v2775 = vpop.f32.mrb[0].mxu0
          %2776 = vmatprep.mubr.bf16.mxu0 0
          %2777 = vmatmul.mubr.bf16.gmra.mrb[0].mxu0 %v2017
          %v2778 = vpop.f32.mrb[0].mxu0
          %v2779 = vadd.f32 %v2682, %v2778
          %v2780 = vpop.f32.mrb[0].mxu0
          %v2781 = vpop.f32.mrb[0].mxu0
          %v2782 = vadd.f32 %v2685, %v2781
          %v2783 = vpop.f32.mrb[0].mxu0
          %2784 = vmatprep.mubr.bf16.mxu0 0
          %2785 = vmatmul.mubr.bf16.gmra.mrb[0].mxu0 %v2018
          %v2786 = vpop.f32.mrb[0].mxu0
          %v2787 = vadd.f32 %v2690, %v2786
          %v2788 = vpop.f32.mrb[0].mxu0
          %v2789 = vpop.f32.mrb[0].mxu0
          %v2790 = vadd.f32 %v2693, %v2789
          %v2791 = vpop.f32.mrb[0].mxu0
          %2792 = vmatprep.mubr.bf16.mxu0 0
          %2793 = vmatmul.mubr.bf16.gmra.mrb[0].mxu0 %v2019
          %v2794 = vpop.f32.mrb[0].mxu0
          %v2795 = vadd.f32 %v2698, %v2794
          %v2796 = vpop.f32.mrb[0].mxu0
          %v2797 = vpop.f32.mrb[0].mxu0
          %v2798 = vadd.f32 %v2701, %v2797
          %v2799 = vpop.f32.mrb[0].mxu0
          %2800 = vmatprep.mubr.bf16.mxu0 0
          %2801 = vmatmul.mubr.bf16.gmra.mrb[0].mxu0 %v2020
          %v2802 = vpop.f32.mrb[0].mxu0
          %v2803 = vadd.f32 %v2706, %v2802
          %v2804 = vpop.f32.mrb[0].mxu0
          %v2805 = vpop.f32.mrb[0].mxu0
          %v2806 = vadd.f32 %v2709, %v2805
          %v2807 = vpop.f32.mrb[0].mxu0
          %2808 = vdwg.mxu0
          %v2810 = vshrl.u32 %v1894, 16
          %v2813 = vrot.slane %v2810, 7
          %v2814 = vshll.u32 %v1894, 16
          %v2816 = vor.u32 %v2813, %v2814
          %v2818 = vsel %vm1969, %v2810, %v2816
          %v2819 = vrot.slane %v2814, 1
          %v2820 = vor.u32 %v2810, %v2819
          %v2823 = vsel %vm2012, %v2820, %v2814
          %s2824 = scalar_lea.vmem [#allocation12], 384
          %v2825 = vld [vmem:[%s2824] sm:$0xf]
          %v2826 = vld [vmem:[%s2824 + $0x4] sm:$0xf]
          %v2827 = vld [vmem:[%s2824 + $0x8] sm:$0xf]
          %v2828 = vld [vmem:[%s2824 + $0xc] sm:$0xf]
          %v2829 = vld [vmem:[%s2824 + $0x10] sm:$0xf]
          %v2830 = vld [vmem:[%s2824 + $0x14] sm:$0xf]
          %v2831 = vld [vmem:[%s2824 + $0x18] sm:$0xf]
          %v2832 = vld [vmem:[%s2824 + $0x1c] sm:$0xf]
          %v2833 = vld [vmem:[%s2824 + $0x20] sm:$0xf]
          %v2834 = vld [vmem:[%s2824 + $0x24] sm:$0xf]
          %v2835 = vld [vmem:[%s2824 + $0x28] sm:$0xf]
          %v2836 = vld [vmem:[%s2824 + $0x2c] sm:$0xf]
          %v2837 = vld [vmem:[%s2824 + $0x30] sm:$0xf]
          %v2838 = vld [vmem:[%s2824 + $0x34] sm:$0xf]
          %v2839 = vld [vmem:[%s2824 + $0x38] sm:$0xf]
          %v2840 = vld [vmem:[%s2824 + $0x3c] sm:$0xf]
          %v2841 = vld [vmem:[%s2824 + $0x40] sm:$0xf]
          %v2842 = vld [vmem:[%s2824 + $0x44] sm:$0xf]
          %v2843 = vld [vmem:[%s2824 + $0x48] sm:$0xf]
          %v2844 = vld [vmem:[%s2824 + $0x4c] sm:$0xf]
          %v2845 = vld [vmem:[%s2824 + $0x50] sm:$0xf]
          %v2846 = vld [vmem:[%s2824 + $0x54] sm:$0xf]
          %v2847 = vld [vmem:[%s2824 + $0x58] sm:$0xf]
          %v2848 = vld [vmem:[%s2824 + $0x5c] sm:$0xf]
          %v2849 = vld [vmem:[%s2824 + $0x60] sm:$0xf]
          %v2850 = vld [vmem:[%s2824 + $0x64] sm:$0xf]
          %v2851 = vld [vmem:[%s2824 + $0x68] sm:$0xf]
          %v2852 = vld [vmem:[%s2824 + $0x6c] sm:$0xf]
          %v2853 = vld [vmem:[%s2824 + $0x70] sm:$0xf]
          %v2854 = vld [vmem:[%s2824 + $0x74] sm:$0xf]
          %v2855 = vld [vmem:[%s2824 + $0x78] sm:$0xf]
          %v2856 = vld [vmem:[%s2824 + $0x7c] sm:$0xf]
          %v2857 = vld [vmem:[%s2824 + $0x80] sm:$0xf]
          %v2858 = vld [vmem:[%s2824 + $0x84] sm:$0xf]
          %v2859 = vld [vmem:[%s2824 + $0x88] sm:$0xf]
          %v2860 = vld [vmem:[%s2824 + $0x8c] sm:$0xf]
          %v2861 = vld [vmem:[%s2824 + $0x90] sm:$0xf]
          %v2862 = vld [vmem:[%s2824 + $0x94] sm:$0xf]
          %v2863 = vld [vmem:[%s2824 + $0x98] sm:$0xf]
          %v2864 = vld [vmem:[%s2824 + $0x9c] sm:$0xf]
          %v2865 = vld [vmem:[%s2824 + $0xa0] sm:$0xf]
          %v2866 = vld [vmem:[%s2824 + $0xa4] sm:$0xf]
          %v2867 = vld [vmem:[%s2824 + $0xa8] sm:$0xf]
          %v2868 = vld [vmem:[%s2824 + $0xac] sm:$0xf]
          %v2869 = vld [vmem:[%s2824 + $0xb0] sm:$0xf]
          %v2870 = vld [vmem:[%s2824 + $0xb4] sm:$0xf]
          %v2871 = vld [vmem:[%s2824 + $0xb8] sm:$0xf]
          %v2872 = vld [vmem:[%s2824 + $0xbc] sm:$0xf]
          %v2921 = vunpack.c.l.b16 %v2825
          %v2922 = vunpack.c.l.b16 %v2826
          %v2923 = vunpack.c.l.b16 %v2827
          %v2924 = vunpack.c.l.b16 %v2828
          %v2925 = vunpack.c.l.b16 %v2829
          %v2926 = vunpack.c.l.b16 %v2830
          %v2927 = vunpack.c.l.b16 %v2831
          %v2928 = vunpack.c.l.b16 %v2832
          %v2929 = vunpack.c.l.b16 %v2833
          %v2930 = vunpack.c.l.b16 %v2834
          %v2931 = vunpack.c.l.b16 %v2835
          %v2932 = vunpack.c.l.b16 %v2836
          %v2933 = vunpack.c.l.b16 %v2837
          %v2934 = vunpack.c.l.b16 %v2838
          %v2935 = vunpack.c.l.b16 %v2839
          %v2936 = vunpack.c.l.b16 %v2840
          %v2937 = vunpack.c.l.b16 %v2841
          %v2938 = vunpack.c.l.b16 %v2842
          %v2939 = vunpack.c.l.b16 %v2843
          %v2940 = vunpack.c.l.b16 %v2844
          %v2941 = vunpack.c.l.b16 %v2845
          %v2942 = vunpack.c.l.b16 %v2846
          %v2943 = vunpack.c.l.b16 %v2847
          %v2944 = vunpack.c.l.b16 %v2848
          %v2945 = vunpack.c.l.b16 %v2849
          %v2946 = vunpack.c.l.b16 %v2850
          %v2947 = vunpack.c.l.b16 %v2851
          %v2948 = vunpack.c.l.b16 %v2852
          %v2949 = vunpack.c.l.b16 %v2853
          %v2950 = vunpack.c.l.b16 %v2854
          %v2951 = vunpack.c.l.b16 %v2855
          %v2952 = vunpack.c.l.b16 %v2856
          %v2953 = vunpack.c.l.b16 %v2857
          %v2954 = vunpack.c.l.b16 %v2858
          %v2955 = vunpack.c.l.b16 %v2859
          %v2956 = vunpack.c.l.b16 %v2860
          %v2957 = vunpack.c.l.b16 %v2861
          %v2958 = vunpack.c.l.b16 %v2862
          %v2959 = vunpack.c.l.b16 %v2863
          %v2960 = vunpack.c.l.b16 %v2864
          %v2961 = vunpack.c.l.b16 %v2865
          %v2962 = vunpack.c.l.b16 %v2866
          %v2963 = vunpack.c.l.b16 %v2867
          %v2964 = vunpack.c.l.b16 %v2868
          %v2965 = vunpack.c.l.b16 %v2869
          %v2966 = vunpack.c.l.b16 %v2870
          %v2967 = vunpack.c.l.b16 %v2871
          %v2968 = vunpack.c.l.b16 %v2872
          %v2969 = vpack.c.b16 %v2922, %v2921
          %v2970 = vpack.c.b16 %v2924, %v2923
          %v2971 = vpack.c.b16 %v2926, %v2925
          %v2972 = vpack.c.b16 %v2928, %v2927
          %v2973 = vpack.c.b16 %v2930, %v2929
          %v2974 = vpack.c.b16 %v2932, %v2931
          %v2975 = vpack.c.b16 %v2934, %v2933
          %v2976 = vpack.c.b16 %v2936, %v2935
          %v2977 = vpack.c.b16 %v2938, %v2937
          %v2978 = vpack.c.b16 %v2940, %v2939
          %v2979 = vpack.c.b16 %v2942, %v2941
          %v2980 = vpack.c.b16 %v2944, %v2943
          %v2981 = vpack.c.b16 %v2946, %v2945
          %v2982 = vpack.c.b16 %v2948, %v2947
          %v2983 = vpack.c.b16 %v2950, %v2949
          %v2984 = vpack.c.b16 %v2952, %v2951
          %v2985 = vpack.c.b16 %v2954, %v2953
          %v2986 = vpack.c.b16 %v2956, %v2955
          %v2987 = vpack.c.b16 %v2958, %v2957
          %v2988 = vpack.c.b16 %v2960, %v2959
          %v2989 = vpack.c.b16 %v2962, %v2961
          %v2990 = vpack.c.b16 %v2964, %v2963
          %v2991 = vpack.c.b16 %v2966, %v2965
          %v2992 = vpack.c.b16 %v2968, %v2967
          %3017 = vmatprep.subr.bf16.mxu0 0
          %3018 = vmatpush1.bf16.msra.mxu0 %v2969
          %3019 = vmatprep.subr.bf16.mxu0 0
          %3020 = vmatpush1.bf16.msra.mxu0 %v2970
          %3021 = vmatprep.subr.bf16.mxu0 0
          %3022 = vmatpush1.bf16.msra.mxu0 %v2971
          %3023 = vmatprep.subr.bf16.mxu0 0
          %3024 = vmatpush1.bf16.msra.mxu0 %v2972
          %3025 = vmatprep.subr.bf16.mxu0 0
          %3026 = vmatpush1.bf16.msra.mxu0 %v2973
          %3027 = vmatprep.subr.bf16.mxu0 0
          %3028 = vmatpush1.bf16.msra.mxu0 %v2974
          %3029 = vmatprep.subr.bf16.mxu0 0
          %3030 = vmatpush1.bf16.msra.mxu0 %v2975
          %3031 = vmatprep.subr.bf16.mxu0 0
          %3032 = vmatpush1.bf16.msra.mxu0 %v2976
          %3033 = vmatprep.subr.bf16.mxu0 0
          %3034 = vmatpush1.bf16.msra.mxu0 %v2977
          %3035 = vmatprep.subr.bf16.mxu0 0
          %3036 = vmatpush1.bf16.msra.mxu0 %v2978
          %3037 = vmatprep.subr.bf16.mxu0 0
          %3038 = vmatpush1.bf16.msra.mxu0 %v2979
          %3039 = vmatprep.subr.bf16.mxu0 0
          %3040 = vmatpush1.bf16.msra.mxu0 %v2980
          %3041 = vmatprep.subr.bf16.mxu0 0
          %3042 = vmatpush1.bf16.msra.mxu0 %v2981
          %3043 = vmatprep.subr.bf16.mxu0 0
          %3044 = vmatpush1.bf16.msra.mxu0 %v2982
          %3045 = vmatprep.subr.bf16.mxu0 0
          %3046 = vmatpush1.bf16.msra.mxu0 %v2983
          %3047 = vmatprep.subr.bf16.mxu0 0
          %3048 = vmatpush1.bf16.msra.mxu0 %v2984
          %3049 = vmatprep.mubr.bf16.mxu0 %v1887
          %3050 = vmatmul.mubr.bf16.gmra.mrb[0].mxu0 %v1972
          %v3051 = vpop.f32.mrb[0].mxu0
          %v3052 = vadd.f32 0.0, %v3051
          %v3053 = vpop.f32.mrb[0].mxu0
          %v3054 = vpop.f32.mrb[0].mxu0
          %v3055 = vadd.f32 0.0, %v3054
          %v3056 = vpop.f32.mrb[0].mxu0
          %3057 = vmatprep.mubr.bf16.mxu0 %v1888
          %3058 = vmatmul.mubr.bf16.gmra.mrb[0].mxu0 %v1973
          %v3059 = vpop.f32.mrb[0].mxu0
          %v3060 = vadd.f32 0.0, %v3059
          %v3061 = vpop.f32.mrb[0].mxu0
          %v3062 = vpop.f32.mrb[0].mxu0
          %v3063 = vadd.f32 0.0, %v3062
          %v3064 = vpop.f32.mrb[0].mxu0
          %3065 = vmatprep.mubr.bf16.mxu0 %v1889
          %3066 = vmatmul.mubr.bf16.gmra.mrb[0].mxu0 %v1974
          %v3067 = vpop.f32.mrb[0].mxu0
          %v3068 = vadd.f32 0.0, %v3067
          %v3069 = vpop.f32.mrb[0].mxu0
          %v3070 = vpop.f32.mrb[0].mxu0
          %v3071 = vadd.f32 0.0, %v3070
          %v3072 = vpop.f32.mrb[0].mxu0
          %3073 = vmatprep.mubr.bf16.mxu0 %v1890
          %3074 = vmatmul.mubr.bf16.gmra.mrb[0].mxu0 %v1975
          %v3075 = vpop.f32.mrb[0].mxu0
          %v3076 = vadd.f32 0.0, %v3075
          %v3077 = vpop.f32.mrb[0].mxu0
          %v3078 = vpop.f32.mrb[0].mxu0
          %v3079 = vadd.f32 0.0, %v3078
          %v3080 = vpop.f32.mrb[0].mxu0
          %3081 = vmatprep.mubr.bf16.mxu0 %v1891
          %3082 = vmatmul.mubr.bf16.gmra.mrb[0].mxu0 %v1976
          %v3083 = vpop.f32.mrb[0].mxu0
          %v3084 = vadd.f32 0.0, %v3083
          %v3085 = vpop.f32.mrb[0].mxu0
          %v3086 = vpop.f32.mrb[0].mxu0
          %v3087 = vadd.f32 0.0, %v3086
          %v3088 = vpop.f32.mrb[0].mxu0
          %3089 = vmatprep.mubr.bf16.mxu0 %v1892
          %3090 = vmatmul.mubr.bf16.gmra.mrb[0].mxu0 %v1977
          %v3091 = vpop.f32.mrb[0].mxu0
          %v3092 = vadd.f32 0.0, %v3091
          %v3093 = vpop.f32.mrb[0].mxu0
          %v3094 = vpop.f32.mrb[0].mxu0
          %v3095 = vadd.f32 0.0, %v3094
          %v3096 = vpop.f32.mrb[0].mxu0
          %3097 = vmatprep.mubr.bf16.mxu0 %v1893
          %3098 = vmatmul.mubr.bf16.gmra.mrb[0].mxu0 %v2078
          %v3099 = vpop.f32.mrb[0].mxu0
          %v3100 = vadd.f32 0.0, %v3099
          %v3101 = vpop.f32.mrb[0].mxu0
          %v3102 = vpop.f32.mrb[0].mxu0
          %v3103 = vadd.f32 0.0, %v3102
          %v3104 = vpop.f32.mrb[0].mxu0
          %3105 = vmatprep.mubr.bf16.mxu0 %v1894
          %3106 = vmatmul.mubr.bf16.gmra.mrb[0].mxu0 %v2818
          %v3107 = vpop.f32.mrb[0].mxu0
          %v3108 = vadd.f32 0.0, %v3107
          %v3109 = vpop.f32.mrb[0].mxu0
          %v3110 = vpop.f32.mrb[0].mxu0
          %v3111 = vadd.f32 0.0, %v3110
          %v3112 = vpop.f32.mrb[0].mxu0
          %3113 = vdwg.mxu0
          %3114 = vmatprep.subr.bf16.mxu0 0
          %3115 = vmatpush1.bf16.msra.mxu0 %v2985
          %3116 = vmatprep.subr.bf16.mxu0 0
          %3117 = vmatpush1.bf16.msra.mxu0 %v2986
          %3118 = vmatprep.subr.bf16.mxu0 0
          %3119 = vmatpush1.bf16.msra.mxu0 %v2987
          %3120 = vmatprep.subr.bf16.mxu0 0
          %3121 = vmatpush1.bf16.msra.mxu0 %v2988
          %3122 = vmatprep.subr.bf16.mxu0 0
          %3123 = vmatpush1.bf16.msra.mxu0 %v2989
          %3124 = vmatprep.subr.bf16.mxu0 0
          %3125 = vmatpush1.bf16.msra.mxu0 %v2990
          %3126 = vmatprep.subr.bf16.mxu0 0
          %3127 = vmatpush1.bf16.msra.mxu0 %v2991
          %3128 = vmatprep.subr.bf16.mxu0 0
          %3129 = vmatpush1.bf16.msra.mxu0 %v2992
          %3130 = vmatprep.subr.bf16.mxu0 0
          %3131 = vmatpush1.bf16.msra.mxu0 0
          %3132 = vmatprep.subr.bf16.mxu0 0
          %3133 = vmatpush1.bf16.msra.mxu0 0
          %3134 = vmatprep.subr.bf16.mxu0 0
          %3135 = vmatpush1.bf16.msra.mxu0 0
          %3136 = vmatprep.subr.bf16.mxu0 0
          %3137 = vmatpush1.bf16.msra.mxu0 0
          %3138 = vmatprep.subr.bf16.mxu0 0
          %3139 = vmatpush1.bf16.msra.mxu0 0
          %3140 = vmatprep.subr.bf16.mxu0 0
          %3141 = vmatpush1.bf16.msra.mxu0 0
          %3142 = vmatprep.subr.bf16.mxu0 0
          %3143 = vmatpush1.bf16.msra.mxu0 0
          %3144 = vmatprep.subr.bf16.mxu0 0
          %3145 = vmatpush1.bf16.msra.mxu0 0
          %3146 = vmatprep.mubr.bf16.mxu0 0
          %3147 = vmatmul.mubr.bf16.gmra.mrb[0].mxu0 %v2015
          %v3148 = vpop.f32.mrb[0].mxu0
          %v3149 = vadd.f32 %v3052, %v3148
          %v3150 = vpop.f32.mrb[0].mxu0
          %v3151 = vpop.f32.mrb[0].mxu0
          %v3152 = vadd.f32 %v3055, %v3151
          %v3153 = vpop.f32.mrb[0].mxu0
          %3154 = vmatprep.mubr.bf16.mxu0 0
          %3155 = vmatmul.mubr.bf16.gmra.mrb[0].mxu0 %v2016
          %v3156 = vpop.f32.mrb[0].mxu0
          %v3157 = vadd.f32 %v3060, %v3156
          %v3158 = vpop.f32.mrb[0].mxu0
          %v3159 = vpop.f32.mrb[0].mxu0
          %v3160 = vadd.f32 %v3063, %v3159
          %v3161 = vpop.f32.mrb[0].mxu0
          %3162 = vmatprep.mubr.bf16.mxu0 0
          %3163 = vmatmul.mubr.bf16.gmra.mrb[0].mxu0 %v2017
          %v3164 = vpop.f32.mrb[0].mxu0
          %v3165 = vadd.f32 %v3068, %v3164
          %v3166 = vpop.f32.mrb[0].mxu0
          %v3167 = vpop.f32.mrb[0].mxu0
          %v3168 = vadd.f32 %v3071, %v3167
          %v3169 = vpop.f32.mrb[0].mxu0
          %3170 = vmatprep.mubr.bf16.mxu0 0
          %3171 = vmatmul.mubr.bf16.gmra.mrb[0].mxu0 %v2018
          %v3172 = vpop.f32.mrb[0].mxu0
          %v3173 = vadd.f32 %v3076, %v3172
          %v3174 = vpop.f32.mrb[0].mxu0
          %v3175 = vpop.f32.mrb[0].mxu0
          %v3176 = vadd.f32 %v3079, %v3175
          %v3177 = vpop.f32.mrb[0].mxu0
          %3178 = vmatprep.mubr.bf16.mxu0 0
          %3179 = vmatmul.mubr.bf16.gmra.mrb[0].mxu0 %v2019
          %v3180 = vpop.f32.mrb[0].mxu0
          %v3181 = vadd.f32 %v3084, %v3180
          %v3182 = vpop.f32.mrb[0].mxu0
          %v3183 = vpop.f32.mrb[0].mxu0
          %v3184 = vadd.f32 %v3087, %v3183
          %v3185 = vpop.f32.mrb[0].mxu0
          %3186 = vmatprep.mubr.bf16.mxu0 0
          %3187 = vmatmul.mubr.bf16.gmra.mrb[0].mxu0 %v2020
          %v3188 = vpop.f32.mrb[0].mxu0
          %v3189 = vadd.f32 %v3092, %v3188
          %v3190 = vpop.f32.mrb[0].mxu0
          %v3191 = vpop.f32.mrb[0].mxu0
          %v3192 = vadd.f32 %v3095, %v3191
          %v3193 = vpop.f32.mrb[0].mxu0
          %3194 = vmatprep.mubr.bf16.mxu0 0
          %3195 = vmatmul.mubr.bf16.gmra.mrb[0].mxu0 %v2083
          %v3196 = vpop.f32.mrb[0].mxu0
          %v3197 = vadd.f32 %v3100, %v3196
          %v3198 = vpop.f32.mrb[0].mxu0
          %v3199 = vpop.f32.mrb[0].mxu0
          %v3200 = vadd.f32 %v3103, %v3199
          %v3201 = vpop.f32.mrb[0].mxu0
          %3202 = vmatprep.mubr.bf16.mxu0 0
          %3203 = vmatmul.mubr.bf16.gmra.mrb[0].mxu0 %v2823
          %v3204 = vpop.f32.mrb[0].mxu0
          %v3205 = vadd.f32 %v3108, %v3204
          %v3206 = vpop.f32.mrb[0].mxu0
          %v3207 = vpop.f32.mrb[0].mxu0
          %v3208 = vadd.f32 %v3111, %v3207
          %v3209 = vpop.f32.mrb[0].mxu0
          %3210 = vdwg.mxu0
          %v3211 = vadd.f32 %v2747, %v3149
          %v3212 = vadd.f32 %v2750, %v3152
          %v3213 = vadd.f32 %v2755, %v3157
          %v3214 = vadd.f32 %v2758, %v3160
          %v3215 = vadd.f32 %v2763, %v3165
          %v3216 = vadd.f32 %v2766, %v3168
          %v3217 = vadd.f32 %v2771, %v3173
          %v3218 = vadd.f32 %v2774, %v3176
          %v3219 = vadd.f32 %v2779, %v3181
          %v3220 = vadd.f32 %v2782, %v3184
          %v3221 = vadd.f32 %v2787, %v3189
          %v3222 = vadd.f32 %v2790, %v3192
          %v3223 = vadd.f32 %v2795, %v3197
          %v3224 = vadd.f32 %v2798, %v3200
          %v3225 = vadd.f32 %v2803, %v3205
          %v3226 = vadd.f32 %v2806, %v3208
          %v3227 = vld [vmem:[#allocation6] sm:$0x1]
          %v3228 = vadd.f32 %v3211, %v3212
          %v3229 = vadd.f32 %v3228, %v3213
          %v3230 = vadd.f32 %v3229, %v3214
          %v3231 = vadd.f32 %v3230, %v3215
          %v3232 = vadd.f32 %v3231, %v3216
          %v3233 = vadd.f32 %v3232, %v3217
          %v3234 = vadd.f32 %v3233, %v3218
          %v3235 = vadd.f32 %v3234, %v3219
          %v3236 = vadd.f32 %v3235, %v3220
          %v3237 = vadd.f32 %v3236, %v3221
          %v3238 = vadd.f32 %v3237, %v3222
          %v3239 = vadd.f32 %v3238, %v3223
          %v3240 = vadd.f32 %v3239, %v3224
          %v3241 = vadd.f32 %v3240, %v3225
          %v3242 = vadd.f32 %v3241, %v3226
          %v3243 = vrot.slane %v3242, 4
          %v3244 = vadd.f32 %v3242, %v3243
          %v3245 = vrot.slane %v3244, 2
          %v3246 = vadd.f32 %v3244, %v3245
          %v3247 = vrot.slane %v3246, 1
          %v3248 = vadd.f32 %v3246, %v3247
          %v3249 = vadd.f32 %v3227, %v3248
          %3250 = vst [vmem:[#allocation6] sm:$0x1] %v3249
          %v3251 = vld [vmem:[#allocation6 + $0x1] sm:$0x1]
          %v3252 = vmul.f32 %v3211, %v3211
          %v3253 = vmul.f32 %v3212, %v3212
          %v3254 = vmul.f32 %v3213, %v3213
          %v3255 = vmul.f32 %v3214, %v3214
          %v3256 = vmul.f32 %v3215, %v3215
          %v3257 = vmul.f32 %v3216, %v3216
          %v3258 = vmul.f32 %v3217, %v3217
          %v3259 = vmul.f32 %v3218, %v3218
          %v3260 = vmul.f32 %v3219, %v3219
          %v3261 = vmul.f32 %v3220, %v3220
          %v3262 = vmul.f32 %v3221, %v3221
          %v3263 = vmul.f32 %v3222, %v3222
          %v3264 = vmul.f32 %v3223, %v3223
          %v3265 = vmul.f32 %v3224, %v3224
          %v3266 = vmul.f32 %v3225, %v3225
          %v3267 = vmul.f32 %v3226, %v3226
          %v3268 = vadd.f32 %v3252, %v3253
          %v3269 = vadd.f32 %v3268, %v3254
          %v3270 = vadd.f32 %v3269, %v3255
          %v3271 = vadd.f32 %v3270, %v3256
          %v3272 = vadd.f32 %v3271, %v3257
          %v3273 = vadd.f32 %v3272, %v3258
          %v3274 = vadd.f32 %v3273, %v3259
          %v3275 = vadd.f32 %v3274, %v3260
          %v3276 = vadd.f32 %v3275, %v3261
          %v3277 = vadd.f32 %v3276, %v3262
          %v3278 = vadd.f32 %v3277, %v3263
          %v3279 = vadd.f32 %v3278, %v3264
          %v3280 = vadd.f32 %v3279, %v3265
          %v3281 = vadd.f32 %v3280, %v3266
          %v3282 = vadd.f32 %v3281, %v3267
          %v3283 = vrot.slane %v3282, 4
          %v3284 = vadd.f32 %v3282, %v3283
          %v3285 = vrot.slane %v3284, 2
          %v3286 = vadd.f32 %v3284, %v3285
          %v3287 = vrot.slane %v3286, 1
          %v3288 = vadd.f32 %v3286, %v3287
          %v3289 = vadd.f32 %v3251, %v3288
          %3290 = vst [vmem:[#allocation6 + $0x1] sm:$0x1] %v3289
          %v3291 = vpack.c.bf16 %v3212, %v3211
          %v3292 = vpack.c.bf16 %v3214, %v3213
          %v3293 = vpack.c.bf16 %v3216, %v3215
          %v3294 = vpack.c.bf16 %v3218, %v3217
          %v3295 = vpack.c.bf16 %v3220, %v3219
          %v3296 = vpack.c.bf16 %v3222, %v3221
          %v3297 = vpack.c.bf16 %v3224, %v3223
          %v3298 = vpack.c.bf16 %v3226, %v3225
          %s3299 = smul.addr %s269, 8
          %s3300 = scalar_lea.vmem [#allocation4], %s3299
          %3301 = vst [vmem:[%s3300] sm:$0xff] %v3291
          %3302 = vst [vmem:[%s3300 + $0x8] sm:$0xff] %v3292
          %3303 = vst [vmem:[%s3300 + $0x10] sm:$0xff] %v3293
          %3304 = vst [vmem:[%s3300 + $0x18] sm:$0xff] %v3294
          %3305 = vst [vmem:[%s3300 + $0x20] sm:$0xff] %v3295
          %3306 = vst [vmem:[%s3300 + $0x28] sm:$0xff] %v3296
          %3307 = vst [vmem:[%s3300 + $0x30] sm:$0xff] %v3297
          %3308 = vst [vmem:[%s3300 + $0x38] sm:$0xff] %v3298
        $region72: #{tpu_custom_call.1} parent=31 // pred_fallthru
          _
        %p3309 = scmp.eq.s32.totalorder %s27, 3
        // Predicated region
        $region77: #{tpu_custom_call.1} parent=31 // pred_check
          %p3310 = pneg %p3309
        $region78: #{tpu_custom_call.1} parent=31 // pred_check_branch
          %3312 = sbr.rel (%p3310) target = $region80
        $region79: #{tpu_custom_call.1} parent=31 // pred_region
          %p3313 = scmp.eq.s32.totalorder %s28, 0
          // Predicated region
          $region81: #{tpu_custom_call.1} parent=79 // pred_check
            %p3314 = pneg %p3313
          $region82: #{tpu_custom_call.1} parent=79 // pred_check_branch
            %3316 = sbr.rel (%p3314) target = $region84
          $region83: #{tpu_custom_call.1} parent=79 // pred_region
            %v3317 = vld [vmem:[#allocation6] sm:$0x1]
            %v3318 = vmul.f32 %v3317, 0.00390625
            %v3319 = vld [vmem:[#allocation6 + $0x1] sm:$0x1]
            %v3320 = vmul.f32 %v3319, 0.00390625
            %v3321 = vmul.f32 %v3318, %v3318
            %v3322 = vsub.f32 %v3320, %v3321
            %v3323 = vmax.f32 %v3322, 0.0
            %3324 = vst [vmem:[#allocation6] sm:$0x1] %v3318
            %v3325 = vadd.f32 %v3323, 1e-05
            %v3326 = vrsqrt.pop %v3325
            %3327 = vst [vmem:[#allocation6 + $0x1] sm:$0x1] %v3326
          $region84: #{tpu_custom_call.1} parent=79 // pred_fallthru
            _
          %v3328 = vld [vmem:[#allocation6] sm:$0x1]
          %v3329 = vld [vmem:[#allocation6 + $0x1] sm:$0x1]
          %s3330 = smul.addr %s269, 8
          %s3331 = scalar_lea.vmem [#allocation4], %s3330
          %v3332 = vld [vmem:[%s3331] sm:$0xff]
          %v3333 = vld [vmem:[%s3331 + $0x8] sm:$0xff]
          %v3334 = vld [vmem:[%s3331 + $0x10] sm:$0xff]
          %v3335 = vld [vmem:[%s3331 + $0x18] sm:$0xff]
          %v3336 = vld [vmem:[%s3331 + $0x20] sm:$0xff]
          %v3337 = vld [vmem:[%s3331 + $0x28] sm:$0xff]
          %v3338 = vld [vmem:[%s3331 + $0x30] sm:$0xff]
          %v3339 = vld [vmem:[%s3331 + $0x38] sm:$0xff]
          %v3340 = vunpack.c.l.bf16 %v3332
          %v3341 = vunpack.c.h.bf16 %v3332
          %v3342 = vunpack.c.l.bf16 %v3333
          %v3343 = vunpack.c.h.bf16 %v3333
          %v3344 = vunpack.c.l.bf16 %v3334
          %v3345 = vunpack.c.h.bf16 %v3334
          %v3346 = vunpack.c.l.bf16 %v3335
          %v3347 = vunpack.c.h.bf16 %v3335
          %v3348 = vunpack.c.l.bf16 %v3336
          %v3349 = vunpack.c.h.bf16 %v3336
          %v3350 = vunpack.c.l.bf16 %v3337
          %v3351 = vunpack.c.h.bf16 %v3337
          %v3352 = vunpack.c.l.bf16 %v3338
          %v3353 = vunpack.c.h.bf16 %v3338
          %v3354 = vunpack.c.l.bf16 %v3339
          %v3355 = vunpack.c.h.bf16 %v3339
          %v3356 = vlaneseq
          %v3357 = vshrl.u32 %v3356, 7
          %v3358 = vsub.s32 0, %v3357
          %v3359 = vrot.slane %v3328, %v3358
          %v3360 = vsub.f32 %v3340, %v3359
          %v3361 = vsub.f32 %v3341, %v3359
          %v3362 = vsub.f32 %v3342, %v3359
          %v3363 = vsub.f32 %v3343, %v3359
          %v3364 = vsub.f32 %v3344, %v3359
          %v3365 = vsub.f32 %v3345, %v3359
          %v3366 = vsub.f32 %v3346, %v3359
          %v3367 = vsub.f32 %v3347, %v3359
          %v3368 = vsub.f32 %v3348, %v3359
          %v3369 = vsub.f32 %v3349, %v3359
          %v3370 = vsub.f32 %v3350, %v3359
          %v3371 = vsub.f32 %v3351, %v3359
          %v3372 = vsub.f32 %v3352, %v3359
          %v3373 = vsub.f32 %v3353, %v3359
          %v3374 = vsub.f32 %v3354, %v3359
          %v3375 = vsub.f32 %v3355, %v3359
          %v3376 = vlaneseq
          %v3377 = vshrl.u32 %v3376, 7
          %v3378 = vsub.s32 0, %v3377
          %v3379 = vrot.slane %v3329, %v3378
          %v3380 = vmul.f32 %v3360, %v3379
          %v3381 = vmul.f32 %v3361, %v3379
          %v3382 = vmul.f32 %v3362, %v3379
          %v3383 = vmul.f32 %v3363, %v3379
          %v3384 = vmul.f32 %v3364, %v3379
          %v3385 = vmul.f32 %v3365, %v3379
          %v3386 = vmul.f32 %v3366, %v3379
          %v3387 = vmul.f32 %v3367, %v3379
          %v3388 = vmul.f32 %v3368, %v3379
          %v3389 = vmul.f32 %v3369, %v3379
          %v3390 = vmul.f32 %v3370, %v3379
          %v3391 = vmul.f32 %v3371, %v3379
          %v3392 = vmul.f32 %v3372, %v3379
          %v3393 = vmul.f32 %v3373, %v3379
          %v3394 = vmul.f32 %v3374, %v3379
          %v3395 = vmul.f32 %v3375, %v3379
          %v3396 = vld [vmem:[%s229] sm:$0xff]
          %v3397 = vld [vmem:[%s229 + $0x8] sm:$0xff]
          %v3398 = vld [vmem:[%s229 + $0x10] sm:$0xff]
          %v3399 = vld [vmem:[%s229 + $0x18] sm:$0xff]
          %v3400 = vld [vmem:[%s229 + $0x20] sm:$0xff]
          %v3401 = vld [vmem:[%s229 + $0x28] sm:$0xff]
          %v3402 = vld [vmem:[%s229 + $0x30] sm:$0xff]
          %v3403 = vld [vmem:[%s229 + $0x38] sm:$0xff]
          %v3404 = vld [vmem:[%s229 + $0x40] sm:$0xff]
          %v3405 = vld [vmem:[%s229 + $0x48] sm:$0xff]
          %v3406 = vld [vmem:[%s229 + $0x50] sm:$0xff]
          %v3407 = vld [vmem:[%s229 + $0x58] sm:$0xff]
          %v3408 = vld [vmem:[%s229 + $0x60] sm:$0xff]
          %v3409 = vld [vmem:[%s229 + $0x68] sm:$0xff]
          %v3410 = vld [vmem:[%s229 + $0x70] sm:$0xff]
          %v3411 = vld [vmem:[%s229 + $0x78] sm:$0xff]
          %v3412 = vadd.f32 %v3396, %v3380
          %v3413 = vadd.f32 %v3397, %v3381
          %v3414 = vadd.f32 %v3398, %v3382
          %v3415 = vadd.f32 %v3399, %v3383
          %v3416 = vadd.f32 %v3400, %v3384
          %v3417 = vadd.f32 %v3401, %v3385
          %v3418 = vadd.f32 %v3402, %v3386
          %v3419 = vadd.f32 %v3403, %v3387
          %v3420 = vadd.f32 %v3404, %v3388
          %v3421 = vadd.f32 %v3405, %v3389
          %v3422 = vadd.f32 %v3406, %v3390
          %v3423 = vadd.f32 %v3407, %v3391
          %v3424 = vadd.f32 %v3408, %v3392
          %v3425 = vadd.f32 %v3409, %v3393
          %v3426 = vadd.f32 %v3410, %v3394
          %v3427 = vadd.f32 %v3411, %v3395
          %3428 = vst [vmem:[%s259] sm:$0xff] %v3412
          %3429 = vst [vmem:[%s259 + $0x8] sm:$0xff] %v3413
          %3430 = vst [vmem:[%s259 + $0x10] sm:$0xff] %v3414
          %3431 = vst [vmem:[%s259 + $0x18] sm:$0xff] %v3415
          %3432 = vst [vmem:[%s259 + $0x20] sm:$0xff] %v3416
          %3433 = vst [vmem:[%s259 + $0x28] sm:$0xff] %v3417
          %3434 = vst [vmem:[%s259 + $0x30] sm:$0xff] %v3418
          %3435 = vst [vmem:[%s259 + $0x38] sm:$0xff] %v3419
          %3436 = vst [vmem:[%s259 + $0x40] sm:$0xff] %v3420
          %3437 = vst [vmem:[%s259 + $0x48] sm:$0xff] %v3421
          %3438 = vst [vmem:[%s259 + $0x50] sm:$0xff] %v3422
          %3439 = vst [vmem:[%s259 + $0x58] sm:$0xff] %v3423
          %3440 = vst [vmem:[%s259 + $0x60] sm:$0xff] %v3424
          %3441 = vst [vmem:[%s259 + $0x68] sm:$0xff] %v3425
          %3442 = vst [vmem:[%s259 + $0x70] sm:$0xff] %v3426
          %3443 = vst [vmem:[%s259 + $0x78] sm:$0xff] %v3427
        $region80: #{tpu_custom_call.1} parent=31 // pred_fallthru
          _
        %s3444 = sand.u32 %s132, 1
        %s3445 = scalar_lea.sflag [#allocation9], %s3444
        %s3446 = sand.u32 %s132, 1
        %s3447 = smul.addr %s3446, 128
        %s3448 = scalar_lea.vmem [#allocation13], %s3447
        // Predicated region
        $region85: #{tpu_custom_call.1} parent=31 // pred_check
          %p3449 = pneg %p142
        $region86: #{tpu_custom_call.1} parent=31 // pred_check_branch
          %3451 = sbr.rel (%p3449) target = $region88
        $region87: #{tpu_custom_call.1} parent=31 // pred_region
          %p3452 = scmp.eq.s32.totalorder %s27, 3
          %s3453 = scalar_select %p3452, %s28, 0
          %s3454 = smul.u32 8, %s3453
          %s3456 = ssub.s32 2048, 2048
          %3457 = vsyncadd %s3445, %s3456
          %s3458 = smul.addr %s3454, 2
          %s3459 = smul.addr %s26, 32
          %s3460 = sadd.s32 %s3458, %s3459
          %s3461 = smul.addr %s3460, 128
          %s3462 = scalar_lea.hbm %s3, %s3461
          %s3463 = sshll.u32 %s3448, 4
          %s3464 = int_to_ptr.vmem [resolvable:$true] %s3463
          %3469 = dma.vmem_to_hbm [thread:$0]  %s3464, 2048, %s3462, %s3445, 128, 128, 8
        $region88: #{tpu_custom_call.1} parent=31 // pred_fallthru
          _
      $region32: #{tpu_custom_call.1} parent=5 // pred_fallthru
        _
      %p3470 = scmp.le.s32.totalorder 2, %s16
      // Predicated region
      $region89: #{tpu_custom_call.1} parent=5 // pred_check
        %p3471 = pneg %p3470
      $region90: #{tpu_custom_call.1} parent=5 // pred_check_branch
        %3473 = sbr.rel (%p3471) target = $region92
      $region91: #{tpu_custom_call.1} parent=5 // pred_region
        %s3474 = ssub.s32 %s16, 2
        // Predicated region
        $region93: #{tpu_custom_call.1} parent=91 // pred_check
          %p3475 = pneg %p148
        $region94: #{tpu_custom_call.1} parent=91 // pred_check_branch
          %3477 = sbr.rel (%p3475) target = $region96
        $region95: #{tpu_custom_call.1} parent=91 // pred_region
          %s3478 = sand.u32 %s133, 1
          %s3479 = scalar_lea.sflag [#allocation9], %s3478
          %s3480 = sand.u32 %s133, 1
          %s3481 = smul.addr %s3480, 128
          %s3482 = scalar_lea.vmem [#allocation13], %s3481
          %3483 = dma.done %s3479, 2048
        $region96: #{tpu_custom_call.1} parent=91 // pred_fallthru
          _
      $region92: #{tpu_custom_call.1} parent=5 // pred_fallthru
        _
    $region6: #{tpu_custom_call.1} parent=1 // loop_footer
      %s20 = sadd.s32 1, %s16
    $region7: #{tpu_custom_call.1} parent=1 // loop_footer_branch
      %15 = sbr.rel target = $region3
    $region8: #{tpu_custom_call.1} parent=1 // loop_exit
      _
    %3484 = vsyncpa [#allocation8], 1
    %s3485 = scalar_lea.sflag [#allocation8], 1
    %3486 = vsyncpa %s3485, 1
    %3487 = vsyncpa [#allocation11], 1
    %3488 = vsyncpa [#allocation9], 1
    %s3489 = scalar_lea.sflag [#allocation9], 1
    %3490 = vsyncpa %s3489, 1

</llo_original>
